<compile_context>
chip_gen: v7x
topology: tpu7x:2x2x1
jax: 0.10.0
libtpu: 0.0.40
codegen_flags: <defaults>
</compile_context>

<pallas_src>
import functools

import jax
import jax.numpy as jnp
from jax.experimental import pallas as pl
from jax.experimental.pallas import tpu as pltpu


# ----------------------------- fused Pallas kernel -------------------------- #

def fused_forward_kernel(hn_ref, he_ref, tgt_ref,
                         Wn_ref, bn_ref, wg_ref, bg_ref,
                         d1w_ref, d1b_ref, d2w_ref, d2b_ref, d3w_ref, d3b_ref,
                         loss_ref, ones_ref,
                         *, num_layers, bt, N, H):
    """All GCN layers + classification MLP + CE-loss partials for one batch tile."""
    M = bt * N * N

    # residual streams kept in f32; MXU operands cast to bf16 at each dot site
    hn = hn_ref[...].astype(jnp.float32).reshape(bt * N, H)      # [bt*N, H]
    he = he_ref[...].astype(jnp.float32).reshape(M, H)           # [bt*N*N, H]

    for l in range(num_layers):
        W1, W2, W3, W4, W5 = [Wn_ref[l, i] for i in range(5)]    # bf16 (H, H)
        b1, b2, b3, b4, b5 = [bn_ref[l, i] for i in range(5)]    # f32  (1, H)
        wg = wg_ref[l]                                           # bf16 (H, 1)
        bg = bg_ref[l]                                           # f32  (1, 1)

        hnB = hn.astype(jnp.bfloat16)
        heB = he.astype(jnp.bfloat16)

        t1 = jnp.dot(hnB, W1, preferred_element_type=jnp.float32) + b1
        t2 = jnp.dot(hnB, W2, preferred_element_type=jnp.float32) + b2
        n4 = jnp.dot(hnB, W4, preferred_element_type=jnp.float32) + b4
        n5 = jnp.dot(hnB, W5, preferred_element_type=jnp.float32) + b5
        e1 = jnp.dot(heB, W3, preferred_element_type=jnp.float32) + b3

        # edge-gated neighborhood aggregation; H->1 reduction done on the MXU
        g = jax.nn.sigmoid(
            jnp.dot(heB, wg, preferred_element_type=jnp.float32) + bg)   # [M, 1]
        gate = g.reshape(bt, N, N)
        inv = pl.reciprocal(jnp.sum(gate, axis=2, keepdims=True) + 1e-10,
                            approx=True)
        gate = gate * inv
        agg = jnp.einsum('bij,bjh->bih', gate, t2.reshape(bt, N, H),
                         preferred_element_type=jnp.float32)             # [bt, N, H]

        hn = hn + jax.nn.relu(t1 + agg.reshape(bt * N, H))
        add = (n4.reshape(bt, N, 1, H) + n5.reshape(bt, 1, N, H)).reshape(M, H)
        he = he + jax.nn.relu(e1 + add)

    # ---- classification decoder (3-layer edge MLP), no HBM logits ----
    x = jax.nn.relu(jnp.dot(he.astype(jnp.bfloat16), d1w_ref[...],
                            preferred_element_type=jnp.float32) + d1b_ref[...])
    x = jax.nn.relu(jnp.dot(x.astype(jnp.bfloat16), d2w_ref[...],
                            preferred_element_type=jnp.float32) + d2b_ref[...])
    logits = jnp.dot(x.astype(jnp.bfloat16), d3w_ref[...],
                     preferred_element_type=jnp.float32) + d3b_ref[...]  # [M, 2]

    # ---- fused cross-entropy partial sum + countPredictedOnes partial ----
    t = tgt_ref[...]                                                     # [M, 1] f32
    l0 = logits[:, 0:1]
    l1 = logits[:, 1:2]
    m = jnp.maximum(l0, l1)
    lse = m + jnp.log(jnp.exp(l0 - m) + jnp.exp(l1 - m))
    picked = jnp.where(t > 0.5, l1, l0)
    loss_part = jnp.sum(lse - picked)
    ones_part = jnp.sum((l1 > l0).astype(jnp.float32))

    # lane-dense (8,128) scalar rows -> unmasked full-tile stores
    loss_ref[...] = jnp.zeros((1, 8, 128), jnp.float32) + loss_part
    ones_ref[...] = jnp.zeros((1, 8, 128), jnp.float32) + ones_part


# ------------------------------ Pallas wrapper ------------------------------ #

def _choose_batch_tile(B, N, H, L, budget_bytes=40 << 20):
    """Largest batch tile whose working set fits the VMEM budget; prefer >= 2
    grid steps so v7x's two TensorCores both get work."""
    def est(bt):
        f32, bf16 = 4, 2
        he_blk = bt * N * N * H
        hn_blk = bt * N * H
        tgt_blk = bt * N * N
        w = (L * 5 * H * H * bf16 + L * 5 * H * f32 + L * H * bf16 + L * f32
             + 2 * H * H * bf16 + H * 2 * bf16 + 2 * H * f32 + 2 * f32)
        # double-buffered input blocks + ~8 live f32 copies of the edge block
        return 2 * (he_blk * bf16 + hn_blk * bf16 + tgt_blk * f32) + w \
               + 8 * he_blk * f32 + (2 << 20)

    best = 1
    for bt in range(1, B + 1):
        if B % bt == 0 and est(bt) <= budget_bytes:
            best = bt
    if B // best == 1 and B > 1:
        for bt in range(best - 1, 0, -1):
            if B % bt == 0:
                best = bt
                break
    return best, est(best)


def fused_supervised_forward(h_n, h_e, target, gcn_w, dec_w):
    """h_n: [B,N,H] f32, h_e: [B,N,N,H] f32, target: [B,N,N] f32 (0/1)."""
    B, N, H = h_n.shape
    Wn, bn, wg, bg = gcn_w
    d1w, d1b, d2w, d2b, d3w, d3b = dec_w
    L = Wn.shape[0]

    bt, vmem_est = _choose_batch_tile(B, N, H, L)
    num_tiles = B // bt
    vmem_limit = int(min(max(2 * vmem_est, 32 << 20), 48 << 20))   # v7x-safe

    hn3 = h_n.astype(jnp.bfloat16)                       # halve HBM traffic
    he3 = h_e.reshape(B, N * N, H).astype(jnp.bfloat16)
    tgt2 = target.reshape(B * N * N, 1).astype(jnp.float32)

    kernel = functools.partial(fused_forward_kernel,
                               num_layers=L, bt=bt, N=N, H=H)

    def full(shape):
        n = len(shape)
        return pl.BlockSpec(shape, lambda b: (0,) * n)   # grid-invariant block

    loss_parts, ones_parts = pl.pallas_call(
        kernel,
        out_shape=(jax.ShapeDtypeStruct((num_tiles, 8, 128), jnp.float32),
                   jax.ShapeDtypeStruct((num_tiles, 8, 128), jnp.float32)),
        grid=(num_tiles,),
        in_specs=[
            pl.BlockSpec((bt, N, H), lambda b: (b, 0, 0)),
            pl.BlockSpec((bt, N * N, H), lambda b: (b, 0, 0)),
            pl.BlockSpec((bt * N * N, 1), lambda b: (b, 0)),
            full(Wn.shape), full(bn.shape), full(wg.shape), full(bg.shape),
            full(d1w.shape), full(d1b.shape),
            full(d2w.shape), full(d2b.shape),
            full(d3w.shape), full(d3b.shape),
        ],
        out_specs=(pl.BlockSpec((1, 8, 128), lambda b: (b, 0, 0)),
                   pl.BlockSpec((1, 8, 128), lambda b: (b, 0, 0))),
        compiler_params=pltpu.CompilerParams(
            dimension_semantics=("parallel",),
            vmem_limit_bytes=vmem_limit),
    )(hn3, he3, tgt2, Wn, bn, wg, bg, d1w, d1b, d2w, d2b, d3w, d3b)

    L_c = jnp.sum(loss_parts[:, 0, 0]) / jnp.float32(B * N * N)
    num_ones = jnp.sum(ones_parts[:, 0, 0]).astype(jnp.int32)
    return L_c, num_ones


# ------------------------------- plain-JAX glue ------------------------------ #

def decode_baseline_sol(batch_size, node_num, sol):
    src = sol[:, :-1].reshape(-1)
    dst = sol[:, 1:].reshape(-1)
    Lp = sol.shape[1] - 1
    b_idx = jnp.repeat(jnp.arange(batch_size), Lp)
    tgt = jnp.zeros((batch_size, node_num, node_num), jnp.float32)
    return tgt.at[b_idx, src, dst].set(1.0)


class SupervisedModelPallas:
    def __init__(self, hidden_dim, gcn_num_layers, k, node_info_dim,
                 gru_num_layers, mlp_num_layers, key):
        assert mlp_num_layers == 3, "decoder kernel is written for mlp_num_layers=3"
        del gru_num_layers  # only used by the sequential decoder (not in forward())
        self.H, self.k, self.L = hidden_dim, k, gcn_num_layers
        keys = iter(jax.random.split(key, 16 + 12 * gcn_num_layers))

        def lin(fan_in, fan_out):
            bnd = 1.0 / (fan_in ** 0.5)
            W = jax.random.uniform(next(keys), (fan_in, fan_out), jnp.float32, -bnd, bnd)
            b = jax.random.uniform(next(keys), (1, fan_out), jnp.float32, -bnd, bnd)
            return W, b

        H = hidden_dim
        # GCN input embeddings (small, kept in plain JAX)
        self.Wd, self.bd = lin(2, H)                 # depot (x, y)
        self.Wc, self.bc = lin(node_info_dim, H)     # customers (x, y, demand)
        self.We, self.be = lin(1, H // 2)            # edge distance
        self.emb = jax.random.normal(next(keys), (3, H // 2), jnp.float32)

        # GCN layer weights, stacked so the fused kernel loads them once
        Ws, bs, wgs, bgs = [], [], [], []
        for _ in range(gcn_num_layers):
            lw, lb = [], []
            for _ in range(5):
                W, b = lin(H, H)
                lw.append(W); lb.append(b)
            Ws.append(jnp.stack(lw))                 # (5, H, H)
            bs.append(jnp.stack(lb))                 # (5, 1, H)
            wg, bg = lin(H, 1)
            wgs.append(wg); bgs.append(bg)
        self.gcn_w = (jnp.stack(Ws).astype(jnp.bfloat16),   # (L, 5, H, H) bf16
                      jnp.stack(bs),                        # (L, 5, 1, H) f32
                      jnp.stack(wgs).astype(jnp.bfloat16),  # (L, H, 1)    bf16
                      jnp.stack(bgs))                       # (L, 1, 1)    f32

        # Classification decoder MLP
        d1w, d1b = lin(H, H)
        d2w, d2b = lin(H, H)
        d3w, d3b = lin(H, 2)
        self.dec_w = (d1w.astype(jnp.bfloat16), d1b,
                      d2w.astype(jnp.bfloat16), d2b,
                      d3w.astype(jnp.bfloat16), d3b)

        self._forward = jax.jit(self._forward_impl)

    def _gcn_embed(self, coor, demand, dist):
        B, N, _ = coor.shape
        x_depot = coor[:, 0:1, :] @ self.Wd + self.bd
        cust = jnp.concatenate([coor[:, 1:, :], demand[:, 1:, None]], axis=-1)
        x_cust = cust @ self.Wc + self.bc
        h_n = jnp.concatenate([x_depot, x_cust], axis=1)                  # [B,N,H]
        e_dist = dist[..., None] @ self.We + self.be                      # [B,N,N,H/2]
        rank = jnp.argsort(jnp.argsort(dist, axis=-1), axis=-1)
        eye = jnp.eye(N, dtype=bool)[None]
        a = jnp.where(eye, 2, jnp.where((rank >= 1) & (rank <= self.k), 1, 0))
        h_e = jnp.concatenate([e_dist, self.emb[a]], axis=-1)             # [B,N,N,H]
        return h_n.astype(jnp.float32), h_e.astype(jnp.float32)

    def _forward_impl(self, coor, demand, dist, or_tools_sol):
        B, N, _ = coor.shape
        h_n, h_e = self._gcn_embed(coor, demand, dist)
        target = decode_baseline_sol(B, N, or_tools_sol)
        target = target.at[:, 0, 0].set(0.0)
        return fused_supervised_forward(h_n, h_e, target, self.gcn_w, self.dec_w)

    def forward(self, coor, demand, dist, or_tools_sol):
        return self._forward(coor, demand, dist, or_tools_sol)


# ------------------------------------ main ----------------------------------- #

if __name__ == "__main__":
    key = jax.random.PRNGKey(0)
    B, N, H = 2, 8, 32
    gcn_num_layers, k, node_info_dim, gru_num_layers, mlp_num_layers = 3, 3, 3, 1, 3

    k1, k2, k3, kp = jax.random.split(key, 4)
    coor = jax.random.uniform(k1, (B, N, 2), dtype=jnp.float32)
    demand = jax.random.uniform(k2, (B, N), dtype=jnp.float32, minval=0.0, maxval=0.9)
    demand = demand.at[:, 0].set(0.0)
    dist = jnp.sqrt(jnp.sum((coor[:, :, None, :] - coor[:, None, :, :]) ** 2, axis=-1) + 1e-12)

    # Deterministic stand-in for the OR-Tools solution: depot -> perm(customers) -> depot
    perms = jnp.stack([jax.random.permutation(jax.random.fold_in(k3, b), jnp.arange(1, N))
                       for b in range(B)]).astype(jnp.int32)
    or_tools_sol = jnp.concatenate(
        [jnp.zeros((B, 1), jnp.int32), perms, jnp.zeros((B, 1), jnp.int32)], axis=1)

    model = SupervisedModelPallas(H, gcn_num_layers, k, node_info_dim,
                                  gru_num_layers, mlp_num_layers, kp)
    L_c, num_ones = model.forward(coor, demand, dist, or_tools_sol)
    jax.block_until_ready((L_c, num_ones))
    print("KERNEL_OK")
</pallas_src>

<mosaic_0001>
module attributes {stable_mosaic.version = 11 : i64} {
  func.func @fused_forward_kernel(%arg0: i32, %arg1: memref<1x8x32xbf16, #tpu.memory_space<vmem>>, %arg2: memref<1x64x32xbf16, #tpu.memory_space<vmem>>, %arg3: memref<64x1xf32, #tpu.memory_space<vmem>>, %arg4: memref<3x5x32x32xbf16, #tpu.memory_space<vmem>>, %arg5: memref<3x5x1x32xf32, #tpu.memory_space<vmem>>, %arg6: memref<3x32x1xbf16, #tpu.memory_space<vmem>>, %arg7: memref<3x1x1xf32, #tpu.memory_space<vmem>>, %arg8: memref<32x32xbf16, #tpu.memory_space<vmem>>, %arg9: memref<1x32xf32, #tpu.memory_space<vmem>>, %arg10: memref<32x32xbf16, #tpu.memory_space<vmem>>, %arg11: memref<1x32xf32, #tpu.memory_space<vmem>>, %arg12: memref<32x2xbf16, #tpu.memory_space<vmem>>, %arg13: memref<1x2xf32, #tpu.memory_space<vmem>>, %arg14: memref<1x8x128xf32, #tpu.memory_space<vmem>>, %arg15: memref<1x8x128xf32, #tpu.memory_space<vmem>>) attributes {dimension_semantics = [#tpu.dimension_semantics<parallel>], iteration_bounds = array<i64: 2>, scalar_prefetch = 0 : i64, scratch_operands = 0 : i64, tpu.core_type = #tpu.core_type<tc>, window_params = [{transform_indices = @transform_0, window_bounds = array<i64: 1, 8, 32>}, {transform_indices = @transform_1, window_bounds = array<i64: 1, 64, 32>}, {transform_indices = @transform_2, window_bounds = array<i64: 64, 1>}, {pipeline_mode = #tpu.pipeline_mode<synchronous>, transform_indices = @transform_3, window_bounds = array<i64: 3, 5, 32, 32>}, {pipeline_mode = #tpu.pipeline_mode<synchronous>, transform_indices = @transform_4, window_bounds = array<i64: 3, 5, 1, 32>}, {pipeline_mode = #tpu.pipeline_mode<synchronous>, transform_indices = @transform_5, window_bounds = array<i64: 3, 32, 1>}, {pipeline_mode = #tpu.pipeline_mode<synchronous>, transform_indices = @transform_6, window_bounds = array<i64: 3, 1, 1>}, {pipeline_mode = #tpu.pipeline_mode<synchronous>, transform_indices = @transform_7, window_bounds = array<i64: 32, 32>}, {pipeline_mode = #tpu.pipeline_mode<synchronous>, transform_indices = @transform_8, window_bounds = array<i64: 1, 32>}, {pipeline_mode = #tpu.pipeline_mode<synchronous>, transform_indices = @transform_9, window_bounds = array<i64: 32, 32>}, {pipeline_mode = #tpu.pipeline_mode<synchronous>, transform_indices = @transform_10, window_bounds = array<i64: 1, 32>}, {pipeline_mode = #tpu.pipeline_mode<synchronous>, transform_indices = @transform_11, window_bounds = array<i64: 32, 2>}, {pipeline_mode = #tpu.pipeline_mode<synchronous>, transform_indices = @transform_12, window_bounds = array<i64: 1, 2>}, {transform_indices = @transform_13, window_bounds = array<i64: 1, 8, 128>}, {transform_indices = @transform_14, window_bounds = array<i64: 1, 8, 128>}]} {
    %c0 = arith.constant 0 : index
    %c0_0 = arith.constant 0 : index
    %c0_1 = arith.constant 0 : index
    %0 = vector.load %arg1[%c0, %c0_0, %c0_1] : memref<1x8x32xbf16, #tpu.memory_space<vmem>>, vector<1x8x32xbf16>
    %1 = arith.extf %0 : vector<1x8x32xbf16> to vector<1x8x32xf32>
    %2 = vector.shape_cast %1 : vector<1x8x32xf32> to vector<8x32xf32>
    %c0_2 = arith.constant 0 : index
    %c0_3 = arith.constant 0 : index
    %c0_4 = arith.constant 0 : index
    %3 = vector.load %arg2[%c0_2, %c0_3, %c0_4] : memref<1x64x32xbf16, #tpu.memory_space<vmem>>, vector<1x64x32xbf16>
    %4 = arith.extf %3 : vector<1x64x32xbf16> to vector<1x64x32xf32>
    %5 = vector.shape_cast %4 : vector<1x64x32xf32> to vector<64x32xf32>
    %c0_5 = arith.constant 0 : index
    %c0_6 = arith.constant 0 : index
    %c0_7 = arith.constant 0 : index
    %c0_8 = arith.constant 0 : index
    %6 = vector.load %arg4[%c0_5, %c0_6, %c0_7, %c0_8] : memref<3x5x32x32xbf16, #tpu.memory_space<vmem>>, vector<1x1x32x32xbf16>
    %7 = vector.shape_cast %6 : vector<1x1x32x32xbf16> to vector<32x32xbf16>
    %c0_9 = arith.constant 0 : index
    %c1 = arith.constant 1 : index
    %c0_10 = arith.constant 0 : index
    %c0_11 = arith.constant 0 : index
    %8 = vector.load %arg4[%c0_9, %c1, %c0_10, %c0_11] : memref<3x5x32x32xbf16, #tpu.memory_space<vmem>>, vector<1x1x32x32xbf16>
    %9 = vector.shape_cast %8 : vector<1x1x32x32xbf16> to vector<32x32xbf16>
    %c0_12 = arith.constant 0 : index
    %c2 = arith.constant 2 : index
    %c0_13 = arith.constant 0 : index
    %c0_14 = arith.constant 0 : index
    %10 = vector.load %arg4[%c0_12, %c2, %c0_13, %c0_14] : memref<3x5x32x32xbf16, #tpu.memory_space<vmem>>, vector<1x1x32x32xbf16>
    %11 = vector.shape_cast %10 : vector<1x1x32x32xbf16> to vector<32x32xbf16>
    %c0_15 = arith.constant 0 : index
    %c3 = arith.constant 3 : index
    %c0_16 = arith.constant 0 : index
    %c0_17 = arith.constant 0 : index
    %12 = vector.load %arg4[%c0_15, %c3, %c0_16, %c0_17] : memref<3x5x32x32xbf16, #tpu.memory_space<vmem>>, vector<1x1x32x32xbf16>
    %13 = vector.shape_cast %12 : vector<1x1x32x32xbf16> to vector<32x32xbf16>
    %c0_18 = arith.constant 0 : index
    %c4 = arith.constant 4 : index
    %c0_19 = arith.constant 0 : index
    %c0_20 = arith.constant 0 : index
    %14 = vector.load %arg4[%c0_18, %c4, %c0_19, %c0_20] : memref<3x5x32x32xbf16, #tpu.memory_space<vmem>>, vector<1x1x32x32xbf16>
    %15 = vector.shape_cast %14 : vector<1x1x32x32xbf16> to vector<32x32xbf16>
    %c0_21 = arith.constant 0 : index
    %c0_22 = arith.constant 0 : index
    %c0_23 = arith.constant 0 : index
    %c0_24 = arith.constant 0 : index
    %16 = vector.load %arg5[%c0_21, %c0_22, %c0_23, %c0_24] : memref<3x5x1x32xf32, #tpu.memory_space<vmem>>, vector<1x1x1x32xf32>
    %17 = vector.shape_cast %16 : vector<1x1x1x32xf32> to vector<1x32xf32>
    %c0_25 = arith.constant 0 : index
    %c1_26 = arith.constant 1 : index
    %c0_27 = arith.constant 0 : index
    %c0_28 = arith.constant 0 : index
    %18 = vector.load %arg5[%c0_25, %c1_26, %c0_27, %c0_28] : memref<3x5x1x32xf32, #tpu.memory_space<vmem>>, vector<1x1x1x32xf32>
    %19 = vector.shape_cast %18 : vector<1x1x1x32xf32> to vector<1x32xf32>
    %c0_29 = arith.constant 0 : index
    %c2_30 = arith.constant 2 : index
    %c0_31 = arith.constant 0 : index
    %c0_32 = arith.constant 0 : index
    %20 = vector.load %arg5[%c0_29, %c2_30, %c0_31, %c0_32] : memref<3x5x1x32xf32, #tpu.memory_space<vmem>>, vector<1x1x1x32xf32>
    %21 = vector.shape_cast %20 : vector<1x1x1x32xf32> to vector<1x32xf32>
    %c0_33 = arith.constant 0 : index
    %c3_34 = arith.constant 3 : index
    %c0_35 = arith.constant 0 : index
    %c0_36 = arith.constant 0 : index
    %22 = vector.load %arg5[%c0_33, %c3_34, %c0_35, %c0_36] : memref<3x5x1x32xf32, #tpu.memory_space<vmem>>, vector<1x1x1x32xf32>
    %23 = vector.shape_cast %22 : vector<1x1x1x32xf32> to vector<1x32xf32>
    %c0_37 = arith.constant 0 : index
    %c4_38 = arith.constant 4 : index
    %c0_39 = arith.constant 0 : index
    %c0_40 = arith.constant 0 : index
    %24 = vector.load %arg5[%c0_37, %c4_38, %c0_39, %c0_40] : memref<3x5x1x32xf32, #tpu.memory_space<vmem>>, vector<1x1x1x32xf32>
    %25 = vector.shape_cast %24 : vector<1x1x1x32xf32> to vector<1x32xf32>
    %c0_41 = arith.constant 0 : index
    %c0_42 = arith.constant 0 : index
    %c0_43 = arith.constant 0 : index
    %26 = vector.load %arg6[%c0_41, %c0_42, %c0_43] : memref<3x32x1xbf16, #tpu.memory_space<vmem>>, vector<1x32x1xbf16>
    %27 = vector.shape_cast %26 : vector<1x32x1xbf16> to vector<32x1xbf16>
    %c0_44 = arith.constant 0 : index
    %c0_45 = arith.constant 0 : index
    %c0_46 = arith.constant 0 : index
    %28 = vector.load %arg7[%c0_44, %c0_45, %c0_46] : memref<3x1x1xf32, #tpu.memory_space<vmem>>, vector<1x1x1xf32>
    %29 = vector.shape_cast %28 : vector<1x1x1xf32> to vector<1x1xf32>
    %30 = arith.truncf %2 : vector<8x32xf32> to vector<8x32xbf16>
    %31 = arith.truncf %5 : vector<64x32xf32> to vector<64x32xbf16>
    %cst = arith.constant dense<0.000000e+00> : vector<8x32xf32>
    %32 = tpu.matmul %30, %7, %cst {dimension_numbers = #tpu.dot_dimension_numbers<[1], [0], [0], [1], [0, 0, 1, 1], [], []>} : vector<8x32xbf16>, vector<32x32xbf16>, vector<8x32xf32> -> vector<8x32xf32>
    %33 = vector.broadcast %17 : vector<1x32xf32> to vector<8x32xf32>
    %34 = arith.addf %32, %33 : vector<8x32xf32>
    %cst_47 = arith.constant dense<0.000000e+00> : vector<8x32xf32>
    %35 = tpu.matmul %30, %9, %cst_47 {dimension_numbers = #tpu.dot_dimension_numbers<[1], [0], [0], [1], [0, 0, 1, 1], [], []>} : vector<8x32xbf16>, vector<32x32xbf16>, vector<8x32xf32> -> vector<8x32xf32>
    %36 = vector.broadcast %19 : vector<1x32xf32> to vector<8x32xf32>
    %37 = arith.addf %35, %36 : vector<8x32xf32>
    %cst_48 = arith.constant dense<0.000000e+00> : vector<8x32xf32>
    %38 = tpu.matmul %30, %13, %cst_48 {dimension_numbers = #tpu.dot_dimension_numbers<[1], [0], [0], [1], [0, 0, 1, 1], [], []>} : vector<8x32xbf16>, vector<32x32xbf16>, vector<8x32xf32> -> vector<8x32xf32>
    %39 = vector.broadcast %23 : vector<1x32xf32> to vector<8x32xf32>
    %40 = arith.addf %38, %39 : vector<8x32xf32>
    %cst_49 = arith.constant dense<0.000000e+00> : vector<8x32xf32>
    %41 = tpu.matmul %30, %15, %cst_49 {dimension_numbers = #tpu.dot_dimension_numbers<[1], [0], [0], [1], [0, 0, 1, 1], [], []>} : vector<8x32xbf16>, vector<32x32xbf16>, vector<8x32xf32> -> vector<8x32xf32>
    %42 = vector.broadcast %25 : vector<1x32xf32> to vector<8x32xf32>
    %43 = arith.addf %41, %42 : vector<8x32xf32>
    %cst_50 = arith.constant dense<0.000000e+00> : vector<64x32xf32>
    %44 = tpu.matmul %31, %11, %cst_50 {dimension_numbers = #tpu.dot_dimension_numbers<[1], [0], [0], [1], [0, 0, 1, 1], [], []>} : vector<64x32xbf16>, vector<32x32xbf16>, vector<64x32xf32> -> vector<64x32xf32>
    %45 = vector.broadcast %21 : vector<1x32xf32> to vector<64x32xf32>
    %46 = arith.addf %44, %45 : vector<64x32xf32>
    %cst_51 = arith.constant dense<0.000000e+00> : vector<64x1xf32>
    %47 = tpu.matmul %31, %27, %cst_51 {dimension_numbers = #tpu.dot_dimension_numbers<[1], [0], [0], [1], [0, 0, 1, 1], [], []>} : vector<64x32xbf16>, vector<32x1xbf16>, vector<64x1xf32> -> vector<64x1xf32>
    %48 = vector.broadcast %29 : vector<1x1xf32> to vector<64x1xf32>
    %49 = arith.addf %47, %48 : vector<64x1xf32>
    %50 = arith.negf %49 : vector<64x1xf32>
    %51 = math.exp %50 : vector<64x1xf32>
    %cst_52 = arith.constant 1.000000e+00 : f32
    %52 = vector.broadcast %cst_52 : f32 to vector<64x1xf32>
    %53 = arith.addf %52, %51 : vector<64x1xf32>
    %54 = arith.divf %52, %53 : vector<64x1xf32>
    %55 = vector.shape_cast %54 : vector<64x1xf32> to vector<1x8x8xf32>
    %cst_53 = arith.constant dense<0.000000e+00> : vector<1x8xf32>
    %56 = vector.multi_reduction <add>, %55, %cst_53 [2] : vector<1x8x8xf32> to vector<1x8xf32>
    %57 = vector.shape_cast %56 : vector<1x8xf32> to vector<1x8x1xf32>
    %cst_54 = arith.constant 1.000000e-10 : f32
    %58 = vector.broadcast %cst_54 : f32 to vector<1x8x1xf32>
    %59 = arith.addf %57, %58 : vector<1x8x1xf32>
    %60 = tpu.reciprocal %59 {approx = true} : vector<1x8x1xf32> -> vector<1x8x1xf32>
    %61 = vector.broadcast %60 : vector<1x8x1xf32> to vector<1x8x8xf32>
    %62 = arith.mulf %55, %61 : vector<1x8x8xf32>
    %63 = vector.shape_cast %37 : vector<8x32xf32> to vector<1x8x32xf32>
    "tpu.trace_start"() <{level = 10 : i32, message = "bij,bjh->bih"}> : () -> ()
    %cst_55 = arith.constant dense<0.000000e+00> : vector<1x8x32xf32>
    %64 = tpu.matmul %62, %63, %cst_55 {dimension_numbers = #tpu.dot_dimension_numbers<[2], [1], [1], [2], [0, 0, 0, 1, 1, 2], [0], [0]>} : vector<1x8x8xf32>, vector<1x8x32xf32>, vector<1x8x32xf32> -> vector<1x8x32xf32>
    "tpu.trace_stop"() : () -> ()
    %65 = vector.shape_cast %64 : vector<1x8x32xf32> to vector<8x32xf32>
    %66 = arith.addf %34, %65 : vector<8x32xf32>
    %cst_56 = arith.constant 0.000000e+00 : f32
    %67 = vector.broadcast %cst_56 : f32 to vector<8x32xf32>
    %68 = arith.maximumf %66, %67 : vector<8x32xf32>
    %69 = arith.addf %2, %68 : vector<8x32xf32>
    %70 = vector.shape_cast %40 : vector<8x32xf32> to vector<1x8x1x32xf32>
    %71 = vector.shape_cast %43 : vector<8x32xf32> to vector<1x1x8x32xf32>
    %72 = vector.broadcast %70 : vector<1x8x1x32xf32> to vector<1x8x8x32xf32>
    %73 = vector.broadcast %71 : vector<1x1x8x32xf32> to vector<1x8x8x32xf32>
    %74 = arith.addf %72, %73 : vector<1x8x8x32xf32>
    %75 = vector.shape_cast %74 : vector<1x8x8x32xf32> to vector<64x32xf32>
    %76 = arith.addf %46, %75 : vector<64x32xf32>
    %cst_57 = arith.constant 0.000000e+00 : f32
    %77 = vector.broadcast %cst_57 : f32 to vector<64x32xf32>
    %78 = arith.maximumf %76, %77 : vector<64x32xf32>
    %79 = arith.addf %5, %78 : vector<64x32xf32>
    %c1_58 = arith.constant 1 : index
    %c0_59 = arith.constant 0 : index
    %c0_60 = arith.constant 0 : index
    %c0_61 = arith.constant 0 : index
    %80 = vector.load %arg4[%c1_58, %c0_59, %c0_60, %c0_61] : memref<3x5x32x32xbf16, #tpu.memory_space<vmem>>, vector<1x1x32x32xbf16>
    %81 = vector.shape_cast %80 : vector<1x1x32x32xbf16> to vector<32x32xbf16>
    %c1_62 = arith.constant 1 : index
    %c1_63 = arith.constant 1 : index
    %c0_64 = arith.constant 0 : index
    %c0_65 = arith.constant 0 : index
    %82 = vector.load %arg4[%c1_62, %c1_63, %c0_64, %c0_65] : memref<3x5x32x32xbf16, #tpu.memory_space<vmem>>, vector<1x1x32x32xbf16>
    %83 = vector.shape_cast %82 : vector<1x1x32x32xbf16> to vector<32x32xbf16>
    %c1_66 = arith.constant 1 : index
    %c2_67 = arith.constant 2 : index
    %c0_68 = arith.constant 0 : index
    %c0_69 = arith.constant 0 : index
    %84 = vector.load %arg4[%c1_66, %c2_67, %c0_68, %c0_69] : memref<3x5x32x32xbf16, #tpu.memory_space<vmem>>, vector<1x1x32x32xbf16>
    %85 = vector.shape_cast %84 : vector<1x1x32x32xbf16> to vector<32x32xbf16>
    %c1_70 = arith.constant 1 : index
    %c3_71 = arith.constant 3 : index
    %c0_72 = arith.constant 0 : index
    %c0_73 = arith.constant 0 : index
    %86 = vector.load %arg4[%c1_70, %c3_71, %c0_72, %c0_73] : memref<3x5x32x32xbf16, #tpu.memory_space<vmem>>, vector<1x1x32x32xbf16>
    %87 = vector.shape_cast %86 : vector<1x1x32x32xbf16> to vector<32x32xbf16>
    %c1_74 = arith.constant 1 : index
    %c4_75 = arith.constant 4 : index
    %c0_76 = arith.constant 0 : index
    %c0_77 = arith.constant 0 : index
    %88 = vector.load %arg4[%c1_74, %c4_75, %c0_76, %c0_77] : memref<3x5x32x32xbf16, #tpu.memory_space<vmem>>, vector<1x1x32x32xbf16>
    %89 = vector.shape_cast %88 : vector<1x1x32x32xbf16> to vector<32x32xbf16>
    %c1_78 = arith.constant 1 : index
    %c0_79 = arith.constant 0 : index
    %c0_80 = arith.constant 0 : index
    %c0_81 = arith.constant 0 : index
    %90 = vector.load %arg5[%c1_78, %c0_79, %c0_80, %c0_81] : memref<3x5x1x32xf32, #tpu.memory_space<vmem>>, vector<1x1x1x32xf32>
    %91 = vector.shape_cast %90 : vector<1x1x1x32xf32> to vector<1x32xf32>
    %c1_82 = arith.constant 1 : index
    %c1_83 = arith.constant 1 : index
    %c0_84 = arith.constant 0 : index
    %c0_85 = arith.constant 0 : index
    %92 = vector.load %arg5[%c1_82, %c1_83, %c0_84, %c0_85] : memref<3x5x1x32xf32, #tpu.memory_space<vmem>>, vector<1x1x1x32xf32>
    %93 = vector.shape_cast %92 : vector<1x1x1x32xf32> to vector<1x32xf32>
    %c1_86 = arith.constant 1 : index
    %c2_87 = arith.constant 2 : index
    %c0_88 = arith.constant 0 : index
    %c0_89 = arith.constant 0 : index
    %94 = vector.load %arg5[%c1_86, %c2_87, %c0_88, %c0_89] : memref<3x5x1x32xf32, #tpu.memory_space<vmem>>, vector<1x1x1x32xf32>
    %95 = vector.shape_cast %94 : vector<1x1x1x32xf32> to vector<1x32xf32>
    %c1_90 = arith.constant 1 : index
    %c3_91 = arith.constant 3 : index
    %c0_92 = arith.constant 0 : index
    %c0_93 = arith.constant 0 : index
    %96 = vector.load %arg5[%c1_90, %c3_91, %c0_92, %c0_93] : memref<3x5x1x32xf32, #tpu.memory_space<vmem>>, vector<1x1x1x32xf32>
    %97 = vector.shape_cast %96 : vector<1x1x1x32xf32> to vector<1x32xf32>
    %c1_94 = arith.constant 1 : index
    %c4_95 = arith.constant 4 : index
    %c0_96 = arith.constant 0 : index
    %c0_97 = arith.constant 0 : index
    %98 = vector.load %arg5[%c1_94, %c4_95, %c0_96, %c0_97] : memref<3x5x1x32xf32, #tpu.memory_space<vmem>>, vector<1x1x1x32xf32>
    %99 = vector.shape_cast %98 : vector<1x1x1x32xf32> to vector<1x32xf32>
    %c1_98 = arith.constant 1 : index
    %c0_99 = arith.constant 0 : index
    %c0_100 = arith.constant 0 : index
    %100 = vector.load %arg6[%c1_98, %c0_99, %c0_100] : memref<3x32x1xbf16, #tpu.memory_space<vmem>>, vector<1x32x1xbf16>
    %101 = vector.shape_cast %100 : vector<1x32x1xbf16> to vector<32x1xbf16>
    %c1_101 = arith.constant 1 : index
    %c0_102 = arith.constant 0 : index
    %c0_103 = arith.constant 0 : index
    %102 = vector.load %arg7[%c1_101, %c0_102, %c0_103] : memref<3x1x1xf32, #tpu.memory_space<vmem>>, vector<1x1x1xf32>
    %103 = vector.shape_cast %102 : vector<1x1x1xf32> to vector<1x1xf32>
    %104 = arith.truncf %69 : vector<8x32xf32> to vector<8x32xbf16>
    %105 = arith.truncf %79 : vector<64x32xf32> to vector<64x32xbf16>
    %cst_104 = arith.constant dense<0.000000e+00> : vector<8x32xf32>
    %106 = tpu.matmul %104, %81, %cst_104 {dimension_numbers = #tpu.dot_dimension_numbers<[1], [0], [0], [1], [0, 0, 1, 1], [], []>} : vector<8x32xbf16>, vector<32x32xbf16>, vector<8x32xf32> -> vector<8x32xf32>
    %107 = vector.broadcast %91 : vector<1x32xf32> to vector<8x32xf32>
    %108 = arith.addf %106, %107 : vector<8x32xf32>
    %cst_105 = arith.constant dense<0.000000e+00> : vector<8x32xf32>
    %109 = tpu.matmul %104, %83, %cst_105 {dimension_numbers = #tpu.dot_dimension_numbers<[1], [0], [0], [1], [0, 0, 1, 1], [], []>} : vector<8x32xbf16>, vector<32x32xbf16>, vector<8x32xf32> -> vector<8x32xf32>
    %110 = vector.broadcast %93 : vector<1x32xf32> to vector<8x32xf32>
    %111 = arith.addf %109, %110 : vector<8x32xf32>
    %cst_106 = arith.constant dense<0.000000e+00> : vector<8x32xf32>
    %112 = tpu.matmul %104, %87, %cst_106 {dimension_numbers = #tpu.dot_dimension_numbers<[1], [0], [0], [1], [0, 0, 1, 1], [], []>} : vector<8x32xbf16>, vector<32x32xbf16>, vector<8x32xf32> -> vector<8x32xf32>
    %113 = vector.broadcast %97 : vector<1x32xf32> to vector<8x32xf32>
    %114 = arith.addf %112, %113 : vector<8x32xf32>
    %cst_107 = arith.constant dense<0.000000e+00> : vector<8x32xf32>
    %115 = tpu.matmul %104, %89, %cst_107 {dimension_numbers = #tpu.dot_dimension_numbers<[1], [0], [0], [1], [0, 0, 1, 1], [], []>} : vector<8x32xbf16>, vector<32x32xbf16>, vector<8x32xf32> -> vector<8x32xf32>
    %116 = vector.broadcast %99 : vector<1x32xf32> to vector<8x32xf32>
    %117 = arith.addf %115, %116 : vector<8x32xf32>
    %cst_108 = arith.constant dense<0.000000e+00> : vector<64x32xf32>
    %118 = tpu.matmul %105, %85, %cst_108 {dimension_numbers = #tpu.dot_dimension_numbers<[1], [0], [0], [1], [0, 0, 1, 1], [], []>} : vector<64x32xbf16>, vector<32x32xbf16>, vector<64x32xf32> -> vector<64x32xf32>
    %119 = vector.broadcast %95 : vector<1x32xf32> to vector<64x32xf32>
    %120 = arith.addf %118, %119 : vector<64x32xf32>
    %cst_109 = arith.constant dense<0.000000e+00> : vector<64x1xf32>
    %121 = tpu.matmul %105, %101, %cst_109 {dimension_numbers = #tpu.dot_dimension_numbers<[1], [0], [0], [1], [0, 0, 1, 1], [], []>} : vector<64x32xbf16>, vector<32x1xbf16>, vector<64x1xf32> -> vector<64x1xf32>
    %122 = vector.broadcast %103 : vector<1x1xf32> to vector<64x1xf32>
    %123 = arith.addf %121, %122 : vector<64x1xf32>
    %124 = arith.negf %123 : vector<64x1xf32>
    %125 = math.exp %124 : vector<64x1xf32>
    %cst_110 = arith.constant 1.000000e+00 : f32
    %126 = vector.broadcast %cst_110 : f32 to vector<64x1xf32>
    %127 = arith.addf %126, %125 : vector<64x1xf32>
    %128 = arith.divf %126, %127 : vector<64x1xf32>
    %129 = vector.shape_cast %128 : vector<64x1xf32> to vector<1x8x8xf32>
    %cst_111 = arith.constant dense<0.000000e+00> : vector<1x8xf32>
    %130 = vector.multi_reduction <add>, %129, %cst_111 [2] : vector<1x8x8xf32> to vector<1x8xf32>
    %131 = vector.shape_cast %130 : vector<1x8xf32> to vector<1x8x1xf32>
    %cst_112 = arith.constant 1.000000e-10 : f32
    %132 = vector.broadcast %cst_112 : f32 to vector<1x8x1xf32>
    %133 = arith.addf %131, %132 : vector<1x8x1xf32>
    %134 = tpu.reciprocal %133 {approx = true} : vector<1x8x1xf32> -> vector<1x8x1xf32>
    %135 = vector.broadcast %134 : vector<1x8x1xf32> to vector<1x8x8xf32>
    %136 = arith.mulf %129, %135 : vector<1x8x8xf32>
    %137 = vector.shape_cast %111 : vector<8x32xf32> to vector<1x8x32xf32>
    "tpu.trace_start"() <{level = 10 : i32, message = "bij,bjh->bih"}> : () -> ()
    %cst_113 = arith.constant dense<0.000000e+00> : vector<1x8x32xf32>
    %138 = tpu.matmul %136, %137, %cst_113 {dimension_numbers = #tpu.dot_dimension_numbers<[2], [1], [1], [2], [0, 0, 0, 1, 1, 2], [0], [0]>} : vector<1x8x8xf32>, vector<1x8x32xf32>, vector<1x8x32xf32> -> vector<1x8x32xf32>
    "tpu.trace_stop"() : () -> ()
    %139 = vector.shape_cast %138 : vector<1x8x32xf32> to vector<8x32xf32>
    %140 = arith.addf %108, %139 : vector<8x32xf32>
    %cst_114 = arith.constant 0.000000e+00 : f32
    %141 = vector.broadcast %cst_114 : f32 to vector<8x32xf32>
    %142 = arith.maximumf %140, %141 : vector<8x32xf32>
    %143 = arith.addf %69, %142 : vector<8x32xf32>
    %144 = vector.shape_cast %114 : vector<8x32xf32> to vector<1x8x1x32xf32>
    %145 = vector.shape_cast %117 : vector<8x32xf32> to vector<1x1x8x32xf32>
    %146 = vector.broadcast %144 : vector<1x8x1x32xf32> to vector<1x8x8x32xf32>
    %147 = vector.broadcast %145 : vector<1x1x8x32xf32> to vector<1x8x8x32xf32>
    %148 = arith.addf %146, %147 : vector<1x8x8x32xf32>
    %149 = vector.shape_cast %148 : vector<1x8x8x32xf32> to vector<64x32xf32>
    %150 = arith.addf %120, %149 : vector<64x32xf32>
    %cst_115 = arith.constant 0.000000e+00 : f32
    %151 = vector.broadcast %cst_115 : f32 to vector<64x32xf32>
    %152 = arith.maximumf %150, %151 : vector<64x32xf32>
    %153 = arith.addf %79, %152 : vector<64x32xf32>
    %c2_116 = arith.constant 2 : index
    %c2_117 = arith.constant 2 : index
    %c0_118 = arith.constant 0 : index
    %c0_119 = arith.constant 0 : index
    %154 = vector.load %arg4[%c2_116, %c2_117, %c0_118, %c0_119] : memref<3x5x32x32xbf16, #tpu.memory_space<vmem>>, vector<1x1x32x32xbf16>
    %155 = vector.shape_cast %154 : vector<1x1x32x32xbf16> to vector<32x32xbf16>
    %c2_120 = arith.constant 2 : index
    %c3_121 = arith.constant 3 : index
    %c0_122 = arith.constant 0 : index
    %c0_123 = arith.constant 0 : index
    %156 = vector.load %arg4[%c2_120, %c3_121, %c0_122, %c0_123] : memref<3x5x32x32xbf16, #tpu.memory_space<vmem>>, vector<1x1x32x32xbf16>
    %157 = vector.shape_cast %156 : vector<1x1x32x32xbf16> to vector<32x32xbf16>
    %c2_124 = arith.constant 2 : index
    %c4_125 = arith.constant 4 : index
    %c0_126 = arith.constant 0 : index
    %c0_127 = arith.constant 0 : index
    %158 = vector.load %arg4[%c2_124, %c4_125, %c0_126, %c0_127] : memref<3x5x32x32xbf16, #tpu.memory_space<vmem>>, vector<1x1x32x32xbf16>
    %159 = vector.shape_cast %158 : vector<1x1x32x32xbf16> to vector<32x32xbf16>
    %c2_128 = arith.constant 2 : index
    %c2_129 = arith.constant 2 : index
    %c0_130 = arith.constant 0 : index
    %c0_131 = arith.constant 0 : index
    %160 = vector.load %arg5[%c2_128, %c2_129, %c0_130, %c0_131] : memref<3x5x1x32xf32, #tpu.memory_space<vmem>>, vector<1x1x1x32xf32>
    %161 = vector.shape_cast %160 : vector<1x1x1x32xf32> to vector<1x32xf32>
    %c2_132 = arith.constant 2 : index
    %c3_133 = arith.constant 3 : index
    %c0_134 = arith.constant 0 : index
    %c0_135 = arith.constant 0 : index
    %162 = vector.load %arg5[%c2_132, %c3_133, %c0_134, %c0_135] : memref<3x5x1x32xf32, #tpu.memory_space<vmem>>, vector<1x1x1x32xf32>
    %163 = vector.shape_cast %162 : vector<1x1x1x32xf32> to vector<1x32xf32>
    %c2_136 = arith.constant 2 : index
    %c4_137 = arith.constant 4 : index
    %c0_138 = arith.constant 0 : index
    %c0_139 = arith.constant 0 : index
    %164 = vector.load %arg5[%c2_136, %c4_137, %c0_138, %c0_139] : memref<3x5x1x32xf32, #tpu.memory_space<vmem>>, vector<1x1x1x32xf32>
    %165 = vector.shape_cast %164 : vector<1x1x1x32xf32> to vector<1x32xf32>
    %166 = arith.truncf %143 : vector<8x32xf32> to vector<8x32xbf16>
    %167 = arith.truncf %153 : vector<64x32xf32> to vector<64x32xbf16>
    %cst_140 = arith.constant dense<0.000000e+00> : vector<8x32xf32>
    %168 = tpu.matmul %166, %157, %cst_140 {dimension_numbers = #tpu.dot_dimension_numbers<[1], [0], [0], [1], [0, 0, 1, 1], [], []>} : vector<8x32xbf16>, vector<32x32xbf16>, vector<8x32xf32> -> vector<8x32xf32>
    %169 = vector.broadcast %163 : vector<1x32xf32> to vector<8x32xf32>
    %170 = arith.addf %168, %169 : vector<8x32xf32>
    %cst_141 = arith.constant dense<0.000000e+00> : vector<8x32xf32>
    %171 = tpu.matmul %166, %159, %cst_141 {dimension_numbers = #tpu.dot_dimension_numbers<[1], [0], [0], [1], [0, 0, 1, 1], [], []>} : vector<8x32xbf16>, vector<32x32xbf16>, vector<8x32xf32> -> vector<8x32xf32>
    %172 = vector.broadcast %165 : vector<1x32xf32> to vector<8x32xf32>
    %173 = arith.addf %171, %172 : vector<8x32xf32>
    %cst_142 = arith.constant dense<0.000000e+00> : vector<64x32xf32>
    %174 = tpu.matmul %167, %155, %cst_142 {dimension_numbers = #tpu.dot_dimension_numbers<[1], [0], [0], [1], [0, 0, 1, 1], [], []>} : vector<64x32xbf16>, vector<32x32xbf16>, vector<64x32xf32> -> vector<64x32xf32>
    %175 = vector.broadcast %161 : vector<1x32xf32> to vector<64x32xf32>
    %176 = arith.addf %174, %175 : vector<64x32xf32>
    %177 = vector.shape_cast %170 : vector<8x32xf32> to vector<1x8x1x32xf32>
    %178 = vector.shape_cast %173 : vector<8x32xf32> to vector<1x1x8x32xf32>
    %179 = vector.broadcast %177 : vector<1x8x1x32xf32> to vector<1x8x8x32xf32>
    %180 = vector.broadcast %178 : vector<1x1x8x32xf32> to vector<1x8x8x32xf32>
    %181 = arith.addf %179, %180 : vector<1x8x8x32xf32>
    %182 = vector.shape_cast %181 : vector<1x8x8x32xf32> to vector<64x32xf32>
    %183 = arith.addf %176, %182 : vector<64x32xf32>
    %cst_143 = arith.constant 0.000000e+00 : f32
    %184 = vector.broadcast %cst_143 : f32 to vector<64x32xf32>
    %185 = arith.maximumf %183, %184 : vector<64x32xf32>
    %186 = arith.addf %153, %185 : vector<64x32xf32>
    %187 = arith.truncf %186 : vector<64x32xf32> to vector<64x32xbf16>
    %c0_144 = arith.constant 0 : index
    %c0_145 = arith.constant 0 : index
    %188 = vector.load %arg8[%c0_144, %c0_145] : memref<32x32xbf16, #tpu.memory_space<vmem>>, vector<32x32xbf16>
    %cst_146 = arith.constant dense<0.000000e+00> : vector<64x32xf32>
    %189 = tpu.matmul %187, %188, %cst_146 {dimension_numbers = #tpu.dot_dimension_numbers<[1], [0], [0], [1], [0, 0, 1, 1], [], []>} : vector<64x32xbf16>, vector<32x32xbf16>, vector<64x32xf32> -> vector<64x32xf32>
    %c0_147 = arith.constant 0 : index
    %c0_148 = arith.constant 0 : index
    %190 = vector.load %arg9[%c0_147, %c0_148] : memref<1x32xf32, #tpu.memory_space<vmem>>, vector<1x32xf32>
    %191 = vector.broadcast %190 : vector<1x32xf32> to vector<64x32xf32>
    %192 = arith.addf %189, %191 : vector<64x32xf32>
    %cst_149 = arith.constant 0.000000e+00 : f32
    %193 = vector.broadcast %cst_149 : f32 to vector<64x32xf32>
    %194 = arith.maximumf %192, %193 : vector<64x32xf32>
    %195 = arith.truncf %194 : vector<64x32xf32> to vector<64x32xbf16>
    %c0_150 = arith.constant 0 : index
    %c0_151 = arith.constant 0 : index
    %196 = vector.load %arg10[%c0_150, %c0_151] : memref<32x32xbf16, #tpu.memory_space<vmem>>, vector<32x32xbf16>
    %cst_152 = arith.constant dense<0.000000e+00> : vector<64x32xf32>
    %197 = tpu.matmul %195, %196, %cst_152 {dimension_numbers = #tpu.dot_dimension_numbers<[1], [0], [0], [1], [0, 0, 1, 1], [], []>} : vector<64x32xbf16>, vector<32x32xbf16>, vector<64x32xf32> -> vector<64x32xf32>
    %c0_153 = arith.constant 0 : index
    %c0_154 = arith.constant 0 : index
    %198 = vector.load %arg11[%c0_153, %c0_154] : memref<1x32xf32, #tpu.memory_space<vmem>>, vector<1x32xf32>
    %199 = vector.broadcast %198 : vector<1x32xf32> to vector<64x32xf32>
    %200 = arith.addf %197, %199 : vector<64x32xf32>
    %cst_155 = arith.constant 0.000000e+00 : f32
    %201 = vector.broadcast %cst_155 : f32 to vector<64x32xf32>
    %202 = arith.maximumf %200, %201 : vector<64x32xf32>
    %203 = arith.truncf %202 : vector<64x32xf32> to vector<64x32xbf16>
    %c0_156 = arith.constant 0 : index
    %c0_157 = arith.constant 0 : index
    %204 = vector.load %arg12[%c0_156, %c0_157] : memref<32x2xbf16, #tpu.memory_space<vmem>>, vector<32x2xbf16>
    %cst_158 = arith.constant dense<0.000000e+00> : vector<64x2xf32>
    %205 = tpu.matmul %203, %204, %cst_158 {dimension_numbers = #tpu.dot_dimension_numbers<[1], [0], [0], [1], [0, 0, 1, 1], [], []>} : vector<64x32xbf16>, vector<32x2xbf16>, vector<64x2xf32> -> vector<64x2xf32>
    %c0_159 = arith.constant 0 : index
    %c0_160 = arith.constant 0 : index
    %206 = vector.load %arg13[%c0_159, %c0_160] : memref<1x2xf32, #tpu.memory_space<vmem>>, vector<1x2xf32>
    %207 = vector.broadcast %206 : vector<1x2xf32> to vector<64x2xf32>
    %208 = arith.addf %205, %207 : vector<64x2xf32>
    %c0_161 = arith.constant 0 : index
    %c0_162 = arith.constant 0 : index
    %209 = vector.load %arg3[%c0_161, %c0_162] : memref<64x1xf32, #tpu.memory_space<vmem>>, vector<64x1xf32>
    %210 = vector.extract_strided_slice %208 {offsets = [0, 0], sizes = [64, 1], strides = [1, 1]} : vector<64x2xf32> to vector<64x1xf32>
    %211 = vector.extract_strided_slice %208 {offsets = [0, 1], sizes = [64, 1], strides = [1, 1]} : vector<64x2xf32> to vector<64x1xf32>
    %212 = arith.maximumf %210, %211 : vector<64x1xf32>
    %213 = arith.subf %210, %212 : vector<64x1xf32>
    %214 = math.exp %213 : vector<64x1xf32>
    %215 = arith.subf %211, %212 : vector<64x1xf32>
    %216 = math.exp %215 : vector<64x1xf32>
    %217 = arith.addf %214, %216 : vector<64x1xf32>
    %218 = math.log %217 : vector<64x1xf32>
    %219 = arith.addf %212, %218 : vector<64x1xf32>
    %cst_163 = arith.constant 5.000000e-01 : f32
    %220 = vector.broadcast %cst_163 : f32 to vector<64x1xf32>
    %221 = arith.cmpf ogt, %209, %220 : vector<64x1xf32>
    %222 = arith.select %221, %211, %210 : vector<64x1xi1>, vector<64x1xf32>
    %223 = arith.subf %219, %222 : vector<64x1xf32>
    %224 = vector.shape_cast %223 : vector<64x1xf32> to vector<1x64x1xf32>
    %cst_164 = arith.constant dense<0.000000e+00> : vector<1xf32>
    %225 = vector.multi_reduction <add>, %224, %cst_164 [1, 2] : vector<1x64x1xf32> to vector<1xf32>
    %226 = vector.shape_cast %225 : vector<1xf32> to vector<1x1x1xf32>
    %227 = vector.extract %226[0, 0, 0] : f32 from vector<1x1x1xf32>
    %228 = arith.cmpf ogt, %211, %210 : vector<64x1xf32>
    %229 = arith.extui %228 : vector<64x1xi1> to vector<64x1xi32>
    %230 = arith.sitofp %229 : vector<64x1xi32> to vector<64x1xf32>
    %231 = vector.shape_cast %230 : vector<64x1xf32> to vector<1x64x1xf32>
    %cst_165 = arith.constant dense<0.000000e+00> : vector<1xf32>
    %232 = vector.multi_reduction <add>, %231, %cst_165 [1, 2] : vector<1x64x1xf32> to vector<1xf32>
    %233 = vector.shape_cast %232 : vector<1xf32> to vector<1x1x1xf32>
    %234 = vector.extract %233[0, 0, 0] : f32 from vector<1x1x1xf32>
    %cst_166 = arith.constant 0.000000e+00 : f32
    %235 = vector.broadcast %cst_166 : f32 to vector<1x8x128xf32>
    %236 = vector.broadcast %227 : f32 to vector<1x8x128xf32>
    %237 = arith.addf %235, %236 : vector<1x8x128xf32>
    %c0_167 = arith.constant 0 : index
    %c0_168 = arith.constant 0 : index
    %c0_169 = arith.constant 0 : index
    %238 = vector.load %arg14[%c0_167, %c0_168, %c0_169] : memref<1x8x128xf32, #tpu.memory_space<vmem>>, vector<1x8x128xf32>
    tpu.vector_store %arg14[%c0_167, %c0_168, %c0_169], %237 {strides = array<i32>} : memref<1x8x128xf32, #tpu.memory_space<vmem>>, vector<1x8x128xf32>,
    %cst_170 = arith.constant 0.000000e+00 : f32
    %239 = vector.broadcast %cst_170 : f32 to vector<1x8x128xf32>
    %240 = vector.broadcast %234 : f32 to vector<1x8x128xf32>
    %241 = arith.addf %239, %240 : vector<1x8x128xf32>
    %c0_171 = arith.constant 0 : index
    %c0_172 = arith.constant 0 : index
    %c0_173 = arith.constant 0 : index
    %242 = vector.load %arg15[%c0_171, %c0_172, %c0_173] : memref<1x8x128xf32, #tpu.memory_space<vmem>>, vector<1x8x128xf32>
    tpu.vector_store %arg15[%c0_171, %c0_172, %c0_173], %241 {strides = array<i32>} : memref<1x8x128xf32, #tpu.memory_space<vmem>>, vector<1x8x128xf32>,
    return
  }
  func.func @transform_0(%arg0: i32) -> (i32, i32, i32) {
    %c0_i32 = arith.constant 0 : i32
    %c0_i32_0 = arith.constant 0 : i32
    %c0_i32_1 = arith.constant 0 : i32
    return %arg0, %c0_i32, %c0_i32_0 : i32, i32, i32
  }
  func.func @transform_1(%arg0: i32) -> (i32, i32, i32) {
    %c0_i32 = arith.constant 0 : i32
    %c0_i32_0 = arith.constant 0 : i32
    %c0_i32_1 = arith.constant 0 : i32
    return %arg0, %c0_i32, %c0_i32_0 : i32, i32, i32
  }
  func.func @transform_2(%arg0: i32) -> (i32, i32) {
    %c0_i32 = arith.constant 0 : i32
    %c0_i32_0 = arith.constant 0 : i32
    return %arg0, %c0_i32 : i32, i32
  }
  func.func @transform_3(%arg0: i32) -> (i32, i32, i32, i32) {
    %c0_i32 = arith.constant 0 : i32
    %c0_i32_0 = arith.constant 0 : i32
    %c0_i32_1 = arith.constant 0 : i32
    %c0_i32_2 = arith.constant 0 : i32
    %c0_i32_3 = arith.constant 0 : i32
    return %c0_i32, %c0_i32_0, %c0_i32_1, %c0_i32_2 : i32, i32, i32, i32
  }
  func.func @transform_4(%arg0: i32) -> (i32, i32, i32, i32) {
    %c0_i32 = arith.constant 0 : i32
    %c0_i32_0 = arith.constant 0 : i32
    %c0_i32_1 = arith.constant 0 : i32
    %c0_i32_2 = arith.constant 0 : i32
    %c0_i32_3 = arith.constant 0 : i32
    return %c0_i32, %c0_i32_0, %c0_i32_1, %c0_i32_2 : i32, i32, i32, i32
  }
  func.func @transform_5(%arg0: i32) -> (i32, i32, i32) {
    %c0_i32 = arith.constant 0 : i32
    %c0_i32_0 = arith.constant 0 : i32
    %c0_i32_1 = arith.constant 0 : i32
    %c0_i32_2 = arith.constant 0 : i32
    return %c0_i32, %c0_i32_0, %c0_i32_1 : i32, i32, i32
  }
  func.func @transform_6(%arg0: i32) -> (i32, i32, i32) {
    %c0_i32 = arith.constant 0 : i32
    %c0_i32_0 = arith.constant 0 : i32
    %c0_i32_1 = arith.constant 0 : i32
    %c0_i32_2 = arith.constant 0 : i32
    return %c0_i32, %c0_i32_0, %c0_i32_1 : i32, i32, i32
  }
  func.func @transform_7(%arg0: i32) -> (i32, i32) {
    %c0_i32 = arith.constant 0 : i32
    %c0_i32_0 = arith.constant 0 : i32
    %c0_i32_1 = arith.constant 0 : i32
    return %c0_i32, %c0_i32_0 : i32, i32
  }
  func.func @transform_8(%arg0: i32) -> (i32, i32) {
    %c0_i32 = arith.constant 0 : i32
    %c0_i32_0 = arith.constant 0 : i32
    %c0_i32_1 = arith.constant 0 : i32
    return %c0_i32, %c0_i32_0 : i32, i32
  }
  func.func @transform_9(%arg0: i32) -> (i32, i32) {
    %c0_i32 = arith.constant 0 : i32
    %c0_i32_0 = arith.constant 0 : i32
    %c0_i32_1 = arith.constant 0 : i32
    return %c0_i32, %c0_i32_0 : i32, i32
  }
  func.func @transform_10(%arg0: i32) -> (i32, i32) {
    %c0_i32 = arith.constant 0 : i32
    %c0_i32_0 = arith.constant 0 : i32
    %c0_i32_1 = arith.constant 0 : i32
    return %c0_i32, %c0_i32_0 : i32, i32
  }
  func.func @transform_11(%arg0: i32) -> (i32, i32) {
    %c0_i32 = arith.constant 0 : i32
    %c0_i32_0 = arith.constant 0 : i32
    %c0_i32_1 = arith.constant 0 : i32
    return %c0_i32, %c0_i32_0 : i32, i32
  }
  func.func @transform_12(%arg0: i32) -> (i32, i32) {
    %c0_i32 = arith.constant 0 : i32
    %c0_i32_0 = arith.constant 0 : i32
    %c0_i32_1 = arith.constant 0 : i32
    return %c0_i32, %c0_i32_0 : i32, i32
  }
  func.func @transform_13(%arg0: i32) -> (i32, i32, i32) {
    %c0_i32 = arith.constant 0 : i32
    %c0_i32_0 = arith.constant 0 : i32
    %c0_i32_1 = arith.constant 0 : i32
    return %arg0, %c0_i32, %c0_i32_0 : i32, i32, i32
  }
  func.func @transform_14(%arg0: i32) -> (i32, i32, i32) {
    %c0_i32 = arith.constant 0 : i32
    %c0_i32_0 = arith.constant 0 : i32
    %c0_i32_1 = arith.constant 0 : i32
    return %arg0, %c0_i32, %c0_i32_0 : i32, i32, i32
  }
}

</mosaic_0001>

<llo_original>
// kernel: _forward_impl.1
$region0: #{_forward_impl.1}
  #allocation0 [shape = 'u32[]', space=smem, size = 0x4, offset = 0x4, fixed_abs, tag = 'smem constant byte address 0x4 - core index']
  #allocation1 [shape = 'u32[144,128]{1,0:T(1,128)}', space=vmem, size = 0x12000, scoped, tag = 'internal scratch']
  %s0 = inlined_call_operand.vmem [shape: bf16[2,8,32], index: 0, kind: input, shape index: {}]
  %s1 = inlined_call_operand.vmem [shape: bf16[2,64,32], index: 1, kind: input, shape index: {}]
  %s2 = inlined_call_operand.vmem [shape: f32[128,1], index: 2, kind: input, shape index: {}]
  %s3 = inlined_call_operand.vmem [shape: bf16[3,5,32,32], index: 3, kind: input, shape index: {}]
  %s4 = inlined_call_operand.vmem [shape: f32[3,5,1,32], index: 4, kind: input, shape index: {}]
  %s5 = inlined_call_operand.vmem [shape: bf16[3,32,1], index: 5, kind: input, shape index: {}]
  %s6 = inlined_call_operand.vmem [shape: f32[3,1,1], index: 6, kind: input, shape index: {}]
  %s7 = inlined_call_operand.vmem [shape: bf16[32,32], index: 7, kind: input, shape index: {}]
  %s8 = inlined_call_operand.vmem [shape: f32[1,32], index: 8, kind: input, shape index: {}]
  %s9 = inlined_call_operand.vmem [shape: bf16[32,32], index: 9, kind: input, shape index: {}]
  %s10 = inlined_call_operand.vmem [shape: f32[1,32], index: 10, kind: input, shape index: {}]
  %s11 = inlined_call_operand.vmem [shape: bf16[32,2], index: 11, kind: input, shape index: {}]
  %s12 = inlined_call_operand.vmem [shape: f32[1,2], index: 12, kind: input, shape index: {}]
  %s13 = inlined_call_operand.vmem [shape: f32[2,8,128], index: 13, kind: output, shape index: {0}]
  %s14 = inlined_call_operand.vmem [shape: f32[2,8,128], index: 14, kind: output, shape index: {1}]
  %15 = xla_tuple %s13, %s14
  %s16 = sld [smem:[#allocation0]]
  $region93: #{_forward_impl.1} parent=0
    _
  %s18 = ssub.s32 1, %s16
  %s19 = scalar_select 0, %s18, %s16
  loop: start=0, step=1, limit=4
  $region2: #{_forward_impl.1} parent=0 // loop_pre_header
    _
  $region3: #{_forward_impl.1} parent=0 // loop_header
    %s21 = sphi 0, %s25
    %p22 = scmp.ge.s32.totalorder %s21, 4
    %s31 = sphi 0, %s33
    %s34 = sphi 0, %s31
    %s35 = sphi 0, %s34
    %s51 = sphi 0, %s35
    %s57 = sphi 0, %s59
    %s60 = sphi 0, %s57
    %s61 = sphi 0, %s60
    %s77 = sphi 0, %s61
    %s83 = sphi 0, %s85
    %s86 = sphi 0, %s83
    %s87 = sphi 0, %s86
    %s103 = sphi 0, %s87
    %s107 = sphi 0, %s107
    %s109 = sphi 0, %s107
    %s110 = sphi 0, %s109
    %s124 = sphi 0, %s110
    %s128 = sphi 0, %s128
    %s130 = sphi 0, %s128
    %s131 = sphi 0, %s130
    %s145 = sphi 0, %s131
    %s149 = sphi 0, %s149
    %s151 = sphi 0, %s149
    %s152 = sphi 0, %s151
    %s166 = sphi 0, %s152
    %s170 = sphi 0, %s170
    %s172 = sphi 0, %s170
    %s173 = sphi 0, %s172
    %s187 = sphi 0, %s173
    %s191 = sphi 0, %s191
    %s193 = sphi 0, %s191
    %s194 = sphi 0, %s193
    %s208 = sphi 0, %s194
    %s212 = sphi 0, %s212
    %s214 = sphi 0, %s212
    %s215 = sphi 0, %s214
    %s229 = sphi 0, %s215
    %s233 = sphi 0, %s233
    %s235 = sphi 0, %s233
    %s236 = sphi 0, %s235
    %s250 = sphi 0, %s236
    %s254 = sphi 0, %s254
    %s256 = sphi 0, %s254
    %s257 = sphi 0, %s256
    %s271 = sphi 0, %s257
    %s275 = sphi 0, %s275
    %s277 = sphi 0, %s275
    %s278 = sphi 0, %s277
    %s292 = sphi 0, %s278
    %s296 = sphi 0, %s296
    %s298 = sphi 0, %s296
    %s299 = sphi 0, %s298
    %s313 = sphi 0, %s299
    %s319 = sphi 0, %s321
    %s322 = sphi 0, %s319
    %s323 = sphi 0, %s322
    %s339 = sphi 0, %s323
    %s345 = sphi 0, %s347
    %s348 = sphi 0, %s345
    %s349 = sphi 0, %s348
    %s365 = sphi 0, %s349
  $region4: #{_forward_impl.1} parent=0 // loop_header_branch
    %24 = sbr.rel (%p22) target = $region8
  $region5: #{_forward_impl.1} parent=0 // loop_body
    %s26 = ssub.s32 %s21, 1
    %s27 = ssub.s32 %s21, 2
    %s28 = sadd.s32 %s21, 1
    %s29 = ssub.s32 %s21, %s28
    %p30 = scmp.eq.s32.totalorder %s29, 0
    %s32 = sadd.s32 %s31, 1
    %s33 = scalar_select %p30, %s31, %s32
    %p36 = pneg %p30
    %p37 = scmp.eq.s32.totalorder %s21, 1
    %p38 = por %p36, %p37
    %p39 = scmp.ne.s32.totalorder %s31, %s34
    %p40 = scmp.eq.s32.totalorder %s21, 0
    %p41 = por %p39, %p40
    %p42 = scmp.ne.s32.totalorder %s31, %s34
    %p43 = scmp.eq.s32.totalorder %s26, 1
    %p44 = por %p42, %p43
    %p45 = scmp.ne.s32.totalorder %s34, %s35
    %p46 = scmp.eq.s32.totalorder %s26, 0
    %p47 = por %p45, %p46
    %p48 = scmp.ne.s32.totalorder %s34, %s35
    %p49 = scmp.eq.s32.totalorder %s27, 1
    %p50 = por %p48, %p49
    %p52 = scmp.ne.s32.totalorder %s35, %s51
    %p53 = scmp.eq.s32.totalorder %s27, 0
    %p54 = por %p52, %p53
    %s55 = ssub.s32 %s21, %s28
    %p56 = scmp.eq.s32.totalorder %s55, 0
    %s58 = sadd.s32 %s57, 1
    %s59 = scalar_select %p56, %s57, %s58
    %p62 = pneg %p56
    %p63 = scmp.eq.s32.totalorder %s21, 1
    %p64 = por %p62, %p63
    %p65 = scmp.ne.s32.totalorder %s57, %s60
    %p66 = scmp.eq.s32.totalorder %s21, 0
    %p67 = por %p65, %p66
    %p68 = scmp.ne.s32.totalorder %s57, %s60
    %p69 = scmp.eq.s32.totalorder %s26, 1
    %p70 = por %p68, %p69
    %p71 = scmp.ne.s32.totalorder %s60, %s61
    %p72 = scmp.eq.s32.totalorder %s26, 0
    %p73 = por %p71, %p72
    %p74 = scmp.ne.s32.totalorder %s60, %s61
    %p75 = scmp.eq.s32.totalorder %s27, 1
    %p76 = por %p74, %p75
    %p78 = scmp.ne.s32.totalorder %s61, %s77
    %p79 = scmp.eq.s32.totalorder %s27, 0
    %p80 = por %p78, %p79
    %s81 = ssub.s32 %s21, %s28
    %p82 = scmp.eq.s32.totalorder %s81, 0
    %s84 = sadd.s32 %s83, 1
    %s85 = scalar_select %p82, %s83, %s84
    %p88 = pneg %p82
    %p89 = scmp.eq.s32.totalorder %s21, 1
    %p90 = por %p88, %p89
    %p91 = scmp.ne.s32.totalorder %s83, %s86
    %p92 = scmp.eq.s32.totalorder %s21, 0
    %p93 = por %p91, %p92
    %p94 = scmp.ne.s32.totalorder %s83, %s86
    %p95 = scmp.eq.s32.totalorder %s26, 1
    %p96 = por %p94, %p95
    %p97 = scmp.ne.s32.totalorder %s86, %s87
    %p98 = scmp.eq.s32.totalorder %s26, 0
    %p99 = por %p97, %p98
    %p100 = scmp.ne.s32.totalorder %s86, %s87
    %p101 = scmp.eq.s32.totalorder %s27, 1
    %p102 = por %p100, %p101
    %p104 = scmp.ne.s32.totalorder %s87, %s103
    %p105 = scmp.eq.s32.totalorder %s27, 0
    %p106 = por %p104, %p105
    %s108 = sadd.s32 %s107, 1
    %p111 = scmp.eq.s32.totalorder %s21, 1
    %p112 = scmp.ne.s32.totalorder %s107, %s109
    %p113 = scmp.eq.s32.totalorder %s21, 0
    %p114 = por %p112, %p113
    %p115 = scmp.ne.s32.totalorder %s107, %s109
    %p116 = scmp.eq.s32.totalorder %s26, 1
    %p117 = por %p115, %p116
    %p118 = scmp.ne.s32.totalorder %s109, %s110
    %p119 = scmp.eq.s32.totalorder %s26, 0
    %p120 = por %p118, %p119
    %p121 = scmp.ne.s32.totalorder %s109, %s110
    %p122 = scmp.eq.s32.totalorder %s27, 1
    %p123 = por %p121, %p122
    %p125 = scmp.ne.s32.totalorder %s110, %s124
    %p126 = scmp.eq.s32.totalorder %s27, 0
    %p127 = por %p125, %p126
    %s129 = sadd.s32 %s128, 1
    %p132 = scmp.eq.s32.totalorder %s21, 1
    %p133 = scmp.ne.s32.totalorder %s128, %s130
    %p134 = scmp.eq.s32.totalorder %s21, 0
    %p135 = por %p133, %p134
    %p136 = scmp.ne.s32.totalorder %s128, %s130
    %p137 = scmp.eq.s32.totalorder %s26, 1
    %p138 = por %p136, %p137
    %p139 = scmp.ne.s32.totalorder %s130, %s131
    %p140 = scmp.eq.s32.totalorder %s26, 0
    %p141 = por %p139, %p140
    %p142 = scmp.ne.s32.totalorder %s130, %s131
    %p143 = scmp.eq.s32.totalorder %s27, 1
    %p144 = por %p142, %p143
    %p146 = scmp.ne.s32.totalorder %s131, %s145
    %p147 = scmp.eq.s32.totalorder %s27, 0
    %p148 = por %p146, %p147
    %s150 = sadd.s32 %s149, 1
    %p153 = scmp.eq.s32.totalorder %s21, 1
    %p154 = scmp.ne.s32.totalorder %s149, %s151
    %p155 = scmp.eq.s32.totalorder %s21, 0
    %p156 = por %p154, %p155
    %p157 = scmp.ne.s32.totalorder %s149, %s151
    %p158 = scmp.eq.s32.totalorder %s26, 1
    %p159 = por %p157, %p158
    %p160 = scmp.ne.s32.totalorder %s151, %s152
    %p161 = scmp.eq.s32.totalorder %s26, 0
    %p162 = por %p160, %p161
    %p163 = scmp.ne.s32.totalorder %s151, %s152
    %p164 = scmp.eq.s32.totalorder %s27, 1
    %p165 = por %p163, %p164
    %p167 = scmp.ne.s32.totalorder %s152, %s166
    %p168 = scmp.eq.s32.totalorder %s27, 0
    %p169 = por %p167, %p168
    %s171 = sadd.s32 %s170, 1
    %p174 = scmp.eq.s32.totalorder %s21, 1
    %p175 = scmp.ne.s32.totalorder %s170, %s172
    %p176 = scmp.eq.s32.totalorder %s21, 0
    %p177 = por %p175, %p176
    %p178 = scmp.ne.s32.totalorder %s170, %s172
    %p179 = scmp.eq.s32.totalorder %s26, 1
    %p180 = por %p178, %p179
    %p181 = scmp.ne.s32.totalorder %s172, %s173
    %p182 = scmp.eq.s32.totalorder %s26, 0
    %p183 = por %p181, %p182
    %p184 = scmp.ne.s32.totalorder %s172, %s173
    %p185 = scmp.eq.s32.totalorder %s27, 1
    %p186 = por %p184, %p185
    %p188 = scmp.ne.s32.totalorder %s173, %s187
    %p189 = scmp.eq.s32.totalorder %s27, 0
    %p190 = por %p188, %p189
    %s192 = sadd.s32 %s191, 1
    %p195 = scmp.eq.s32.totalorder %s21, 1
    %p196 = scmp.ne.s32.totalorder %s191, %s193
    %p197 = scmp.eq.s32.totalorder %s21, 0
    %p198 = por %p196, %p197
    %p199 = scmp.ne.s32.totalorder %s191, %s193
    %p200 = scmp.eq.s32.totalorder %s26, 1
    %p201 = por %p199, %p200
    %p202 = scmp.ne.s32.totalorder %s193, %s194
    %p203 = scmp.eq.s32.totalorder %s26, 0
    %p204 = por %p202, %p203
    %p205 = scmp.ne.s32.totalorder %s193, %s194
    %p206 = scmp.eq.s32.totalorder %s27, 1
    %p207 = por %p205, %p206
    %p209 = scmp.ne.s32.totalorder %s194, %s208
    %p210 = scmp.eq.s32.totalorder %s27, 0
    %p211 = por %p209, %p210
    %s213 = sadd.s32 %s212, 1
    %p216 = scmp.eq.s32.totalorder %s21, 1
    %p217 = scmp.ne.s32.totalorder %s212, %s214
    %p218 = scmp.eq.s32.totalorder %s21, 0
    %p219 = por %p217, %p218
    %p220 = scmp.ne.s32.totalorder %s212, %s214
    %p221 = scmp.eq.s32.totalorder %s26, 1
    %p222 = por %p220, %p221
    %p223 = scmp.ne.s32.totalorder %s214, %s215
    %p224 = scmp.eq.s32.totalorder %s26, 0
    %p225 = por %p223, %p224
    %p226 = scmp.ne.s32.totalorder %s214, %s215
    %p227 = scmp.eq.s32.totalorder %s27, 1
    %p228 = por %p226, %p227
    %p230 = scmp.ne.s32.totalorder %s215, %s229
    %p231 = scmp.eq.s32.totalorder %s27, 0
    %p232 = por %p230, %p231
    %s234 = sadd.s32 %s233, 1
    %p237 = scmp.eq.s32.totalorder %s21, 1
    %p238 = scmp.ne.s32.totalorder %s233, %s235
    %p239 = scmp.eq.s32.totalorder %s21, 0
    %p240 = por %p238, %p239
    %p241 = scmp.ne.s32.totalorder %s233, %s235
    %p242 = scmp.eq.s32.totalorder %s26, 1
    %p243 = por %p241, %p242
    %p244 = scmp.ne.s32.totalorder %s235, %s236
    %p245 = scmp.eq.s32.totalorder %s26, 0
    %p246 = por %p244, %p245
    %p247 = scmp.ne.s32.totalorder %s235, %s236
    %p248 = scmp.eq.s32.totalorder %s27, 1
    %p249 = por %p247, %p248
    %p251 = scmp.ne.s32.totalorder %s236, %s250
    %p252 = scmp.eq.s32.totalorder %s27, 0
    %p253 = por %p251, %p252
    %s255 = sadd.s32 %s254, 1
    %p258 = scmp.eq.s32.totalorder %s21, 1
    %p259 = scmp.ne.s32.totalorder %s254, %s256
    %p260 = scmp.eq.s32.totalorder %s21, 0
    %p261 = por %p259, %p260
    %p262 = scmp.ne.s32.totalorder %s254, %s256
    %p263 = scmp.eq.s32.totalorder %s26, 1
    %p264 = por %p262, %p263
    %p265 = scmp.ne.s32.totalorder %s256, %s257
    %p266 = scmp.eq.s32.totalorder %s26, 0
    %p267 = por %p265, %p266
    %p268 = scmp.ne.s32.totalorder %s256, %s257
    %p269 = scmp.eq.s32.totalorder %s27, 1
    %p270 = por %p268, %p269
    %p272 = scmp.ne.s32.totalorder %s257, %s271
    %p273 = scmp.eq.s32.totalorder %s27, 0
    %p274 = por %p272, %p273
    %s276 = sadd.s32 %s275, 1
    %p279 = scmp.eq.s32.totalorder %s21, 1
    %p280 = scmp.ne.s32.totalorder %s275, %s277
    %p281 = scmp.eq.s32.totalorder %s21, 0
    %p282 = por %p280, %p281
    %p283 = scmp.ne.s32.totalorder %s275, %s277
    %p284 = scmp.eq.s32.totalorder %s26, 1
    %p285 = por %p283, %p284
    %p286 = scmp.ne.s32.totalorder %s277, %s278
    %p287 = scmp.eq.s32.totalorder %s26, 0
    %p288 = por %p286, %p287
    %p289 = scmp.ne.s32.totalorder %s277, %s278
    %p290 = scmp.eq.s32.totalorder %s27, 1
    %p291 = por %p289, %p290
    %p293 = scmp.ne.s32.totalorder %s278, %s292
    %p294 = scmp.eq.s32.totalorder %s27, 0
    %p295 = por %p293, %p294
    %s297 = sadd.s32 %s296, 1
    %p300 = scmp.eq.s32.totalorder %s21, 1
    %p301 = scmp.ne.s32.totalorder %s296, %s298
    %p302 = scmp.eq.s32.totalorder %s21, 0
    %p303 = por %p301, %p302
    %p304 = scmp.ne.s32.totalorder %s296, %s298
    %p305 = scmp.eq.s32.totalorder %s26, 1
    %p306 = por %p304, %p305
    %p307 = scmp.ne.s32.totalorder %s298, %s299
    %p308 = scmp.eq.s32.totalorder %s26, 0
    %p309 = por %p307, %p308
    %p310 = scmp.ne.s32.totalorder %s298, %s299
    %p311 = scmp.eq.s32.totalorder %s27, 1
    %p312 = por %p310, %p311
    %p314 = scmp.ne.s32.totalorder %s299, %s313
    %p315 = scmp.eq.s32.totalorder %s27, 0
    %p316 = por %p314, %p315
    %s317 = ssub.s32 %s21, %s28
    %p318 = scmp.eq.s32.totalorder %s317, 0
    %s320 = sadd.s32 %s319, 1
    %s321 = scalar_select %p318, %s319, %s320
    %p324 = pneg %p318
    %p325 = scmp.eq.s32.totalorder %s21, 1
    %p326 = por %p324, %p325
    %p327 = scmp.ne.s32.totalorder %s319, %s322
    %p328 = scmp.eq.s32.totalorder %s21, 0
    %p329 = por %p327, %p328
    %p330 = scmp.ne.s32.totalorder %s319, %s322
    %p331 = scmp.eq.s32.totalorder %s26, 1
    %p332 = por %p330, %p331
    %p333 = scmp.ne.s32.totalorder %s322, %s323
    %p334 = scmp.eq.s32.totalorder %s26, 0
    %p335 = por %p333, %p334
    %p336 = scmp.ne.s32.totalorder %s322, %s323
    %p337 = scmp.eq.s32.totalorder %s27, 1
    %p338 = por %p336, %p337
    %p340 = scmp.ne.s32.totalorder %s323, %s339
    %p341 = scmp.eq.s32.totalorder %s27, 0
    %p342 = por %p340, %p341
    %s343 = ssub.s32 %s21, %s28
    %p344 = scmp.eq.s32.totalorder %s343, 0
    %s346 = sadd.s32 %s345, 1
    %s347 = scalar_select %p344, %s345, %s346
    %p350 = pneg %p344
    %p351 = scmp.eq.s32.totalorder %s21, 1
    %p352 = por %p350, %p351
    %p353 = scmp.ne.s32.totalorder %s345, %s348
    %p354 = scmp.eq.s32.totalorder %s21, 0
    %p355 = por %p353, %p354
    %p356 = scmp.ne.s32.totalorder %s345, %s348
    %p357 = scmp.eq.s32.totalorder %s26, 1
    %p358 = por %p356, %p357
    %p359 = scmp.ne.s32.totalorder %s348, %s349
    %p360 = scmp.eq.s32.totalorder %s26, 0
    %p361 = por %p359, %p360
    %p362 = scmp.ne.s32.totalorder %s348, %s349
    %p363 = scmp.eq.s32.totalorder %s27, 1
    %p364 = por %p362, %p363
    %p366 = scmp.ne.s32.totalorder %s349, %s365
    %p367 = scmp.eq.s32.totalorder %s27, 0
    %p368 = por %p366, %p367
    %p369 = scmp.le.s32.totalorder 1, %s21
    %p370 = scmp.lt.s32.totalorder %s21, 3
    %p371 = pnand %p369, %p370
    %p372 = pneg %p371
    // Predicated region
    $region9: #{_forward_impl.1} parent=5 // pred_check
      _
    $region10: #{_forward_impl.1} parent=5 // pred_check_branch
      %374 = sbr.rel (%p371) target = $region12
    $region11: #{_forward_impl.1} parent=5 // pred_region
      %s375 = ssub.s32 %s21, 1
      // Predicated region
      $region13: #{_forward_impl.1} parent=11 // pred_check
        %p376 = pneg %p120
      $region14: #{_forward_impl.1} parent=11 // pred_check_branch
        %378 = sbr.rel (%p376) target = $region16
      $region15: #{_forward_impl.1} parent=11 // pred_region
        _
      $region16: #{_forward_impl.1} parent=11 // pred_fallthru
        _
      // Predicated region
      $region17: #{_forward_impl.1} parent=11 // pred_check
        %p379 = pneg %p141
      $region18: #{_forward_impl.1} parent=11 // pred_check_branch
        %381 = sbr.rel (%p379) target = $region20
      $region19: #{_forward_impl.1} parent=11 // pred_region
        _
      $region20: #{_forward_impl.1} parent=11 // pred_fallthru
        _
      // Predicated region
      $region21: #{_forward_impl.1} parent=11 // pred_check
        %p382 = pneg %p162
      $region22: #{_forward_impl.1} parent=11 // pred_check_branch
        %384 = sbr.rel (%p382) target = $region24
      $region23: #{_forward_impl.1} parent=11 // pred_region
        _
      $region24: #{_forward_impl.1} parent=11 // pred_fallthru
        _
      // Predicated region
      $region25: #{_forward_impl.1} parent=11 // pred_check
        %p385 = pneg %p183
      $region26: #{_forward_impl.1} parent=11 // pred_check_branch
        %387 = sbr.rel (%p385) target = $region28
      $region27: #{_forward_impl.1} parent=11 // pred_region
        _
      $region28: #{_forward_impl.1} parent=11 // pred_fallthru
        _
      // Predicated region
      $region29: #{_forward_impl.1} parent=11 // pred_check
        %p388 = pneg %p204
      $region30: #{_forward_impl.1} parent=11 // pred_check_branch
        %390 = sbr.rel (%p388) target = $region32
      $region31: #{_forward_impl.1} parent=11 // pred_region
        _
      $region32: #{_forward_impl.1} parent=11 // pred_fallthru
        _
      // Predicated region
      $region33: #{_forward_impl.1} parent=11 // pred_check
        %p391 = pneg %p225
      $region34: #{_forward_impl.1} parent=11 // pred_check_branch
        %393 = sbr.rel (%p391) target = $region36
      $region35: #{_forward_impl.1} parent=11 // pred_region
        _
      $region36: #{_forward_impl.1} parent=11 // pred_fallthru
        _
      // Predicated region
      $region37: #{_forward_impl.1} parent=11 // pred_check
        %p394 = pneg %p246
      $region38: #{_forward_impl.1} parent=11 // pred_check_branch
        %396 = sbr.rel (%p394) target = $region40
      $region39: #{_forward_impl.1} parent=11 // pred_region
        _
      $region40: #{_forward_impl.1} parent=11 // pred_fallthru
        _
      // Predicated region
      $region41: #{_forward_impl.1} parent=11 // pred_check
        %p397 = pneg %p267
      $region42: #{_forward_impl.1} parent=11 // pred_check_branch
        %399 = sbr.rel (%p397) target = $region44
      $region43: #{_forward_impl.1} parent=11 // pred_region
        _
      $region44: #{_forward_impl.1} parent=11 // pred_fallthru
        _
      // Predicated region
      $region45: #{_forward_impl.1} parent=11 // pred_check
        %p400 = pneg %p288
      $region46: #{_forward_impl.1} parent=11 // pred_check_branch
        %402 = sbr.rel (%p400) target = $region48
      $region47: #{_forward_impl.1} parent=11 // pred_region
        _
      $region48: #{_forward_impl.1} parent=11 // pred_fallthru
        _
      // Predicated region
      $region49: #{_forward_impl.1} parent=11 // pred_check
        %p403 = pneg %p309
      $region50: #{_forward_impl.1} parent=11 // pred_check_branch
        %405 = sbr.rel (%p403) target = $region52
      $region51: #{_forward_impl.1} parent=11 // pred_region
        _
      $region52: #{_forward_impl.1} parent=11 // pred_fallthru
        _
    $region12: #{_forward_impl.1} parent=5 // pred_fallthru
      _
    %p406 = scmp.lt.s32.totalorder %s21, 2
    // Predicated region
    $region53: #{_forward_impl.1} parent=5 // pred_check
      %p407 = pneg %p406
    $region54: #{_forward_impl.1} parent=5 // pred_check_branch
      %409 = sbr.rel (%p407) target = $region56
    $region55: #{_forward_impl.1} parent=5 // pred_region
      // Predicated region
      $region57: #{_forward_impl.1} parent=55 // pred_check
        %p410 = pneg %p41
      $region58: #{_forward_impl.1} parent=55 // pred_check_branch
        %412 = sbr.rel (%p410) target = $region60
      $region59: #{_forward_impl.1} parent=55 // pred_region
        %p413 = scmp.lt.s32.totalorder %s21, 1
        %s414 = scalar_select %p413, %s21, 1
        %s415 = smul.addr %s414, 4
        %s416 = scalar_lea.vmem %s0, %s415
      $region60: #{_forward_impl.1} parent=55 // pred_fallthru
        _
      // Predicated region
      $region61: #{_forward_impl.1} parent=55 // pred_check
        %p417 = pneg %p67
      $region62: #{_forward_impl.1} parent=55 // pred_check_branch
        %419 = sbr.rel (%p417) target = $region64
      $region63: #{_forward_impl.1} parent=55 // pred_region
        %p420 = scmp.lt.s32.totalorder %s21, 1
        %s421 = scalar_select %p420, %s21, 1
        %s422 = smul.addr %s421, 8
        %s423 = smul.addr %s422, 4
        %s424 = scalar_lea.vmem %s1, %s423
      $region64: #{_forward_impl.1} parent=55 // pred_fallthru
        _
      // Predicated region
      $region65: #{_forward_impl.1} parent=55 // pred_check
        %p425 = pneg %p93
      $region66: #{_forward_impl.1} parent=55 // pred_check_branch
        %427 = sbr.rel (%p425) target = $region68
      $region67: #{_forward_impl.1} parent=55 // pred_region
        %s428 = smul.u32 8, %s21
        %p429 = scmp.lt.s32.totalorder %s428, 15
        %s430 = scalar_select %p429, %s428, 15
        %s431 = smul.addr %s430, 8
        %s432 = scalar_lea.vmem %s2, %s431
        %s433 = smul.u32 8, %s21
      $region68: #{_forward_impl.1} parent=55 // pred_fallthru
        _
    $region56: #{_forward_impl.1} parent=5 // pred_fallthru
      _
    %p434 = scmp.le.s32.totalorder 1, %s21
    %p435 = scmp.lt.s32.totalorder %s21, 3
    %p436 = pnand %p434, %p435
    %p437 = pneg %p436
    // Predicated region
    $region69: #{_forward_impl.1} parent=5 // pred_check
      _
    $region70: #{_forward_impl.1} parent=5 // pred_check_branch
      %439 = sbr.rel (%p436) target = $region72
    $region71: #{_forward_impl.1} parent=5 // pred_region
      %s440 = ssub.s32 %s21, 1
      %p441 = scmp.lt.s32.totalorder %s26, 1
      %s442 = scalar_select %p441, %s26, 1
      %s443 = smul.addr %s442, 4
      %s444 = scalar_lea.vmem %s0, %s443
      %p445 = pneg %p47
      %p446 = pneg %p44
      %p447 = scmp.lt.s32.totalorder %s26, 1
      %s448 = scalar_select %p447, %s26, 1
      %s449 = smul.addr %s448, 8
      %s450 = smul.addr %s449, 4
      %s451 = scalar_lea.vmem %s1, %s450
      %p452 = pneg %p73
      %p453 = pneg %p70
      %s454 = smul.u32 8, %s26
      %p455 = scmp.lt.s32.totalorder %s454, 15
      %s456 = scalar_select %p455, %s454, 15
      %s457 = smul.addr %s456, 8
      %s458 = scalar_lea.vmem %s2, %s457
      %p459 = pneg %p99
      %p460 = pneg %p96
      %p461 = pneg %p120
      %p462 = pneg %p117
      %p463 = pneg %p141
      %p464 = pneg %p138
      %p465 = pneg %p162
      %p466 = pneg %p159
      %p467 = pneg %p183
      %p468 = pneg %p180
      %p469 = pneg %p204
      %p470 = pneg %p201
      %p471 = pneg %p225
      %p472 = pneg %p222
      %p473 = pneg %p246
      %p474 = pneg %p243
      %p475 = pneg %p267
      %p476 = pneg %p264
      %p477 = pneg %p288
      %p478 = pneg %p285
      %p479 = pneg %p309
      %p480 = pneg %p306
      %p481 = pneg %p335
      %p482 = pneg %p332
      %p483 = scmp.lt.s32.totalorder %s26, 1
      %s484 = scalar_select %p483, %s26, 1
      %s485 = smul.addr %s484, 8
      %s486 = scalar_lea.vmem %s13, %s485
      %p487 = pneg %p361
      %p488 = pneg %p358
      %p489 = scmp.lt.s32.totalorder %s26, 1
      %s490 = scalar_select %p489, %s26, 1
      %s491 = smul.addr %s490, 8
      %s492 = scalar_lea.vmem %s14, %s491
      %p493 = scmp.lt.s32.totalorder %s26, 1
      %s494 = scalar_select %p493, %s26, 1
      %s495 = smul.addr %s494, 4
      %s496 = scalar_lea.vmem %s0, %s495
      %p497 = scmp.lt.s32.totalorder %s26, 1
      %s498 = scalar_select %p497, %s26, 1
      %s499 = smul.addr %s498, 8
      %s500 = smul.addr %s499, 4
      %s501 = scalar_lea.vmem %s1, %s500
      %s502 = smul.u32 8, %s26
      %p503 = scmp.lt.s32.totalorder %s502, 15
      %s504 = scalar_select %p503, %s502, 15
      %s505 = smul.addr %s504, 8
      %s506 = scalar_lea.vmem %s2, %s505
      %s507 = smul.u32 8, %s26
      %p508 = scmp.lt.s32.totalorder %s26, 1
      %s509 = scalar_select %p508, %s26, 1
      %s510 = smul.addr %s509, 8
      %s511 = scalar_lea.vmem %s13, %s510
      %p512 = scmp.lt.s32.totalorder %s26, 1
      %s513 = scalar_select %p512, %s26, 1
      %s514 = smul.addr %s513, 8
      %s515 = scalar_lea.vmem %s14, %s514
      %v517 = vld [vmem:[%s496] sm:$0xf]
      %v518 = vunpack.c.l.bf16 %v517
      %v519 = vld [vmem:[%s501] sm:$0xf]
      %v520 = vld [vmem:[%s501 + $0x4] sm:$0xf]
      %v521 = vld [vmem:[%s501 + $0x8] sm:$0xf]
      %v522 = vld [vmem:[%s501 + $0xc] sm:$0xf]
      %v523 = vld [vmem:[%s501 + $0x10] sm:$0xf]
      %v524 = vld [vmem:[%s501 + $0x14] sm:$0xf]
      %v525 = vld [vmem:[%s501 + $0x18] sm:$0xf]
      %v526 = vld [vmem:[%s501 + $0x1c] sm:$0xf]
      %v527 = vunpack.c.l.bf16 %v519
      %v528 = vunpack.c.l.bf16 %v520
      %v529 = vunpack.c.l.bf16 %v521
      %v530 = vunpack.c.l.bf16 %v522
      %v531 = vunpack.c.l.bf16 %v523
      %v532 = vunpack.c.l.bf16 %v524
      %v533 = vunpack.c.l.bf16 %v525
      %v534 = vunpack.c.l.bf16 %v526
      %v535 = vld [vmem:[%s3] sm:$0xf]
      %v536 = vld [vmem:[%s3 + $0x4] sm:$0xf]
      %v537 = vld [vmem:[%s3 + $0x8] sm:$0xf]
      %v538 = vld [vmem:[%s3 + $0xc] sm:$0xf]
      %s539 = scalar_lea.vmem %s3, 16
      %v540 = vld [vmem:[%s539] sm:$0xf]
      %v541 = vld [vmem:[%s539 + $0x4] sm:$0xf]
      %v542 = vld [vmem:[%s539 + $0x8] sm:$0xf]
      %v543 = vld [vmem:[%s539 + $0xc] sm:$0xf]
      %s544 = scalar_lea.vmem %s3, 32
      %v545 = vld [vmem:[%s544] sm:$0xf]
      %v546 = vld [vmem:[%s544 + $0x4] sm:$0xf]
      %v547 = vld [vmem:[%s544 + $0x8] sm:$0xf]
      %v548 = vld [vmem:[%s544 + $0xc] sm:$0xf]
      %s549 = scalar_lea.vmem %s3, 48
      %v550 = vld [vmem:[%s549] sm:$0xf]
      %v551 = vld [vmem:[%s549 + $0x4] sm:$0xf]
      %v552 = vld [vmem:[%s549 + $0x8] sm:$0xf]
      %v553 = vld [vmem:[%s549 + $0xc] sm:$0xf]
      %s554 = scalar_lea.vmem %s3, 64
      %v555 = vld [vmem:[%s554] sm:$0xf]
      %v556 = vld [vmem:[%s554 + $0x4] sm:$0xf]
      %v557 = vld [vmem:[%s554 + $0x8] sm:$0xf]
      %v558 = vld [vmem:[%s554 + $0xc] sm:$0xf]
      %v559 = vld [vmem:[%s4] sm:$0x1]
      %s560 = scalar_lea.vmem %s4, 1
      %v561 = vld [vmem:[%s560] sm:$0x1]
      %s562 = scalar_lea.vmem %s4, 2
      %v563 = vld [vmem:[%s562] sm:$0x1]
      %s564 = scalar_lea.vmem %s4, 3
      %v565 = vld [vmem:[%s564] sm:$0x1]
      %s566 = scalar_lea.vmem %s4, 4
      %v567 = vld [vmem:[%s566] sm:$0x1]
      %v568 = vld [vmem:[%s5] sm:$0xf]
      %v569 = vld [vmem:[%s5 + $0x4] sm:$0xf]
      %v570 = vld [vmem:[%s5 + $0x8] sm:$0xf]
      %v571 = vld [vmem:[%s5 + $0xc] sm:$0xf]
      %v572 = vld [vmem:[%s6] sm:$0x1]
      %v573 = vpack.c.bf16 %v518, %v518
      %v574 = vpack.c.bf16 %v528, %v527
      %v575 = vpack.c.bf16 %v530, %v529
      %v576 = vpack.c.bf16 %v532, %v531
      %v577 = vpack.c.bf16 %v534, %v533
      %v579 = vlaneseq
      %v580 = vshrl.u32 %v579, 7
      %v581 = vsub.s32 0, %v580
      %v582 = vrot.slane %v559, %v581
      %v588 = vunpack.c.l.b16 %v535
      %v589 = vunpack.c.l.b16 %v536
      %v590 = vunpack.c.l.b16 %v537
      %v591 = vunpack.c.l.b16 %v538
      %v592 = vpack.c.b16 %v589, %v588
      %v593 = vpack.c.b16 %v591, %v590
      %vm596 = vcmask 261120
      %v598 = vsel %vm596, %v573, 0
      %600 = vmatprep.subr.bf16.mxu0 0
      %601 = vmatpush1.bf16.msra.mxu0 %v592
      %602 = vmatprep.subr.bf16.mxu0 0
      %603 = vmatpush1.bf16.msra.mxu0 %v593
      %604 = vmatprep.subr.bf16.mxu0 0
      %605 = vmatpush1.bf16.msra.mxu0 0
      %606 = vmatprep.subr.bf16.mxu0 0
      %607 = vmatpush1.bf16.msra.mxu0 0
      %608 = vmatprep.subr.bf16.mxu0 0
      %609 = vmatpush1.bf16.msra.mxu0 0
      %610 = vmatprep.subr.bf16.mxu0 0
      %611 = vmatpush1.bf16.msra.mxu0 0
      %612 = vmatprep.subr.bf16.mxu0 0
      %613 = vmatpush1.bf16.msra.mxu0 0
      %614 = vmatprep.subr.bf16.mxu0 0
      %615 = vmatpush1.bf16.msra.mxu0 0
      %616 = vmatprep.subr.bf16.mxu0 0
      %617 = vmatpush1.bf16.msra.mxu0 0
      %618 = vmatprep.subr.bf16.mxu0 0
      %619 = vmatpush1.bf16.msra.mxu0 0
      %620 = vmatprep.subr.bf16.mxu0 0
      %621 = vmatpush1.bf16.msra.mxu0 0
      %622 = vmatprep.subr.bf16.mxu0 0
      %623 = vmatpush1.bf16.msra.mxu0 0
      %624 = vmatprep.subr.bf16.mxu0 0
      %625 = vmatpush1.bf16.msra.mxu0 0
      %626 = vmatprep.subr.bf16.mxu0 0
      %627 = vmatpush1.bf16.msra.mxu0 0
      %628 = vmatprep.subr.bf16.mxu0 0
      %629 = vmatpush1.bf16.msra.mxu0 0
      %630 = vmatprep.subr.bf16.mxu0 0
      %631 = vmatpush1.bf16.msra.mxu0 0
      %632 = vmatprep.mubr.bf16.mxu0 0
      %633 = vmatmul.mubr.bf16.gmra.mrb[0].mxu0 %v598
      %v634 = vpop.f32.mrb[0].mxu0
      %v635 = vadd.f32 %v582, %v634
      %v636 = vpop.f32.mrb[0].mxu0
      %v637 = vpop.f32.mrb[0].mxu0
      %v638 = vpop.f32.mrb[0].mxu0
      %639 = vdwg.mxu0
      %v641 = vlaneseq
      %v642 = vshrl.u32 %v641, 7
      %v643 = vsub.s32 0, %v642
      %v644 = vrot.slane %v561, %v643
      %v650 = vunpack.c.l.b16 %v540
      %v651 = vunpack.c.l.b16 %v541
      %v652 = vunpack.c.l.b16 %v542
      %v653 = vunpack.c.l.b16 %v543
      %v654 = vpack.c.b16 %v651, %v650
      %v655 = vpack.c.b16 %v653, %v652
      %658 = vmatprep.subr.bf16.mxu0 0
      %659 = vmatpush1.bf16.msra.mxu0 %v654
      %660 = vmatprep.subr.bf16.mxu0 0
      %661 = vmatpush1.bf16.msra.mxu0 %v655
      %662 = vmatprep.subr.bf16.mxu0 0
      %663 = vmatpush1.bf16.msra.mxu0 0
      %664 = vmatprep.subr.bf16.mxu0 0
      %665 = vmatpush1.bf16.msra.mxu0 0
      %666 = vmatprep.subr.bf16.mxu0 0
      %667 = vmatpush1.bf16.msra.mxu0 0
      %668 = vmatprep.subr.bf16.mxu0 0
      %669 = vmatpush1.bf16.msra.mxu0 0
      %670 = vmatprep.subr.bf16.mxu0 0
      %671 = vmatpush1.bf16.msra.mxu0 0
      %672 = vmatprep.subr.bf16.mxu0 0
      %673 = vmatpush1.bf16.msra.mxu0 0
      %674 = vmatprep.subr.bf16.mxu0 0
      %675 = vmatpush1.bf16.msra.mxu0 0
      %676 = vmatprep.subr.bf16.mxu0 0
      %677 = vmatpush1.bf16.msra.mxu0 0
      %678 = vmatprep.subr.bf16.mxu0 0
      %679 = vmatpush1.bf16.msra.mxu0 0
      %680 = vmatprep.subr.bf16.mxu0 0
      %681 = vmatpush1.bf16.msra.mxu0 0
      %682 = vmatprep.subr.bf16.mxu0 0
      %683 = vmatpush1.bf16.msra.mxu0 0
      %684 = vmatprep.subr.bf16.mxu0 0
      %685 = vmatpush1.bf16.msra.mxu0 0
      %686 = vmatprep.subr.bf16.mxu0 0
      %687 = vmatpush1.bf16.msra.mxu0 0
      %688 = vmatprep.subr.bf16.mxu0 0
      %689 = vmatpush1.bf16.msra.mxu0 0
      %690 = vmatprep.mubr.bf16.mxu0 0
      %691 = vmatmul.mubr.bf16.gmra.mrb[0].mxu0 %v598
      %v692 = vpop.f32.mrb[0].mxu0
      %v693 = vadd.f32 %v644, %v692
      %v694 = vpop.f32.mrb[0].mxu0
      %v695 = vpop.f32.mrb[0].mxu0
      %v696 = vpop.f32.mrb[0].mxu0
      %697 = vdwg.mxu0
      %v699 = vlaneseq
      %v700 = vshrl.u32 %v699, 7
      %v701 = vsub.s32 0, %v700
      %v702 = vrot.slane %v565, %v701
      %v708 = vunpack.c.l.b16 %v550
      %v709 = vunpack.c.l.b16 %v551
      %v710 = vunpack.c.l.b16 %v552
      %v711 = vunpack.c.l.b16 %v553
      %v712 = vpack.c.b16 %v709, %v708
      %v713 = vpack.c.b16 %v711, %v710
      %716 = vmatprep.subr.bf16.mxu0 0
      %717 = vmatpush1.bf16.msra.mxu0 %v712
      %718 = vmatprep.subr.bf16.mxu0 0
      %719 = vmatpush1.bf16.msra.mxu0 %v713
      %720 = vmatprep.subr.bf16.mxu0 0
      %721 = vmatpush1.bf16.msra.mxu0 0
      %722 = vmatprep.subr.bf16.mxu0 0
      %723 = vmatpush1.bf16.msra.mxu0 0
      %724 = vmatprep.subr.bf16.mxu0 0
      %725 = vmatpush1.bf16.msra.mxu0 0
      %726 = vmatprep.subr.bf16.mxu0 0
      %727 = vmatpush1.bf16.msra.mxu0 0
      %728 = vmatprep.subr.bf16.mxu0 0
      %729 = vmatpush1.bf16.msra.mxu0 0
      %730 = vmatprep.subr.bf16.mxu0 0
      %731 = vmatpush1.bf16.msra.mxu0 0
      %732 = vmatprep.subr.bf16.mxu0 0
      %733 = vmatpush1.bf16.msra.mxu0 0
      %734 = vmatprep.subr.bf16.mxu0 0
      %735 = vmatpush1.bf16.msra.mxu0 0
      %736 = vmatprep.subr.bf16.mxu0 0
      %737 = vmatpush1.bf16.msra.mxu0 0
      %738 = vmatprep.subr.bf16.mxu0 0
      %739 = vmatpush1.bf16.msra.mxu0 0
      %740 = vmatprep.subr.bf16.mxu0 0
      %741 = vmatpush1.bf16.msra.mxu0 0
      %742 = vmatprep.subr.bf16.mxu0 0
      %743 = vmatpush1.bf16.msra.mxu0 0
      %744 = vmatprep.subr.bf16.mxu0 0
      %745 = vmatpush1.bf16.msra.mxu0 0
      %746 = vmatprep.subr.bf16.mxu0 0
      %747 = vmatpush1.bf16.msra.mxu0 0
      %748 = vmatprep.mubr.bf16.mxu0 0
      %749 = vmatmul.mubr.bf16.gmra.mrb[0].mxu0 %v598
      %v750 = vpop.f32.mrb[0].mxu0
      %v751 = vadd.f32 %v702, %v750
      %v752 = vpop.f32.mrb[0].mxu0
      %v753 = vpop.f32.mrb[0].mxu0
      %v754 = vpop.f32.mrb[0].mxu0
      %755 = vdwg.mxu0
      %v757 = vlaneseq
      %v758 = vshrl.u32 %v757, 7
      %v759 = vsub.s32 0, %v758
      %v760 = vrot.slane %v567, %v759
      %v766 = vunpack.c.l.b16 %v555
      %v767 = vunpack.c.l.b16 %v556
      %v768 = vunpack.c.l.b16 %v557
      %v769 = vunpack.c.l.b16 %v558
      %v770 = vpack.c.b16 %v767, %v766
      %v771 = vpack.c.b16 %v769, %v768
      %774 = vmatprep.subr.bf16.mxu0 0
      %775 = vmatpush1.bf16.msra.mxu0 %v770
      %776 = vmatprep.subr.bf16.mxu0 0
      %777 = vmatpush1.bf16.msra.mxu0 %v771
      %778 = vmatprep.subr.bf16.mxu0 0
      %779 = vmatpush1.bf16.msra.mxu0 0
      %780 = vmatprep.subr.bf16.mxu0 0
      %781 = vmatpush1.bf16.msra.mxu0 0
      %782 = vmatprep.subr.bf16.mxu0 0
      %783 = vmatpush1.bf16.msra.mxu0 0
      %784 = vmatprep.subr.bf16.mxu0 0
      %785 = vmatpush1.bf16.msra.mxu0 0
      %786 = vmatprep.subr.bf16.mxu0 0
      %787 = vmatpush1.bf16.msra.mxu0 0
      %788 = vmatprep.subr.bf16.mxu0 0
      %789 = vmatpush1.bf16.msra.mxu0 0
      %790 = vmatprep.subr.bf16.mxu0 0
      %791 = vmatpush1.bf16.msra.mxu0 0
      %792 = vmatprep.subr.bf16.mxu0 0
      %793 = vmatpush1.bf16.msra.mxu0 0
      %794 = vmatprep.subr.bf16.mxu0 0
      %795 = vmatpush1.bf16.msra.mxu0 0
      %796 = vmatprep.subr.bf16.mxu0 0
      %797 = vmatpush1.bf16.msra.mxu0 0
      %798 = vmatprep.subr.bf16.mxu0 0
      %799 = vmatpush1.bf16.msra.mxu0 0
      %800 = vmatprep.subr.bf16.mxu0 0
      %801 = vmatpush1.bf16.msra.mxu0 0
      %802 = vmatprep.subr.bf16.mxu0 0
      %803 = vmatpush1.bf16.msra.mxu0 0
      %804 = vmatprep.subr.bf16.mxu0 0
      %805 = vmatpush1.bf16.msra.mxu0 0
      %806 = vmatprep.mubr.bf16.mxu0 0
      %807 = vmatmul.mubr.bf16.gmra.mrb[0].mxu0 %v598
      %v808 = vpop.f32.mrb[0].mxu0
      %v809 = vadd.f32 %v760, %v808
      %v810 = vpop.f32.mrb[0].mxu0
      %v811 = vpop.f32.mrb[0].mxu0
      %v812 = vpop.f32.mrb[0].mxu0
      %813 = vdwg.mxu0
      %v815 = vlaneseq
      %v816 = vshrl.u32 %v815, 7
      %v817 = vsub.s32 0, %v816
      %v818 = vrot.slane %v563, %v817
      %v824 = vunpack.c.l.b16 %v545
      %v825 = vunpack.c.l.b16 %v546
      %v826 = vunpack.c.l.b16 %v547
      %v827 = vunpack.c.l.b16 %v548
      %v828 = vpack.c.b16 %v825, %v824
      %v829 = vpack.c.b16 %v827, %v826
      %v833 = vsel %vm596, %v574, 0
      %v836 = vsel %vm596, %v575, 0
      %v839 = vsel %vm596, %v576, 0
      %v842 = vsel %vm596, %v577, 0
      %844 = vmatprep.subr.bf16.mxu0 0
      %845 = vmatpush1.bf16.msra.mxu0 %v828
      %846 = vmatprep.subr.bf16.mxu0 0
      %847 = vmatpush1.bf16.msra.mxu0 %v829
      %848 = vmatprep.subr.bf16.mxu0 0
      %849 = vmatpush1.bf16.msra.mxu0 0
      %850 = vmatprep.subr.bf16.mxu0 0
      %851 = vmatpush1.bf16.msra.mxu0 0
      %852 = vmatprep.subr.bf16.mxu0 0
      %853 = vmatpush1.bf16.msra.mxu0 0
      %854 = vmatprep.subr.bf16.mxu0 0
      %855 = vmatpush1.bf16.msra.mxu0 0
      %856 = vmatprep.subr.bf16.mxu0 0
      %857 = vmatpush1.bf16.msra.mxu0 0
      %858 = vmatprep.subr.bf16.mxu0 0
      %859 = vmatpush1.bf16.msra.mxu0 0
      %860 = vmatprep.subr.bf16.mxu0 0
      %861 = vmatpush1.bf16.msra.mxu0 0
      %862 = vmatprep.subr.bf16.mxu0 0
      %863 = vmatpush1.bf16.msra.mxu0 0
      %864 = vmatprep.subr.bf16.mxu0 0
      %865 = vmatpush1.bf16.msra.mxu0 0
      %866 = vmatprep.subr.bf16.mxu0 0
      %867 = vmatpush1.bf16.msra.mxu0 0
      %868 = vmatprep.subr.bf16.mxu0 0
      %869 = vmatpush1.bf16.msra.mxu0 0
      %870 = vmatprep.subr.bf16.mxu0 0
      %871 = vmatpush1.bf16.msra.mxu0 0
      %872 = vmatprep.subr.bf16.mxu0 0
      %873 = vmatpush1.bf16.msra.mxu0 0
      %874 = vmatprep.subr.bf16.mxu0 0
      %875 = vmatpush1.bf16.msra.mxu0 0
      %876 = vmatprep.mubr.bf16.mxu0 0
      %877 = vmatmul.mubr.bf16.gmra.mrb[0].mxu0 %v833
      %v878 = vpop.f32.mrb[0].mxu0
      %v879 = vadd.f32 %v818, %v878
      %v880 = vpop.f32.mrb[0].mxu0
      %v881 = vpop.f32.mrb[0].mxu0
      %v882 = vadd.f32 %v818, %v881
      %v883 = vpop.f32.mrb[0].mxu0
      %884 = vmatprep.mubr.bf16.mxu0 0
      %885 = vmatmul.mubr.bf16.gmra.mrb[0].mxu0 %v836
      %v886 = vpop.f32.mrb[0].mxu0
      %v887 = vadd.f32 %v818, %v886
      %v888 = vpop.f32.mrb[0].mxu0
      %v889 = vpop.f32.mrb[0].mxu0
      %v890 = vadd.f32 %v818, %v889
      %v891 = vpop.f32.mrb[0].mxu0
      %892 = vmatprep.mubr.bf16.mxu0 0
      %893 = vmatmul.mubr.bf16.gmra.mrb[0].mxu0 %v839
      %v894 = vpop.f32.mrb[0].mxu0
      %v895 = vadd.f32 %v818, %v894
      %v896 = vpop.f32.mrb[0].mxu0
      %v897 = vpop.f32.mrb[0].mxu0
      %v898 = vadd.f32 %v818, %v897
      %v899 = vpop.f32.mrb[0].mxu0
      %900 = vmatprep.mubr.bf16.mxu0 0
      %901 = vmatmul.mubr.bf16.gmra.mrb[0].mxu0 %v842
      %v902 = vpop.f32.mrb[0].mxu0
      %v903 = vadd.f32 %v818, %v902
      %v904 = vpop.f32.mrb[0].mxu0
      %v905 = vpop.f32.mrb[0].mxu0
      %v906 = vadd.f32 %v818, %v905
      %v907 = vpop.f32.mrb[0].mxu0
      %908 = vdwg.mxu0
      %v910 = vlaneseq
      %v911 = vshrl.u32 %v910, 7
      %v912 = vsub.s32 0, %v911
      %v913 = vrot.slane %v572, %v912
      %v919 = vunpack.c.l.b16 %v568
      %v920 = vunpack.c.l.b16 %v569
      %v921 = vunpack.c.l.b16 %v570
      %v922 = vunpack.c.l.b16 %v571
      %v923 = vpack.c.b16 %v920, %v919
      %v924 = vpack.c.b16 %v922, %v921
      %927 = vmatprep.subr.bf16.mxu0 0
      %928 = vmatpush1.bf16.msra.mxu0 %v923
      %929 = vmatprep.subr.bf16.mxu0 0
      %930 = vmatpush1.bf16.msra.mxu0 %v924
      %931 = vmatprep.subr.bf16.mxu0 0
      %932 = vmatpush1.bf16.msra.mxu0 0
      %933 = vmatprep.subr.bf16.mxu0 0
      %934 = vmatpush1.bf16.msra.mxu0 0
      %935 = vmatprep.subr.bf16.mxu0 0
      %936 = vmatpush1.bf16.msra.mxu0 0
      %937 = vmatprep.subr.bf16.mxu0 0
      %938 = vmatpush1.bf16.msra.mxu0 0
      %939 = vmatprep.subr.bf16.mxu0 0
      %940 = vmatpush1.bf16.msra.mxu0 0
      %941 = vmatprep.subr.bf16.mxu0 0
      %942 = vmatpush1.bf16.msra.mxu0 0
      %943 = vmatprep.subr.bf16.mxu0 0
      %944 = vmatpush1.bf16.msra.mxu0 0
      %945 = vmatprep.subr.bf16.mxu0 0
      %946 = vmatpush1.bf16.msra.mxu0 0
      %947 = vmatprep.subr.bf16.mxu0 0
      %948 = vmatpush1.bf16.msra.mxu0 0
      %949 = vmatprep.subr.bf16.mxu0 0
      %950 = vmatpush1.bf16.msra.mxu0 0
      %951 = vmatprep.subr.bf16.mxu0 0
      %952 = vmatpush1.bf16.msra.mxu0 0
      %953 = vmatprep.subr.bf16.mxu0 0
      %954 = vmatpush1.bf16.msra.mxu0 0
      %955 = vmatprep.subr.bf16.mxu0 0
      %956 = vmatpush1.bf16.msra.mxu0 0
      %957 = vmatprep.subr.bf16.mxu0 0
      %958 = vmatpush1.bf16.msra.mxu0 0
      %959 = vmatprep.mubr.bf16.mxu0 0
      %960 = vmatmul.mubr.bf16.gmra.mrb[0].mxu0 %v833
      %v961 = vpop.f32.mrb[0].mxu0
      %v962 = vadd.f32 %v913, %v961
      %v963 = vpop.f32.mrb[0].mxu0
      %v964 = vpop.f32.mrb[0].mxu0
      %v965 = vadd.f32 %v913, %v964
      %v966 = vpop.f32.mrb[0].mxu0
      %967 = vmatprep.mubr.bf16.mxu0 0
      %968 = vmatmul.mubr.bf16.gmra.mrb[0].mxu0 %v836
      %v969 = vpop.f32.mrb[0].mxu0
      %v970 = vadd.f32 %v913, %v969
      %v971 = vpop.f32.mrb[0].mxu0
      %v972 = vpop.f32.mrb[0].mxu0
      %v973 = vadd.f32 %v913, %v972
      %v974 = vpop.f32.mrb[0].mxu0
      %975 = vmatprep.mubr.bf16.mxu0 0
      %976 = vmatmul.mubr.bf16.gmra.mrb[0].mxu0 %v839
      %v977 = vpop.f32.mrb[0].mxu0
      %v978 = vadd.f32 %v913, %v977
      %v979 = vpop.f32.mrb[0].mxu0
      %v980 = vpop.f32.mrb[0].mxu0
      %v981 = vadd.f32 %v913, %v980
      %v982 = vpop.f32.mrb[0].mxu0
      %983 = vmatprep.mubr.bf16.mxu0 0
      %984 = vmatmul.mubr.bf16.gmra.mrb[0].mxu0 %v842
      %v985 = vpop.f32.mrb[0].mxu0
      %v986 = vadd.f32 %v913, %v985
      %v987 = vpop.f32.mrb[0].mxu0
      %v988 = vpop.f32.mrb[0].mxu0
      %v989 = vadd.f32 %v913, %v988
      %v990 = vpop.f32.mrb[0].mxu0
      %991 = vdwg.mxu0
      %v992 = vxor.u32 %v962, 2147483648
      %v993 = vxor.u32 %v965, 2147483648
      %v994 = vxor.u32 %v970, 2147483648
      %v995 = vxor.u32 %v973, 2147483648
      %v996 = vxor.u32 %v978, 2147483648
      %v997 = vxor.u32 %v981, 2147483648
      %v998 = vxor.u32 %v986, 2147483648
      %v999 = vxor.u32 %v989, 2147483648
      %v1000 = vmul.f32 %v992, 1.442695
      %v1001 = vpow.pop %v1000
      %v1002 = vmul.f32 %v993, 1.442695
      %v1003 = vpow.pop %v1002
      %v1004 = vmul.f32 %v994, 1.442695
      %v1005 = vpow.pop %v1004
      %v1006 = vmul.f32 %v995, 1.442695
      %v1007 = vpow.pop %v1006
      %v1008 = vmul.f32 %v996, 1.442695
      %v1009 = vpow.pop %v1008
      %v1010 = vmul.f32 %v997, 1.442695
      %v1011 = vpow.pop %v1010
      %v1012 = vmul.f32 %v998, 1.442695
      %v1013 = vpow.pop %v1012
      %v1014 = vmul.f32 %v999, 1.442695
      %v1015 = vpow.pop %v1014
      %v1016 = vadd.f32 %v1001, 1.0
      %v1017 = vadd.f32 %v1003, 1.0
      %v1018 = vadd.f32 %v1005, 1.0
      %v1019 = vadd.f32 %v1007, 1.0
      %v1020 = vadd.f32 %v1009, 1.0
      %v1021 = vadd.f32 %v1011, 1.0
      %v1022 = vadd.f32 %v1013, 1.0
      %v1023 = vadd.f32 %v1015, 1.0
      %v1024 = vrcp.pop %v1016
      %v1025 = vmul.f32 1.0, %v1024
      %v1026 = vrcp.pop %v1017
      %v1027 = vmul.f32 1.0, %v1026
      %v1028 = vrcp.pop %v1018
      %v1029 = vmul.f32 1.0, %v1028
      %v1030 = vrcp.pop %v1019
      %v1031 = vmul.f32 1.0, %v1030
      %v1032 = vrcp.pop %v1020
      %v1033 = vmul.f32 1.0, %v1032
      %v1034 = vrcp.pop %v1021
      %v1035 = vmul.f32 1.0, %v1034
      %v1036 = vrcp.pop %v1022
      %v1037 = vmul.f32 1.0, %v1036
      %v1038 = vrcp.pop %v1023
      %v1039 = vmul.f32 1.0, %v1038
      %1048 = vset.pattern.permute.xlu0 0
      %1049 = vperm.xlu0 %1048, %v1025
      %v1050 = vpop.permute.xlu0 %1049
      %1051 = vset.pattern.permute.xlu0 0
      %1052 = vperm.xlu0 %1051, %v1027
      %v1053 = vpop.permute.xlu0 %1052
      %1054 = vset.pattern.permute.xlu0 0
      %1055 = vperm.xlu0 %1054, %v1029
      %v1056 = vpop.permute.xlu0 %1055
      %1057 = vset.pattern.permute.xlu0 0
      %1058 = vperm.xlu0 %1057, %v1031
      %v1059 = vpop.permute.xlu0 %1058
      %1060 = vset.pattern.permute.xlu0 0
      %1061 = vperm.xlu0 %1060, %v1033
      %v1062 = vpop.permute.xlu0 %1061
      %1063 = vset.pattern.permute.xlu0 0
      %1064 = vperm.xlu0 %1063, %v1035
      %v1065 = vpop.permute.xlu0 %1064
      %1066 = vset.pattern.permute.xlu0 0
      %1067 = vperm.xlu0 %1066, %v1037
      %v1068 = vpop.permute.xlu0 %1067
      %1069 = vset.pattern.permute.xlu0 0
      %1070 = vperm.xlu0 %1069, %v1039
      %v1071 = vpop.permute.xlu0 %1070
      %v1072 = vlaneseq
      %v1073 = vand.u32 %v1072, 127
      %v1074 = vlaneseq
      %v1075 = vshrl.u32 %v1074, 7
      %v1076 = vsub.s32 %v1073, %v1075
      %v1077 = vrot.slane %v1050, %v1076
      %v1078 = vlaneseq
      %v1079 = vshrl.u32 %v1078, 7
      %v1080 = vsub.s32 %v1073, %v1079
      %v1081 = vrot.slane %v1053, %v1080
      %v1082 = vlaneseq
      %v1083 = vshrl.u32 %v1082, 7
      %v1084 = vsub.s32 %v1073, %v1083
      %v1085 = vrot.slane %v1056, %v1084
      %v1086 = vlaneseq
      %v1087 = vshrl.u32 %v1086, 7
      %v1088 = vsub.s32 %v1073, %v1087
      %v1089 = vrot.slane %v1059, %v1088
      %v1090 = vlaneseq
      %v1091 = vshrl.u32 %v1090, 7
      %v1092 = vsub.s32 %v1073, %v1091
      %v1093 = vrot.slane %v1062, %v1092
      %v1094 = vlaneseq
      %v1095 = vshrl.u32 %v1094, 7
      %v1096 = vsub.s32 %v1073, %v1095
      %v1097 = vrot.slane %v1065, %v1096
      %v1098 = vlaneseq
      %v1099 = vshrl.u32 %v1098, 7
      %v1100 = vsub.s32 %v1073, %v1099
      %v1101 = vrot.slane %v1068, %v1100
      %v1102 = vlaneseq
      %v1103 = vshrl.u32 %v1102, 7
      %v1104 = vsub.s32 %v1073, %v1103
      %v1105 = vrot.slane %v1071, %v1104
      %vm1106 = vcmask 1041409
      %v1107 = vsel %vm1106, %v1081, %v1077
      %vm1108 = vcmask 1042434
      %v1109 = vsel %vm1108, %v1085, %v1107
      %vm1110 = vcmask 1043459
      %v1111 = vsel %vm1110, %v1089, %v1109
      %vm1112 = vcmask 1044484
      %v1113 = vsel %vm1112, %v1093, %v1111
      %vm1114 = vcmask 1045509
      %v1115 = vsel %vm1114, %v1097, %v1113
      %vm1116 = vcmask 1046534
      %v1117 = vsel %vm1116, %v1101, %v1115
      %vm1118 = vcmask 1047559
      %v1119 = vsel %vm1118, %v1105, %v1117
      %vm1121 = vcmask 64512
      %v1122 = vsel %vm1121, %v1119, 0.0
      %1123 = vadd.xlane.f32.xlu0 %v1122
      %v1124 = vpop.xlane.xlu0 %1123
      %v1125 = vadd.f32 %v1124, 1e-10
      %v1126 = vrcp.pop %v1125
      %v1128 = vlaneseq
      %v1129 = vshrl.u32 %v1128, 7
      %v1130 = vsub.s32 0, %v1129
      %v1131 = vrot.slane %v1126, %v1130
      %v1132 = vlaneseq
      %v1133 = vshrl.u32 %v1132, 7
      %v1134 = vsub.s32 1, %v1133
      %v1135 = vrot.slane %v1126, %v1134
      %v1136 = vlaneseq
      %v1137 = vshrl.u32 %v1136, 7
      %v1138 = vsub.s32 2, %v1137
      %v1139 = vrot.slane %v1126, %v1138
      %v1140 = vlaneseq
      %v1141 = vshrl.u32 %v1140, 7
      %v1142 = vsub.s32 3, %v1141
      %v1143 = vrot.slane %v1126, %v1142
      %v1144 = vlaneseq
      %v1145 = vshrl.u32 %v1144, 7
      %v1146 = vsub.s32 4, %v1145
      %v1147 = vrot.slane %v1126, %v1146
      %v1148 = vlaneseq
      %v1149 = vshrl.u32 %v1148, 7
      %v1150 = vsub.s32 5, %v1149
      %v1151 = vrot.slane %v1126, %v1150
      %v1152 = vlaneseq
      %v1153 = vshrl.u32 %v1152, 7
      %v1154 = vsub.s32 6, %v1153
      %v1155 = vrot.slane %v1126, %v1154
      %v1156 = vlaneseq
      %v1157 = vshrl.u32 %v1156, 7
      %v1158 = vsub.s32 7, %v1157
      %v1159 = vrot.slane %v1126, %v1158
      %v1168 = vmul.f32 %v1025, %v1131
      %v1169 = vmul.f32 %v1027, %v1135
      %v1170 = vmul.f32 %v1029, %v1139
      %v1171 = vmul.f32 %v1031, %v1143
      %v1172 = vmul.f32 %v1033, %v1147
      %v1173 = vmul.f32 %v1035, %v1151
      %v1174 = vmul.f32 %v1037, %v1155
      %v1175 = vmul.f32 %v1039, %v1159
      %1184 = vset.pattern.permute.xlu0 0
      %1185 = vperm.xlu0 %1184, %v1168
      %v1186 = vpop.permute.xlu0 %1185
      %1187 = vset.pattern.permute.xlu0 0
      %1188 = vperm.xlu0 %1187, %v1169
      %v1189 = vpop.permute.xlu0 %1188
      %1190 = vset.pattern.permute.xlu0 0
      %1191 = vperm.xlu0 %1190, %v1170
      %v1192 = vpop.permute.xlu0 %1191
      %1193 = vset.pattern.permute.xlu0 0
      %1194 = vperm.xlu0 %1193, %v1171
      %v1195 = vpop.permute.xlu0 %1194
      %1196 = vset.pattern.permute.xlu0 0
      %1197 = vperm.xlu0 %1196, %v1172
      %v1198 = vpop.permute.xlu0 %1197
      %1199 = vset.pattern.permute.xlu0 0
      %1200 = vperm.xlu0 %1199, %v1173
      %v1201 = vpop.permute.xlu0 %1200
      %1202 = vset.pattern.permute.xlu0 0
      %1203 = vperm.xlu0 %1202, %v1174
      %v1204 = vpop.permute.xlu0 %1203
      %1205 = vset.pattern.permute.xlu0 0
      %1206 = vperm.xlu0 %1205, %v1175
      %v1207 = vpop.permute.xlu0 %1206
      %v1208 = vlaneseq
      %v1209 = vshrl.u32 %v1208, 7
      %v1210 = vsub.s32 %v1073, %v1209
      %v1211 = vrot.slane %v1186, %v1210
      %v1212 = vlaneseq
      %v1213 = vshrl.u32 %v1212, 7
      %v1214 = vsub.s32 %v1073, %v1213
      %v1215 = vrot.slane %v1189, %v1214
      %v1216 = vlaneseq
      %v1217 = vshrl.u32 %v1216, 7
      %v1218 = vsub.s32 %v1073, %v1217
      %v1219 = vrot.slane %v1192, %v1218
      %v1220 = vlaneseq
      %v1221 = vshrl.u32 %v1220, 7
      %v1222 = vsub.s32 %v1073, %v1221
      %v1223 = vrot.slane %v1195, %v1222
      %v1224 = vlaneseq
      %v1225 = vshrl.u32 %v1224, 7
      %v1226 = vsub.s32 %v1073, %v1225
      %v1227 = vrot.slane %v1198, %v1226
      %v1228 = vlaneseq
      %v1229 = vshrl.u32 %v1228, 7
      %v1230 = vsub.s32 %v1073, %v1229
      %v1231 = vrot.slane %v1201, %v1230
      %v1232 = vlaneseq
      %v1233 = vshrl.u32 %v1232, 7
      %v1234 = vsub.s32 %v1073, %v1233
      %v1235 = vrot.slane %v1204, %v1234
      %v1236 = vlaneseq
      %v1237 = vshrl.u32 %v1236, 7
      %v1238 = vsub.s32 %v1073, %v1237
      %v1239 = vrot.slane %v1207, %v1238
      %v1240 = vsel %vm1106, %v1215, %v1211
      %v1241 = vsel %vm1108, %v1219, %v1240
      %v1242 = vsel %vm1110, %v1223, %v1241
      %v1243 = vsel %vm1112, %v1227, %v1242
      %v1244 = vsel %vm1114, %v1231, %v1243
      %v1245 = vsel %vm1116, %v1235, %v1244
      %v1246 = vsel %vm1118, %v1239, %v1245
      %v1247 = vsel %vm1121, %v1246, 0
      %1249 = vmatprep.subr.mxu0 0.0
      %1250 = vmatpush1.msra.mxu0 %v693
      %1251 = vmatprep.subr.mxu0 0.0
      %1252 = vmatpush1.msra.mxu0 0.0
      %1253 = vmatprep.subr.mxu0 0.0
      %1254 = vmatpush1.msra.mxu0 0.0
      %1255 = vmatprep.subr.mxu0 0.0
      %1256 = vmatpush1.msra.mxu0 0.0
      %1257 = vmatprep.subr.mxu0 0.0
      %1258 = vmatpush1.msra.mxu0 0.0
      %1259 = vmatprep.subr.mxu0 0.0
      %1260 = vmatpush1.msra.mxu0 0.0
      %1261 = vmatprep.subr.mxu0 0.0
      %1262 = vmatpush1.msra.mxu0 0.0
      %1263 = vmatprep.subr.mxu0 0.0
      %1264 = vmatpush1.msra.mxu0 0.0
      %1265 = vmatprep.subr.mxu0 0.0
      %1266 = vmatpush1.msra.mxu0 0.0
      %1267 = vmatprep.subr.mxu0 0.0
      %1268 = vmatpush1.msra.mxu0 0.0
      %1269 = vmatprep.subr.mxu0 0.0
      %1270 = vmatpush1.msra.mxu0 0.0
      %1271 = vmatprep.subr.mxu0 0.0
      %1272 = vmatpush1.msra.mxu0 0.0
      %1273 = vmatprep.subr.mxu0 0.0
      %1274 = vmatpush1.msra.mxu0 0.0
      %1275 = vmatprep.subr.mxu0 0.0
      %1276 = vmatpush1.msra.mxu0 0.0
      %1277 = vmatprep.subr.mxu0 0.0
      %1278 = vmatpush1.msra.mxu0 0.0
      %1279 = vmatprep.subr.mxu0 0.0
      %1280 = vmatpush1.msra.mxu0 0.0
      %1281 = vmatprep.subr.mxu0 0.0
      %1282 = vmatpush1.msra.mxu0 0.0
      %1283 = vmatprep.subr.mxu0 0.0
      %1284 = vmatpush1.msra.mxu0 0.0
      %1285 = vmatprep.subr.mxu0 0.0
      %1286 = vmatpush1.msra.mxu0 0.0
      %1287 = vmatprep.subr.mxu0 0.0
      %1288 = vmatpush1.msra.mxu0 0.0
      %1289 = vmatprep.subr.mxu0 0.0
      %1290 = vmatpush1.msra.mxu0 0.0
      %1291 = vmatprep.subr.mxu0 0.0
      %1292 = vmatpush1.msra.mxu0 0.0
      %1293 = vmatprep.subr.mxu0 0.0
      %1294 = vmatpush1.msra.mxu0 0.0
      %1295 = vmatprep.subr.mxu0 0.0
      %1296 = vmatpush1.msra.mxu0 0.0
      %1297 = vmatprep.subr.mxu0 0.0
      %1298 = vmatpush1.msra.mxu0 0.0
      %1299 = vmatprep.subr.mxu0 0.0
      %1300 = vmatpush1.msra.mxu0 0.0
      %1301 = vmatprep.subr.mxu0 0.0
      %1302 = vmatpush1.msra.mxu0 0.0
      %1303 = vmatprep.subr.mxu0 0.0
      %1304 = vmatpush1.msra.mxu0 0.0
      %1305 = vmatprep.subr.mxu0 0.0
      %1306 = vmatpush1.msra.mxu0 0.0
      %1307 = vmatprep.subr.mxu0 0.0
      %1308 = vmatpush1.msra.mxu0 0.0
      %1309 = vmatprep.subr.mxu0 0.0
      %1310 = vmatpush1.msra.mxu0 0.0
      %1311 = vmatprep.subr.mxu0 0.0
      %1312 = vmatpush1.msra.mxu0 0.0
      %1313 = vmatprep.mubr.f32.mxu0 0.0
      %1314 = vmatmul.mubr.f32.gmra.mrb[0].mxu0 %v1247
      %v1315 = vpop.f32.mrb[0].mxu0
      %v1316 = vadd.f32 0.0, %v1315
      %v1317 = vpop.f32.mrb[0].mxu0
      %1318 = vdwg.mxu0
      %v1319 = vadd.f32 %v635, %v1316
      %v1320 = vmax.f32 %v1319, 0.0
      %v1321 = vadd.f32 %v518, %v1320
      %v1323 = vcombine.high %v751, %v751
      %v1325 = vunpack.c.l.s4 1966171168
      %v1326 = vunpack.c.0.s8 %v1325
      %v1327 = vlaneseq
      %v1328 = vshrl.u32 %v1327, 7
      %v1329 = vsub.s32 %v1326, %v1328
      %v1330 = vrot.slane %v751, %v1329
      %v1332 = vunpack.c.l.s4 1966171168
      %v1333 = vunpack.c.0.s8 %v1332
      %v1334 = vlaneseq
      %v1335 = vshrl.u32 %v1334, 7
      %v1336 = vsub.s32 %v1333, %v1335
      %v1337 = vrot.slane %v1323, %v1336
      %v1338 = vcombine.high %v1330, %v1330
      %v1339 = vcombine.high %v1337, %v1337
      %v1341 = vunpack.c.l.s4 1966171168
      %v1342 = vunpack.c.0.s8 %v1341
      %v1343 = vlaneseq
      %v1344 = vshrl.u32 %v1343, 7
      %v1345 = vsub.s32 %v1342, %v1344
      %v1346 = vrot.slane %v1330, %v1345
      %v1348 = vunpack.c.l.s4 1966171168
      %v1349 = vunpack.c.0.s8 %v1348
      %v1350 = vlaneseq
      %v1351 = vshrl.u32 %v1350, 7
      %v1352 = vsub.s32 %v1349, %v1351
      %v1353 = vrot.slane %v1337, %v1352
      %v1355 = vunpack.c.l.s4 1966171168
      %v1356 = vunpack.c.0.s8 %v1355
      %v1357 = vlaneseq
      %v1358 = vshrl.u32 %v1357, 7
      %v1359 = vsub.s32 %v1356, %v1358
      %v1360 = vrot.slane %v1338, %v1359
      %v1362 = vunpack.c.l.s4 1966171168
      %v1363 = vunpack.c.0.s8 %v1362
      %v1364 = vlaneseq
      %v1365 = vshrl.u32 %v1364, 7
      %v1366 = vsub.s32 %v1363, %v1365
      %v1367 = vrot.slane %v1339, %v1366
      %v1368 = vcombine.high %v1346, %v1346
      %v1369 = vcombine.high %v1353, %v1353
      %v1370 = vcombine.high %v1360, %v1360
      %v1371 = vcombine.high %v1367, %v1367
      %v1372 = vlaneseq
      %v1373 = vshrl.u32 %v1372, 7
      %v1374 = vsub.s32 0, %v1373
      %v1375 = vrot.slane %v1346, %v1374
      %v1376 = vlaneseq
      %v1377 = vshrl.u32 %v1376, 7
      %v1378 = vsub.s32 0, %v1377
      %v1379 = vrot.slane %v1360, %v1378
      %v1380 = vlaneseq
      %v1381 = vshrl.u32 %v1380, 7
      %v1382 = vsub.s32 0, %v1381
      %v1383 = vrot.slane %v1368, %v1382
      %v1384 = vlaneseq
      %v1385 = vshrl.u32 %v1384, 7
      %v1386 = vsub.s32 0, %v1385
      %v1387 = vrot.slane %v1370, %v1386
      %v1388 = vlaneseq
      %v1389 = vshrl.u32 %v1388, 7
      %v1390 = vsub.s32 0, %v1389
      %v1391 = vrot.slane %v1353, %v1390
      %v1392 = vlaneseq
      %v1393 = vshrl.u32 %v1392, 7
      %v1394 = vsub.s32 0, %v1393
      %v1395 = vrot.slane %v1367, %v1394
      %v1396 = vlaneseq
      %v1397 = vshrl.u32 %v1396, 7
      %v1398 = vsub.s32 0, %v1397
      %v1399 = vrot.slane %v1369, %v1398
      %v1400 = vlaneseq
      %v1401 = vshrl.u32 %v1400, 7
      %v1402 = vsub.s32 0, %v1401
      %v1403 = vrot.slane %v1371, %v1402
      %v1412 = vadd.f32 %v1375, %v809
      %v1413 = vadd.f32 %v1379, %v809
      %v1414 = vadd.f32 %v1383, %v809
      %v1415 = vadd.f32 %v1387, %v809
      %v1416 = vadd.f32 %v1391, %v809
      %v1417 = vadd.f32 %v1395, %v809
      %v1418 = vadd.f32 %v1399, %v809
      %v1419 = vadd.f32 %v1403, %v809
      %v1420 = vadd.f32 %v879, %v1412
      %v1421 = vadd.f32 %v882, %v1413
      %v1422 = vadd.f32 %v887, %v1414
      %v1423 = vadd.f32 %v890, %v1415
      %v1424 = vadd.f32 %v895, %v1416
      %v1425 = vadd.f32 %v898, %v1417
      %v1426 = vadd.f32 %v903, %v1418
      %v1427 = vadd.f32 %v906, %v1419
      %v1428 = vmax.f32 %v1420, 0.0
      %v1429 = vmax.f32 %v1421, 0.0
      %v1430 = vmax.f32 %v1422, 0.0
      %v1431 = vmax.f32 %v1423, 0.0
      %v1432 = vmax.f32 %v1424, 0.0
      %v1433 = vmax.f32 %v1425, 0.0
      %v1434 = vmax.f32 %v1426, 0.0
      %v1435 = vmax.f32 %v1427, 0.0
      %v1436 = vadd.f32 %v527, %v1428
      %v1437 = vadd.f32 %v528, %v1429
      %v1438 = vadd.f32 %v529, %v1430
      %v1439 = vadd.f32 %v530, %v1431
      %v1440 = vadd.f32 %v531, %v1432
      %v1441 = vadd.f32 %v532, %v1433
      %v1442 = vadd.f32 %v533, %v1434
      %v1443 = vadd.f32 %v534, %v1435
      %s1444 = scalar_lea.vmem %s3, 80
      %v1445 = vld [vmem:[%s1444] sm:$0xf]
      %v1446 = vld [vmem:[%s1444 + $0x4] sm:$0xf]
      %v1447 = vld [vmem:[%s1444 + $0x8] sm:$0xf]
      %v1448 = vld [vmem:[%s1444 + $0xc] sm:$0xf]
      %s1449 = scalar_lea.vmem %s3, 96
      %v1450 = vld [vmem:[%s1449] sm:$0xf]
      %v1451 = vld [vmem:[%s1449 + $0x4] sm:$0xf]
      %v1452 = vld [vmem:[%s1449 + $0x8] sm:$0xf]
      %v1453 = vld [vmem:[%s1449 + $0xc] sm:$0xf]
      %s1454 = scalar_lea.vmem %s3, 112
      %v1455 = vld [vmem:[%s1454] sm:$0xf]
      %v1456 = vld [vmem:[%s1454 + $0x4] sm:$0xf]
      %v1457 = vld [vmem:[%s1454 + $0x8] sm:$0xf]
      %v1458 = vld [vmem:[%s1454 + $0xc] sm:$0xf]
      %s1459 = scalar_lea.vmem %s3, 128
      %v1460 = vld [vmem:[%s1459] sm:$0xf]
      %v1461 = vld [vmem:[%s1459 + $0x4] sm:$0xf]
      %v1462 = vld [vmem:[%s1459 + $0x8] sm:$0xf]
      %v1463 = vld [vmem:[%s1459 + $0xc] sm:$0xf]
      %s1464 = scalar_lea.vmem %s3, 144
      %v1465 = vld [vmem:[%s1464] sm:$0xf]
      %v1466 = vld [vmem:[%s1464 + $0x4] sm:$0xf]
      %v1467 = vld [vmem:[%s1464 + $0x8] sm:$0xf]
      %v1468 = vld [vmem:[%s1464 + $0xc] sm:$0xf]
      %s1469 = scalar_lea.vmem %s4, 5
      %v1470 = vld [vmem:[%s1469] sm:$0x1]
      %s1471 = scalar_lea.vmem %s4, 6
      %v1472 = vld [vmem:[%s1471] sm:$0x1]
      %s1473 = scalar_lea.vmem %s4, 7
      %v1474 = vld [vmem:[%s1473] sm:$0x1]
      %s1475 = scalar_lea.vmem %s4, 8
      %v1476 = vld [vmem:[%s1475] sm:$0x1]
      %s1477 = scalar_lea.vmem %s4, 9
      %v1478 = vld [vmem:[%s1477] sm:$0x1]
      %s1479 = scalar_lea.vmem %s5, 16
      %v1480 = vld [vmem:[%s1479] sm:$0xf]
      %v1481 = vld [vmem:[%s1479 + $0x4] sm:$0xf]
      %v1482 = vld [vmem:[%s1479 + $0x8] sm:$0xf]
      %v1483 = vld [vmem:[%s1479 + $0xc] sm:$0xf]
      %s1484 = scalar_lea.vmem %s6, 1
      %v1485 = vld [vmem:[%s1484] sm:$0x1]
      %v1486 = vpack.c.bf16 %v1321, %v1321
      %v1487 = vpack.c.bf16 %v1437, %v1436
      %v1488 = vpack.c.bf16 %v1439, %v1438
      %v1489 = vpack.c.bf16 %v1441, %v1440
      %v1490 = vpack.c.bf16 %v1443, %v1442
      %v1492 = vlaneseq
      %v1493 = vshrl.u32 %v1492, 7
      %v1494 = vsub.s32 0, %v1493
      %v1495 = vrot.slane %v1470, %v1494
      %v1501 = vunpack.c.l.b16 %v1445
      %v1502 = vunpack.c.l.b16 %v1446
      %v1503 = vunpack.c.l.b16 %v1447
      %v1504 = vunpack.c.l.b16 %v1448
      %v1505 = vpack.c.b16 %v1502, %v1501
      %v1506 = vpack.c.b16 %v1504, %v1503
      %v1510 = vsel %vm596, %v1486, 0
      %1512 = vmatprep.subr.bf16.mxu0 0
      %1513 = vmatpush1.bf16.msra.mxu0 %v1505
      %1514 = vmatprep.subr.bf16.mxu0 0
      %1515 = vmatpush1.bf16.msra.mxu0 %v1506
      %1516 = vmatprep.subr.bf16.mxu0 0
      %1517 = vmatpush1.bf16.msra.mxu0 0
      %1518 = vmatprep.subr.bf16.mxu0 0
      %1519 = vmatpush1.bf16.msra.mxu0 0
      %1520 = vmatprep.subr.bf16.mxu0 0
      %1521 = vmatpush1.bf16.msra.mxu0 0
      %1522 = vmatprep.subr.bf16.mxu0 0
      %1523 = vmatpush1.bf16.msra.mxu0 0
      %1524 = vmatprep.subr.bf16.mxu0 0
      %1525 = vmatpush1.bf16.msra.mxu0 0
      %1526 = vmatprep.subr.bf16.mxu0 0
      %1527 = vmatpush1.bf16.msra.mxu0 0
      %1528 = vmatprep.subr.bf16.mxu0 0
      %1529 = vmatpush1.bf16.msra.mxu0 0
      %1530 = vmatprep.subr.bf16.mxu0 0
      %1531 = vmatpush1.bf16.msra.mxu0 0
      %1532 = vmatprep.subr.bf16.mxu0 0
      %1533 = vmatpush1.bf16.msra.mxu0 0
      %1534 = vmatprep.subr.bf16.mxu0 0
      %1535 = vmatpush1.bf16.msra.mxu0 0
      %1536 = vmatprep.subr.bf16.mxu0 0
      %1537 = vmatpush1.bf16.msra.mxu0 0
      %1538 = vmatprep.subr.bf16.mxu0 0
      %1539 = vmatpush1.bf16.msra.mxu0 0
      %1540 = vmatprep.subr.bf16.mxu0 0
      %1541 = vmatpush1.bf16.msra.mxu0 0
      %1542 = vmatprep.subr.bf16.mxu0 0
      %1543 = vmatpush1.bf16.msra.mxu0 0
      %1544 = vmatprep.mubr.bf16.mxu0 0
      %1545 = vmatmul.mubr.bf16.gmra.mrb[0].mxu0 %v1510
      %v1546 = vpop.f32.mrb[0].mxu0
      %v1547 = vadd.f32 %v1495, %v1546
      %v1548 = vpop.f32.mrb[0].mxu0
      %v1549 = vpop.f32.mrb[0].mxu0
      %v1550 = vpop.f32.mrb[0].mxu0
      %1551 = vdwg.mxu0
      %v1553 = vlaneseq
      %v1554 = vshrl.u32 %v1553, 7
      %v1555 = vsub.s32 0, %v1554
      %v1556 = vrot.slane %v1472, %v1555
      %v1562 = vunpack.c.l.b16 %v1450
      %v1563 = vunpack.c.l.b16 %v1451
      %v1564 = vunpack.c.l.b16 %v1452
      %v1565 = vunpack.c.l.b16 %v1453
      %v1566 = vpack.c.b16 %v1563, %v1562
      %v1567 = vpack.c.b16 %v1565, %v1564
      %1570 = vmatprep.subr.bf16.mxu0 0
      %1571 = vmatpush1.bf16.msra.mxu0 %v1566
      %1572 = vmatprep.subr.bf16.mxu0 0
      %1573 = vmatpush1.bf16.msra.mxu0 %v1567
      %1574 = vmatprep.subr.bf16.mxu0 0
      %1575 = vmatpush1.bf16.msra.mxu0 0
      %1576 = vmatprep.subr.bf16.mxu0 0
      %1577 = vmatpush1.bf16.msra.mxu0 0
      %1578 = vmatprep.subr.bf16.mxu0 0
      %1579 = vmatpush1.bf16.msra.mxu0 0
      %1580 = vmatprep.subr.bf16.mxu0 0
      %1581 = vmatpush1.bf16.msra.mxu0 0
      %1582 = vmatprep.subr.bf16.mxu0 0
      %1583 = vmatpush1.bf16.msra.mxu0 0
      %1584 = vmatprep.subr.bf16.mxu0 0
      %1585 = vmatpush1.bf16.msra.mxu0 0
      %1586 = vmatprep.subr.bf16.mxu0 0
      %1587 = vmatpush1.bf16.msra.mxu0 0
      %1588 = vmatprep.subr.bf16.mxu0 0
      %1589 = vmatpush1.bf16.msra.mxu0 0
      %1590 = vmatprep.subr.bf16.mxu0 0
      %1591 = vmatpush1.bf16.msra.mxu0 0
      %1592 = vmatprep.subr.bf16.mxu0 0
      %1593 = vmatpush1.bf16.msra.mxu0 0
      %1594 = vmatprep.subr.bf16.mxu0 0
      %1595 = vmatpush1.bf16.msra.mxu0 0
      %1596 = vmatprep.subr.bf16.mxu0 0
      %1597 = vmatpush1.bf16.msra.mxu0 0
      %1598 = vmatprep.subr.bf16.mxu0 0
      %1599 = vmatpush1.bf16.msra.mxu0 0
      %1600 = vmatprep.subr.bf16.mxu0 0
      %1601 = vmatpush1.bf16.msra.mxu0 0
      %1602 = vmatprep.mubr.bf16.mxu0 0
      %1603 = vmatmul.mubr.bf16.gmra.mrb[0].mxu0 %v1510
      %v1604 = vpop.f32.mrb[0].mxu0
      %v1605 = vadd.f32 %v1556, %v1604
      %v1606 = vpop.f32.mrb[0].mxu0
      %v1607 = vpop.f32.mrb[0].mxu0
      %v1608 = vpop.f32.mrb[0].mxu0
      %1609 = vdwg.mxu0
      %v1611 = vlaneseq
      %v1612 = vshrl.u32 %v1611, 7
      %v1613 = vsub.s32 0, %v1612
      %v1614 = vrot.slane %v1476, %v1613
      %v1620 = vunpack.c.l.b16 %v1460
      %v1621 = vunpack.c.l.b16 %v1461
      %v1622 = vunpack.c.l.b16 %v1462
      %v1623 = vunpack.c.l.b16 %v1463
      %v1624 = vpack.c.b16 %v1621, %v1620
      %v1625 = vpack.c.b16 %v1623, %v1622
      %1628 = vmatprep.subr.bf16.mxu0 0
      %1629 = vmatpush1.bf16.msra.mxu0 %v1624
      %1630 = vmatprep.subr.bf16.mxu0 0
      %1631 = vmatpush1.bf16.msra.mxu0 %v1625
      %1632 = vmatprep.subr.bf16.mxu0 0
      %1633 = vmatpush1.bf16.msra.mxu0 0
      %1634 = vmatprep.subr.bf16.mxu0 0
      %1635 = vmatpush1.bf16.msra.mxu0 0
      %1636 = vmatprep.subr.bf16.mxu0 0
      %1637 = vmatpush1.bf16.msra.mxu0 0
      %1638 = vmatprep.subr.bf16.mxu0 0
      %1639 = vmatpush1.bf16.msra.mxu0 0
      %1640 = vmatprep.subr.bf16.mxu0 0
      %1641 = vmatpush1.bf16.msra.mxu0 0
      %1642 = vmatprep.subr.bf16.mxu0 0
      %1643 = vmatpush1.bf16.msra.mxu0 0
      %1644 = vmatprep.subr.bf16.mxu0 0
      %1645 = vmatpush1.bf16.msra.mxu0 0
      %1646 = vmatprep.subr.bf16.mxu0 0
      %1647 = vmatpush1.bf16.msra.mxu0 0
      %1648 = vmatprep.subr.bf16.mxu0 0
      %1649 = vmatpush1.bf16.msra.mxu0 0
      %1650 = vmatprep.subr.bf16.mxu0 0
      %1651 = vmatpush1.bf16.msra.mxu0 0
      %1652 = vmatprep.subr.bf16.mxu0 0
      %1653 = vmatpush1.bf16.msra.mxu0 0
      %1654 = vmatprep.subr.bf16.mxu0 0
      %1655 = vmatpush1.bf16.msra.mxu0 0
      %1656 = vmatprep.subr.bf16.mxu0 0
      %1657 = vmatpush1.bf16.msra.mxu0 0
      %1658 = vmatprep.subr.bf16.mxu0 0
      %1659 = vmatpush1.bf16.msra.mxu0 0
      %1660 = vmatprep.mubr.bf16.mxu0 0
      %1661 = vmatmul.mubr.bf16.gmra.mrb[0].mxu0 %v1510
      %v1662 = vpop.f32.mrb[0].mxu0
      %v1663 = vadd.f32 %v1614, %v1662
      %v1664 = vpop.f32.mrb[0].mxu0
      %v1665 = vpop.f32.mrb[0].mxu0
      %v1666 = vpop.f32.mrb[0].mxu0
      %1667 = vdwg.mxu0
      %v1669 = vlaneseq
      %v1670 = vshrl.u32 %v1669, 7
      %v1671 = vsub.s32 0, %v1670
      %v1672 = vrot.slane %v1478, %v1671
      %v1678 = vunpack.c.l.b16 %v1465
      %v1679 = vunpack.c.l.b16 %v1466
      %v1680 = vunpack.c.l.b16 %v1467
      %v1681 = vunpack.c.l.b16 %v1468
      %v1682 = vpack.c.b16 %v1679, %v1678
      %v1683 = vpack.c.b16 %v1681, %v1680
      %1686 = vmatprep.subr.bf16.mxu0 0
      %1687 = vmatpush1.bf16.msra.mxu0 %v1682
      %1688 = vmatprep.subr.bf16.mxu0 0
      %1689 = vmatpush1.bf16.msra.mxu0 %v1683
      %1690 = vmatprep.subr.bf16.mxu0 0
      %1691 = vmatpush1.bf16.msra.mxu0 0
      %1692 = vmatprep.subr.bf16.mxu0 0
      %1693 = vmatpush1.bf16.msra.mxu0 0
      %1694 = vmatprep.subr.bf16.mxu0 0
      %1695 = vmatpush1.bf16.msra.mxu0 0
      %1696 = vmatprep.subr.bf16.mxu0 0
      %1697 = vmatpush1.bf16.msra.mxu0 0
      %1698 = vmatprep.subr.bf16.mxu0 0
      %1699 = vmatpush1.bf16.msra.mxu0 0
      %1700 = vmatprep.subr.bf16.mxu0 0
      %1701 = vmatpush1.bf16.msra.mxu0 0
      %1702 = vmatprep.subr.bf16.mxu0 0
      %1703 = vmatpush1.bf16.msra.mxu0 0
      %1704 = vmatprep.subr.bf16.mxu0 0
      %1705 = vmatpush1.bf16.msra.mxu0 0
      %1706 = vmatprep.subr.bf16.mxu0 0
      %1707 = vmatpush1.bf16.msra.mxu0 0
      %1708 = vmatprep.subr.bf16.mxu0 0
      %1709 = vmatpush1.bf16.msra.mxu0 0
      %1710 = vmatprep.subr.bf16.mxu0 0
      %1711 = vmatpush1.bf16.msra.mxu0 0
      %1712 = vmatprep.subr.bf16.mxu0 0
      %1713 = vmatpush1.bf16.msra.mxu0 0
      %1714 = vmatprep.subr.bf16.mxu0 0
      %1715 = vmatpush1.bf16.msra.mxu0 0
      %1716 = vmatprep.subr.bf16.mxu0 0
      %1717 = vmatpush1.bf16.msra.mxu0 0
      %1718 = vmatprep.mubr.bf16.mxu0 0
      %1719 = vmatmul.mubr.bf16.gmra.mrb[0].mxu0 %v1510
      %v1720 = vpop.f32.mrb[0].mxu0
      %v1721 = vadd.f32 %v1672, %v1720
      %v1722 = vpop.f32.mrb[0].mxu0
      %v1723 = vpop.f32.mrb[0].mxu0
      %v1724 = vpop.f32.mrb[0].mxu0
      %1725 = vdwg.mxu0
      %v1727 = vlaneseq
      %v1728 = vshrl.u32 %v1727, 7
      %v1729 = vsub.s32 0, %v1728
      %v1730 = vrot.slane %v1474, %v1729
      %v1736 = vunpack.c.l.b16 %v1455
      %v1737 = vunpack.c.l.b16 %v1456
      %v1738 = vunpack.c.l.b16 %v1457
      %v1739 = vunpack.c.l.b16 %v1458
      %v1740 = vpack.c.b16 %v1737, %v1736
      %v1741 = vpack.c.b16 %v1739, %v1738
      %v1745 = vsel %vm596, %v1487, 0
      %v1748 = vsel %vm596, %v1488, 0
      %v1751 = vsel %vm596, %v1489, 0
      %v1754 = vsel %vm596, %v1490, 0
      %1756 = vmatprep.subr.bf16.mxu0 0
      %1757 = vmatpush1.bf16.msra.mxu0 %v1740
      %1758 = vmatprep.subr.bf16.mxu0 0
      %1759 = vmatpush1.bf16.msra.mxu0 %v1741
      %1760 = vmatprep.subr.bf16.mxu0 0
      %1761 = vmatpush1.bf16.msra.mxu0 0
      %1762 = vmatprep.subr.bf16.mxu0 0
      %1763 = vmatpush1.bf16.msra.mxu0 0
      %1764 = vmatprep.subr.bf16.mxu0 0
      %1765 = vmatpush1.bf16.msra.mxu0 0
      %1766 = vmatprep.subr.bf16.mxu0 0
      %1767 = vmatpush1.bf16.msra.mxu0 0
      %1768 = vmatprep.subr.bf16.mxu0 0
      %1769 = vmatpush1.bf16.msra.mxu0 0
      %1770 = vmatprep.subr.bf16.mxu0 0
      %1771 = vmatpush1.bf16.msra.mxu0 0
      %1772 = vmatprep.subr.bf16.mxu0 0
      %1773 = vmatpush1.bf16.msra.mxu0 0
      %1774 = vmatprep.subr.bf16.mxu0 0
      %1775 = vmatpush1.bf16.msra.mxu0 0
      %1776 = vmatprep.subr.bf16.mxu0 0
      %1777 = vmatpush1.bf16.msra.mxu0 0
      %1778 = vmatprep.subr.bf16.mxu0 0
      %1779 = vmatpush1.bf16.msra.mxu0 0
      %1780 = vmatprep.subr.bf16.mxu0 0
      %1781 = vmatpush1.bf16.msra.mxu0 0
      %1782 = vmatprep.subr.bf16.mxu0 0
      %1783 = vmatpush1.bf16.msra.mxu0 0
      %1784 = vmatprep.subr.bf16.mxu0 0
      %1785 = vmatpush1.bf16.msra.mxu0 0
      %1786 = vmatprep.subr.bf16.mxu0 0
      %1787 = vmatpush1.bf16.msra.mxu0 0
      %1788 = vmatprep.mubr.bf16.mxu0 0
      %1789 = vmatmul.mubr.bf16.gmra.mrb[0].mxu0 %v1745
      %v1790 = vpop.f32.mrb[0].mxu0
      %v1791 = vadd.f32 %v1730, %v1790
      %v1792 = vpop.f32.mrb[0].mxu0
      %v1793 = vpop.f32.mrb[0].mxu0
      %v1794 = vadd.f32 %v1730, %v1793
      %v1795 = vpop.f32.mrb[0].mxu0
      %1796 = vmatprep.mubr.bf16.mxu0 0
      %1797 = vmatmul.mubr.bf16.gmra.mrb[0].mxu0 %v1748
      %v1798 = vpop.f32.mrb[0].mxu0
      %v1799 = vadd.f32 %v1730, %v1798
      %v1800 = vpop.f32.mrb[0].mxu0
      %v1801 = vpop.f32.mrb[0].mxu0
      %v1802 = vadd.f32 %v1730, %v1801
      %v1803 = vpop.f32.mrb[0].mxu0
      %1804 = vmatprep.mubr.bf16.mxu0 0
      %1805 = vmatmul.mubr.bf16.gmra.mrb[0].mxu0 %v1751
      %v1806 = vpop.f32.mrb[0].mxu0
      %v1807 = vadd.f32 %v1730, %v1806
      %v1808 = vpop.f32.mrb[0].mxu0
      %v1809 = vpop.f32.mrb[0].mxu0
      %v1810 = vadd.f32 %v1730, %v1809
      %v1811 = vpop.f32.mrb[0].mxu0
      %1812 = vmatprep.mubr.bf16.mxu0 0
      %1813 = vmatmul.mubr.bf16.gmra.mrb[0].mxu0 %v1754
      %v1814 = vpop.f32.mrb[0].mxu0
      %v1815 = vadd.f32 %v1730, %v1814
      %v1816 = vpop.f32.mrb[0].mxu0
      %v1817 = vpop.f32.mrb[0].mxu0
      %v1818 = vadd.f32 %v1730, %v1817
      %v1819 = vpop.f32.mrb[0].mxu0
      %1820 = vdwg.mxu0
      %v1822 = vlaneseq
      %v1823 = vshrl.u32 %v1822, 7
      %v1824 = vsub.s32 0, %v1823
      %v1825 = vrot.slane %v1485, %v1824
      %v1831 = vunpack.c.l.b16 %v1480
      %v1832 = vunpack.c.l.b16 %v1481
      %v1833 = vunpack.c.l.b16 %v1482
      %v1834 = vunpack.c.l.b16 %v1483
      %v1835 = vpack.c.b16 %v1832, %v1831
      %v1836 = vpack.c.b16 %v1834, %v1833
      %1839 = vmatprep.subr.bf16.mxu0 0
      %1840 = vmatpush1.bf16.msra.mxu0 %v1835
      %1841 = vmatprep.subr.bf16.mxu0 0
      %1842 = vmatpush1.bf16.msra.mxu0 %v1836
      %1843 = vmatprep.subr.bf16.mxu0 0
      %1844 = vmatpush1.bf16.msra.mxu0 0
      %1845 = vmatprep.subr.bf16.mxu0 0
      %1846 = vmatpush1.bf16.msra.mxu0 0
      %1847 = vmatprep.subr.bf16.mxu0 0
      %1848 = vmatpush1.bf16.msra.mxu0 0
      %1849 = vmatprep.subr.bf16.mxu0 0
      %1850 = vmatpush1.bf16.msra.mxu0 0
      %1851 = vmatprep.subr.bf16.mxu0 0
      %1852 = vmatpush1.bf16.msra.mxu0 0
      %1853 = vmatprep.subr.bf16.mxu0 0
      %1854 = vmatpush1.bf16.msra.mxu0 0
      %1855 = vmatprep.subr.bf16.mxu0 0
      %1856 = vmatpush1.bf16.msra.mxu0 0
      %1857 = vmatprep.subr.bf16.mxu0 0
      %1858 = vmatpush1.bf16.msra.mxu0 0
      %1859 = vmatprep.subr.bf16.mxu0 0
      %1860 = vmatpush1.bf16.msra.mxu0 0
      %1861 = vmatprep.subr.bf16.mxu0 0
      %1862 = vmatpush1.bf16.msra.mxu0 0
      %1863 = vmatprep.subr.bf16.mxu0 0
      %1864 = vmatpush1.bf16.msra.mxu0 0
      %1865 = vmatprep.subr.bf16.mxu0 0
      %1866 = vmatpush1.bf16.msra.mxu0 0
      %1867 = vmatprep.subr.bf16.mxu0 0
      %1868 = vmatpush1.bf16.msra.mxu0 0
      %1869 = vmatprep.subr.bf16.mxu0 0
      %1870 = vmatpush1.bf16.msra.mxu0 0
      %1871 = vmatprep.mubr.bf16.mxu0 0
      %1872 = vmatmul.mubr.bf16.gmra.mrb[0].mxu0 %v1745
      %v1873 = vpop.f32.mrb[0].mxu0
      %v1874 = vadd.f32 %v1825, %v1873
      %v1875 = vpop.f32.mrb[0].mxu0
      %v1876 = vpop.f32.mrb[0].mxu0
      %v1877 = vadd.f32 %v1825, %v1876
      %v1878 = vpop.f32.mrb[0].mxu0
      %1879 = vmatprep.mubr.bf16.mxu0 0
      %1880 = vmatmul.mubr.bf16.gmra.mrb[0].mxu0 %v1748
      %v1881 = vpop.f32.mrb[0].mxu0
      %v1882 = vadd.f32 %v1825, %v1881
      %v1883 = vpop.f32.mrb[0].mxu0
      %v1884 = vpop.f32.mrb[0].mxu0
      %v1885 = vadd.f32 %v1825, %v1884
      %v1886 = vpop.f32.mrb[0].mxu0
      %1887 = vmatprep.mubr.bf16.mxu0 0
      %1888 = vmatmul.mubr.bf16.gmra.mrb[0].mxu0 %v1751
      %v1889 = vpop.f32.mrb[0].mxu0
      %v1890 = vadd.f32 %v1825, %v1889
      %v1891 = vpop.f32.mrb[0].mxu0
      %v1892 = vpop.f32.mrb[0].mxu0
      %v1893 = vadd.f32 %v1825, %v1892
      %v1894 = vpop.f32.mrb[0].mxu0
      %1895 = vmatprep.mubr.bf16.mxu0 0
      %1896 = vmatmul.mubr.bf16.gmra.mrb[0].mxu0 %v1754
      %v1897 = vpop.f32.mrb[0].mxu0
      %v1898 = vadd.f32 %v1825, %v1897
      %v1899 = vpop.f32.mrb[0].mxu0
      %v1900 = vpop.f32.mrb[0].mxu0
      %v1901 = vadd.f32 %v1825, %v1900
      %v1902 = vpop.f32.mrb[0].mxu0
      %1903 = vdwg.mxu0
      %v1904 = vxor.u32 %v1874, 2147483648
      %v1905 = vxor.u32 %v1877, 2147483648
      %v1906 = vxor.u32 %v1882, 2147483648
      %v1907 = vxor.u32 %v1885, 2147483648
      %v1908 = vxor.u32 %v1890, 2147483648
      %v1909 = vxor.u32 %v1893, 2147483648
      %v1910 = vxor.u32 %v1898, 2147483648
      %v1911 = vxor.u32 %v1901, 2147483648
      %v1912 = vmul.f32 %v1904, 1.442695
      %v1913 = vpow.pop %v1912
      %v1914 = vmul.f32 %v1905, 1.442695
      %v1915 = vpow.pop %v1914
      %v1916 = vmul.f32 %v1906, 1.442695
      %v1917 = vpow.pop %v1916
      %v1918 = vmul.f32 %v1907, 1.442695
      %v1919 = vpow.pop %v1918
      %v1920 = vmul.f32 %v1908, 1.442695
      %v1921 = vpow.pop %v1920
      %v1922 = vmul.f32 %v1909, 1.442695
      %v1923 = vpow.pop %v1922
      %v1924 = vmul.f32 %v1910, 1.442695
      %v1925 = vpow.pop %v1924
      %v1926 = vmul.f32 %v1911, 1.442695
      %v1927 = vpow.pop %v1926
      %v1928 = vadd.f32 %v1913, 1.0
      %v1929 = vadd.f32 %v1915, 1.0
      %v1930 = vadd.f32 %v1917, 1.0
      %v1931 = vadd.f32 %v1919, 1.0
      %v1932 = vadd.f32 %v1921, 1.0
      %v1933 = vadd.f32 %v1923, 1.0
      %v1934 = vadd.f32 %v1925, 1.0
      %v1935 = vadd.f32 %v1927, 1.0
      %v1936 = vrcp.pop %v1928
      %v1937 = vmul.f32 1.0, %v1936
      %v1938 = vrcp.pop %v1929
      %v1939 = vmul.f32 1.0, %v1938
      %v1940 = vrcp.pop %v1930
      %v1941 = vmul.f32 1.0, %v1940
      %v1942 = vrcp.pop %v1931
      %v1943 = vmul.f32 1.0, %v1942
      %v1944 = vrcp.pop %v1932
      %v1945 = vmul.f32 1.0, %v1944
      %v1946 = vrcp.pop %v1933
      %v1947 = vmul.f32 1.0, %v1946
      %v1948 = vrcp.pop %v1934
      %v1949 = vmul.f32 1.0, %v1948
      %v1950 = vrcp.pop %v1935
      %v1951 = vmul.f32 1.0, %v1950
      %1960 = vset.pattern.permute.xlu0 0
      %1961 = vperm.xlu0 %1960, %v1937
      %v1962 = vpop.permute.xlu0 %1961
      %1963 = vset.pattern.permute.xlu0 0
      %1964 = vperm.xlu0 %1963, %v1939
      %v1965 = vpop.permute.xlu0 %1964
      %1966 = vset.pattern.permute.xlu0 0
      %1967 = vperm.xlu0 %1966, %v1941
      %v1968 = vpop.permute.xlu0 %1967
      %1969 = vset.pattern.permute.xlu0 0
      %1970 = vperm.xlu0 %1969, %v1943
      %v1971 = vpop.permute.xlu0 %1970
      %1972 = vset.pattern.permute.xlu0 0
      %1973 = vperm.xlu0 %1972, %v1945
      %v1974 = vpop.permute.xlu0 %1973
      %1975 = vset.pattern.permute.xlu0 0
      %1976 = vperm.xlu0 %1975, %v1947
      %v1977 = vpop.permute.xlu0 %1976
      %1978 = vset.pattern.permute.xlu0 0
      %1979 = vperm.xlu0 %1978, %v1949
      %v1980 = vpop.permute.xlu0 %1979
      %1981 = vset.pattern.permute.xlu0 0
      %1982 = vperm.xlu0 %1981, %v1951
      %v1983 = vpop.permute.xlu0 %1982
      %v1984 = vlaneseq
      %v1985 = vshrl.u32 %v1984, 7
      %v1986 = vsub.s32 %v1073, %v1985
      %v1987 = vrot.slane %v1962, %v1986
      %v1988 = vlaneseq
      %v1989 = vshrl.u32 %v1988, 7
      %v1990 = vsub.s32 %v1073, %v1989
      %v1991 = vrot.slane %v1965, %v1990
      %v1992 = vlaneseq
      %v1993 = vshrl.u32 %v1992, 7
      %v1994 = vsub.s32 %v1073, %v1993
      %v1995 = vrot.slane %v1968, %v1994
      %v1996 = vlaneseq
      %v1997 = vshrl.u32 %v1996, 7
      %v1998 = vsub.s32 %v1073, %v1997
      %v1999 = vrot.slane %v1971, %v1998
      %v2000 = vlaneseq
      %v2001 = vshrl.u32 %v2000, 7
      %v2002 = vsub.s32 %v1073, %v2001
      %v2003 = vrot.slane %v1974, %v2002
      %v2004 = vlaneseq
      %v2005 = vshrl.u32 %v2004, 7
      %v2006 = vsub.s32 %v1073, %v2005
      %v2007 = vrot.slane %v1977, %v2006
      %v2008 = vlaneseq
      %v2009 = vshrl.u32 %v2008, 7
      %v2010 = vsub.s32 %v1073, %v2009
      %v2011 = vrot.slane %v1980, %v2010
      %v2012 = vlaneseq
      %v2013 = vshrl.u32 %v2012, 7
      %v2014 = vsub.s32 %v1073, %v2013
      %v2015 = vrot.slane %v1983, %v2014
      %v2016 = vsel %vm1106, %v1991, %v1987
      %v2017 = vsel %vm1108, %v1995, %v2016
      %v2018 = vsel %vm1110, %v1999, %v2017
      %v2019 = vsel %vm1112, %v2003, %v2018
      %v2020 = vsel %vm1114, %v2007, %v2019
      %v2021 = vsel %vm1116, %v2011, %v2020
      %v2022 = vsel %vm1118, %v2015, %v2021
      %v2024 = vsel %vm1121, %v2022, 0.0
      %2025 = vadd.xlane.f32.xlu0 %v2024
      %v2026 = vpop.xlane.xlu0 %2025
      %v2027 = vadd.f32 %v2026, 1e-10
      %v2028 = vrcp.pop %v2027
      %v2030 = vlaneseq
      %v2031 = vshrl.u32 %v2030, 7
      %v2032 = vsub.s32 0, %v2031
      %v2033 = vrot.slane %v2028, %v2032
      %v2034 = vlaneseq
      %v2035 = vshrl.u32 %v2034, 7
      %v2036 = vsub.s32 1, %v2035
      %v2037 = vrot.slane %v2028, %v2036
      %v2038 = vlaneseq
      %v2039 = vshrl.u32 %v2038, 7
      %v2040 = vsub.s32 2, %v2039
      %v2041 = vrot.slane %v2028, %v2040
      %v2042 = vlaneseq
      %v2043 = vshrl.u32 %v2042, 7
      %v2044 = vsub.s32 3, %v2043
      %v2045 = vrot.slane %v2028, %v2044
      %v2046 = vlaneseq
      %v2047 = vshrl.u32 %v2046, 7
      %v2048 = vsub.s32 4, %v2047
      %v2049 = vrot.slane %v2028, %v2048
      %v2050 = vlaneseq
      %v2051 = vshrl.u32 %v2050, 7
      %v2052 = vsub.s32 5, %v2051
      %v2053 = vrot.slane %v2028, %v2052
      %v2054 = vlaneseq
      %v2055 = vshrl.u32 %v2054, 7
      %v2056 = vsub.s32 6, %v2055
      %v2057 = vrot.slane %v2028, %v2056
      %v2058 = vlaneseq
      %v2059 = vshrl.u32 %v2058, 7
      %v2060 = vsub.s32 7, %v2059
      %v2061 = vrot.slane %v2028, %v2060
      %v2070 = vmul.f32 %v1937, %v2033
      %v2071 = vmul.f32 %v1939, %v2037
      %v2072 = vmul.f32 %v1941, %v2041
      %v2073 = vmul.f32 %v1943, %v2045
      %v2074 = vmul.f32 %v1945, %v2049
      %v2075 = vmul.f32 %v1947, %v2053
      %v2076 = vmul.f32 %v1949, %v2057
      %v2077 = vmul.f32 %v1951, %v2061
      %2086 = vset.pattern.permute.xlu0 0
      %2087 = vperm.xlu0 %2086, %v2070
      %v2088 = vpop.permute.xlu0 %2087
      %2089 = vset.pattern.permute.xlu0 0
      %2090 = vperm.xlu0 %2089, %v2071
      %v2091 = vpop.permute.xlu0 %2090
      %2092 = vset.pattern.permute.xlu0 0
      %2093 = vperm.xlu0 %2092, %v2072
      %v2094 = vpop.permute.xlu0 %2093
      %2095 = vset.pattern.permute.xlu0 0
      %2096 = vperm.xlu0 %2095, %v2073
      %v2097 = vpop.permute.xlu0 %2096
      %2098 = vset.pattern.permute.xlu0 0
      %2099 = vperm.xlu0 %2098, %v2074
      %v2100 = vpop.permute.xlu0 %2099
      %2101 = vset.pattern.permute.xlu0 0
      %2102 = vperm.xlu0 %2101, %v2075
      %v2103 = vpop.permute.xlu0 %2102
      %2104 = vset.pattern.permute.xlu0 0
      %2105 = vperm.xlu0 %2104, %v2076
      %v2106 = vpop.permute.xlu0 %2105
      %2107 = vset.pattern.permute.xlu0 0
      %2108 = vperm.xlu0 %2107, %v2077
      %v2109 = vpop.permute.xlu0 %2108
      %v2110 = vlaneseq
      %v2111 = vshrl.u32 %v2110, 7
      %v2112 = vsub.s32 %v1073, %v2111
      %v2113 = vrot.slane %v2088, %v2112
      %v2114 = vlaneseq
      %v2115 = vshrl.u32 %v2114, 7
      %v2116 = vsub.s32 %v1073, %v2115
      %v2117 = vrot.slane %v2091, %v2116
      %v2118 = vlaneseq
      %v2119 = vshrl.u32 %v2118, 7
      %v2120 = vsub.s32 %v1073, %v2119
      %v2121 = vrot.slane %v2094, %v2120
      %v2122 = vlaneseq
      %v2123 = vshrl.u32 %v2122, 7
      %v2124 = vsub.s32 %v1073, %v2123
      %v2125 = vrot.slane %v2097, %v2124
      %v2126 = vlaneseq
      %v2127 = vshrl.u32 %v2126, 7
      %v2128 = vsub.s32 %v1073, %v2127
      %v2129 = vrot.slane %v2100, %v2128
      %v2130 = vlaneseq
      %v2131 = vshrl.u32 %v2130, 7
      %v2132 = vsub.s32 %v1073, %v2131
      %v2133 = vrot.slane %v2103, %v2132
      %v2134 = vlaneseq
      %v2135 = vshrl.u32 %v2134, 7
      %v2136 = vsub.s32 %v1073, %v2135
      %v2137 = vrot.slane %v2106, %v2136
      %v2138 = vlaneseq
      %v2139 = vshrl.u32 %v2138, 7
      %v2140 = vsub.s32 %v1073, %v2139
      %v2141 = vrot.slane %v2109, %v2140
      %v2142 = vsel %vm1106, %v2117, %v2113
      %v2143 = vsel %vm1108, %v2121, %v2142
      %v2144 = vsel %vm1110, %v2125, %v2143
      %v2145 = vsel %vm1112, %v2129, %v2144
      %v2146 = vsel %vm1114, %v2133, %v2145
      %v2147 = vsel %vm1116, %v2137, %v2146
      %v2148 = vsel %vm1118, %v2141, %v2147
      %v2149 = vsel %vm1121, %v2148, 0
      %2151 = vmatprep.subr.mxu0 0.0
      %2152 = vmatpush1.msra.mxu0 %v1605
      %2153 = vmatprep.subr.mxu0 0.0
      %2154 = vmatpush1.msra.mxu0 0.0
      %2155 = vmatprep.subr.mxu0 0.0
      %2156 = vmatpush1.msra.mxu0 0.0
      %2157 = vmatprep.subr.mxu0 0.0
      %2158 = vmatpush1.msra.mxu0 0.0
      %2159 = vmatprep.subr.mxu0 0.0
      %2160 = vmatpush1.msra.mxu0 0.0
      %2161 = vmatprep.subr.mxu0 0.0
      %2162 = vmatpush1.msra.mxu0 0.0
      %2163 = vmatprep.subr.mxu0 0.0
      %2164 = vmatpush1.msra.mxu0 0.0
      %2165 = vmatprep.subr.mxu0 0.0
      %2166 = vmatpush1.msra.mxu0 0.0
      %2167 = vmatprep.subr.mxu0 0.0
      %2168 = vmatpush1.msra.mxu0 0.0
      %2169 = vmatprep.subr.mxu0 0.0
      %2170 = vmatpush1.msra.mxu0 0.0
      %2171 = vmatprep.subr.mxu0 0.0
      %2172 = vmatpush1.msra.mxu0 0.0
      %2173 = vmatprep.subr.mxu0 0.0
      %2174 = vmatpush1.msra.mxu0 0.0
      %2175 = vmatprep.subr.mxu0 0.0
      %2176 = vmatpush1.msra.mxu0 0.0
      %2177 = vmatprep.subr.mxu0 0.0
      %2178 = vmatpush1.msra.mxu0 0.0
      %2179 = vmatprep.subr.mxu0 0.0
      %2180 = vmatpush1.msra.mxu0 0.0
      %2181 = vmatprep.subr.mxu0 0.0
      %2182 = vmatpush1.msra.mxu0 0.0
      %2183 = vmatprep.subr.mxu0 0.0
      %2184 = vmatpush1.msra.mxu0 0.0
      %2185 = vmatprep.subr.mxu0 0.0
      %2186 = vmatpush1.msra.mxu0 0.0
      %2187 = vmatprep.subr.mxu0 0.0
      %2188 = vmatpush1.msra.mxu0 0.0
      %2189 = vmatprep.subr.mxu0 0.0
      %2190 = vmatpush1.msra.mxu0 0.0
      %2191 = vmatprep.subr.mxu0 0.0
      %2192 = vmatpush1.msra.mxu0 0.0
      %2193 = vmatprep.subr.mxu0 0.0
      %2194 = vmatpush1.msra.mxu0 0.0
      %2195 = vmatprep.subr.mxu0 0.0
      %2196 = vmatpush1.msra.mxu0 0.0
      %2197 = vmatprep.subr.mxu0 0.0
      %2198 = vmatpush1.msra.mxu0 0.0
      %2199 = vmatprep.subr.mxu0 0.0
      %2200 = vmatpush1.msra.mxu0 0.0
      %2201 = vmatprep.subr.mxu0 0.0
      %2202 = vmatpush1.msra.mxu0 0.0
      %2203 = vmatprep.subr.mxu0 0.0
      %2204 = vmatpush1.msra.mxu0 0.0
      %2205 = vmatprep.subr.mxu0 0.0
      %2206 = vmatpush1.msra.mxu0 0.0
      %2207 = vmatprep.subr.mxu0 0.0
      %2208 = vmatpush1.msra.mxu0 0.0
      %2209 = vmatprep.subr.mxu0 0.0
      %2210 = vmatpush1.msra.mxu0 0.0
      %2211 = vmatprep.subr.mxu0 0.0
      %2212 = vmatpush1.msra.mxu0 0.0
      %2213 = vmatprep.subr.mxu0 0.0
      %2214 = vmatpush1.msra.mxu0 0.0
      %2215 = vmatprep.mubr.f32.mxu0 0.0
      %2216 = vmatmul.mubr.f32.gmra.mrb[0].mxu0 %v2149
      %v2217 = vpop.f32.mrb[0].mxu0
      %v2218 = vadd.f32 0.0, %v2217
      %v2219 = vpop.f32.mrb[0].mxu0
      %2220 = vdwg.mxu0
      %v2221 = vadd.f32 %v1547, %v2218
      %v2222 = vmax.f32 %v2221, 0.0
      %v2223 = vadd.f32 %v1321, %v2222
      %v2225 = vcombine.high %v1663, %v1663
      %v2227 = vunpack.c.l.s4 1966171168
      %v2228 = vunpack.c.0.s8 %v2227
      %v2229 = vlaneseq
      %v2230 = vshrl.u32 %v2229, 7
      %v2231 = vsub.s32 %v2228, %v2230
      %v2232 = vrot.slane %v1663, %v2231
      %v2234 = vunpack.c.l.s4 1966171168
      %v2235 = vunpack.c.0.s8 %v2234
      %v2236 = vlaneseq
      %v2237 = vshrl.u32 %v2236, 7
      %v2238 = vsub.s32 %v2235, %v2237
      %v2239 = vrot.slane %v2225, %v2238
      %v2240 = vcombine.high %v2232, %v2232
      %v2241 = vcombine.high %v2239, %v2239
      %v2243 = vunpack.c.l.s4 1966171168
      %v2244 = vunpack.c.0.s8 %v2243
      %v2245 = vlaneseq
      %v2246 = vshrl.u32 %v2245, 7
      %v2247 = vsub.s32 %v2244, %v2246
      %v2248 = vrot.slane %v2232, %v2247
      %v2250 = vunpack.c.l.s4 1966171168
      %v2251 = vunpack.c.0.s8 %v2250
      %v2252 = vlaneseq
      %v2253 = vshrl.u32 %v2252, 7
      %v2254 = vsub.s32 %v2251, %v2253
      %v2255 = vrot.slane %v2239, %v2254
      %v2257 = vunpack.c.l.s4 1966171168
      %v2258 = vunpack.c.0.s8 %v2257
      %v2259 = vlaneseq
      %v2260 = vshrl.u32 %v2259, 7
      %v2261 = vsub.s32 %v2258, %v2260
      %v2262 = vrot.slane %v2240, %v2261
      %v2264 = vunpack.c.l.s4 1966171168
      %v2265 = vunpack.c.0.s8 %v2264
      %v2266 = vlaneseq
      %v2267 = vshrl.u32 %v2266, 7
      %v2268 = vsub.s32 %v2265, %v2267
      %v2269 = vrot.slane %v2241, %v2268
      %v2270 = vcombine.high %v2248, %v2248
      %v2271 = vcombine.high %v2255, %v2255
      %v2272 = vcombine.high %v2262, %v2262
      %v2273 = vcombine.high %v2269, %v2269
      %v2274 = vlaneseq
      %v2275 = vshrl.u32 %v2274, 7
      %v2276 = vsub.s32 0, %v2275
      %v2277 = vrot.slane %v2248, %v2276
      %v2278 = vlaneseq
      %v2279 = vshrl.u32 %v2278, 7
      %v2280 = vsub.s32 0, %v2279
      %v2281 = vrot.slane %v2262, %v2280
      %v2282 = vlaneseq
      %v2283 = vshrl.u32 %v2282, 7
      %v2284 = vsub.s32 0, %v2283
      %v2285 = vrot.slane %v2270, %v2284
      %v2286 = vlaneseq
      %v2287 = vshrl.u32 %v2286, 7
      %v2288 = vsub.s32 0, %v2287
      %v2289 = vrot.slane %v2272, %v2288
      %v2290 = vlaneseq
      %v2291 = vshrl.u32 %v2290, 7
      %v2292 = vsub.s32 0, %v2291
      %v2293 = vrot.slane %v2255, %v2292
      %v2294 = vlaneseq
      %v2295 = vshrl.u32 %v2294, 7
      %v2296 = vsub.s32 0, %v2295
      %v2297 = vrot.slane %v2269, %v2296
      %v2298 = vlaneseq
      %v2299 = vshrl.u32 %v2298, 7
      %v2300 = vsub.s32 0, %v2299
      %v2301 = vrot.slane %v2271, %v2300
      %v2302 = vlaneseq
      %v2303 = vshrl.u32 %v2302, 7
      %v2304 = vsub.s32 0, %v2303
      %v2305 = vrot.slane %v2273, %v2304
      %v2314 = vadd.f32 %v2277, %v1721
      %v2315 = vadd.f32 %v2281, %v1721
      %v2316 = vadd.f32 %v2285, %v1721
      %v2317 = vadd.f32 %v2289, %v1721
      %v2318 = vadd.f32 %v2293, %v1721
      %v2319 = vadd.f32 %v2297, %v1721
      %v2320 = vadd.f32 %v2301, %v1721
      %v2321 = vadd.f32 %v2305, %v1721
      %v2322 = vadd.f32 %v1791, %v2314
      %v2323 = vadd.f32 %v1794, %v2315
      %v2324 = vadd.f32 %v1799, %v2316
      %v2325 = vadd.f32 %v1802, %v2317
      %v2326 = vadd.f32 %v1807, %v2318
      %v2327 = vadd.f32 %v1810, %v2319
      %v2328 = vadd.f32 %v1815, %v2320
      %v2329 = vadd.f32 %v1818, %v2321
      %v2330 = vmax.f32 %v2322, 0.0
      %v2331 = vmax.f32 %v2323, 0.0
      %v2332 = vmax.f32 %v2324, 0.0
      %v2333 = vmax.f32 %v2325, 0.0
      %v2334 = vmax.f32 %v2326, 0.0
      %v2335 = vmax.f32 %v2327, 0.0
      %v2336 = vmax.f32 %v2328, 0.0
      %v2337 = vmax.f32 %v2329, 0.0
      %v2338 = vadd.f32 %v1436, %v2330
      %v2339 = vadd.f32 %v1437, %v2331
      %v2340 = vadd.f32 %v1438, %v2332
      %v2341 = vadd.f32 %v1439, %v2333
      %v2342 = vadd.f32 %v1440, %v2334
      %v2343 = vadd.f32 %v1441, %v2335
      %v2344 = vadd.f32 %v1442, %v2336
      %v2345 = vadd.f32 %v1443, %v2337
      %s2346 = scalar_lea.vmem %s3, 192
      %v2347 = vld [vmem:[%s2346] sm:$0xf]
      %v2348 = vld [vmem:[%s2346 + $0x4] sm:$0xf]
      %v2349 = vld [vmem:[%s2346 + $0x8] sm:$0xf]
      %v2350 = vld [vmem:[%s2346 + $0xc] sm:$0xf]
      %s2351 = scalar_lea.vmem %s3, 208
      %v2352 = vld [vmem:[%s2351] sm:$0xf]
      %v2353 = vld [vmem:[%s2351 + $0x4] sm:$0xf]
      %v2354 = vld [vmem:[%s2351 + $0x8] sm:$0xf]
      %v2355 = vld [vmem:[%s2351 + $0xc] sm:$0xf]
      %s2356 = scalar_lea.vmem %s3, 224
      %v2357 = vld [vmem:[%s2356] sm:$0xf]
      %v2358 = vld [vmem:[%s2356 + $0x4] sm:$0xf]
      %v2359 = vld [vmem:[%s2356 + $0x8] sm:$0xf]
      %v2360 = vld [vmem:[%s2356 + $0xc] sm:$0xf]
      %s2361 = scalar_lea.vmem %s4, 12
      %v2362 = vld [vmem:[%s2361] sm:$0x1]
      %s2363 = scalar_lea.vmem %s4, 13
      %v2364 = vld [vmem:[%s2363] sm:$0x1]
      %s2365 = scalar_lea.vmem %s4, 14
      %v2366 = vld [vmem:[%s2365] sm:$0x1]
      %v2367 = vpack.c.bf16 %v2223, %v2223
      %v2368 = vpack.c.bf16 %v2339, %v2338
      %v2369 = vpack.c.bf16 %v2341, %v2340
      %v2370 = vpack.c.bf16 %v2343, %v2342
      %v2371 = vpack.c.bf16 %v2345, %v2344
      %v2373 = vlaneseq
      %v2374 = vshrl.u32 %v2373, 7
      %v2375 = vsub.s32 0, %v2374
      %v2376 = vrot.slane %v2364, %v2375
      %v2382 = vunpack.c.l.b16 %v2352
      %v2383 = vunpack.c.l.b16 %v2353
      %v2384 = vunpack.c.l.b16 %v2354
      %v2385 = vunpack.c.l.b16 %v2355
      %v2386 = vpack.c.b16 %v2383, %v2382
      %v2387 = vpack.c.b16 %v2385, %v2384
      %v2391 = vsel %vm596, %v2367, 0
      %2393 = vmatprep.subr.bf16.mxu0 0
      %2394 = vmatpush1.bf16.msra.mxu0 %v2386
      %2395 = vmatprep.subr.bf16.mxu0 0
      %2396 = vmatpush1.bf16.msra.mxu0 %v2387
      %2397 = vmatprep.subr.bf16.mxu0 0
      %2398 = vmatpush1.bf16.msra.mxu0 0
      %2399 = vmatprep.subr.bf16.mxu0 0
      %2400 = vmatpush1.bf16.msra.mxu0 0
      %2401 = vmatprep.subr.bf16.mxu0 0
      %2402 = vmatpush1.bf16.msra.mxu0 0
      %2403 = vmatprep.subr.bf16.mxu0 0
      %2404 = vmatpush1.bf16.msra.mxu0 0
      %2405 = vmatprep.subr.bf16.mxu0 0
      %2406 = vmatpush1.bf16.msra.mxu0 0
      %2407 = vmatprep.subr.bf16.mxu0 0
      %2408 = vmatpush1.bf16.msra.mxu0 0
      %2409 = vmatprep.subr.bf16.mxu0 0
      %2410 = vmatpush1.bf16.msra.mxu0 0
      %2411 = vmatprep.subr.bf16.mxu0 0
      %2412 = vmatpush1.bf16.msra.mxu0 0
      %2413 = vmatprep.subr.bf16.mxu0 0
      %2414 = vmatpush1.bf16.msra.mxu0 0
      %2415 = vmatprep.subr.bf16.mxu0 0
      %2416 = vmatpush1.bf16.msra.mxu0 0
      %2417 = vmatprep.subr.bf16.mxu0 0
      %2418 = vmatpush1.bf16.msra.mxu0 0
      %2419 = vmatprep.subr.bf16.mxu0 0
      %2420 = vmatpush1.bf16.msra.mxu0 0
      %2421 = vmatprep.subr.bf16.mxu0 0
      %2422 = vmatpush1.bf16.msra.mxu0 0
      %2423 = vmatprep.subr.bf16.mxu0 0
      %2424 = vmatpush1.bf16.msra.mxu0 0
      %2425 = vmatprep.mubr.bf16.mxu0 0
      %2426 = vmatmul.mubr.bf16.gmra.mrb[0].mxu0 %v2391
      %v2427 = vpop.f32.mrb[0].mxu0
      %v2428 = vadd.f32 %v2376, %v2427
      %v2429 = vpop.f32.mrb[0].mxu0
      %v2430 = vpop.f32.mrb[0].mxu0
      %v2431 = vpop.f32.mrb[0].mxu0
      %2432 = vdwg.mxu0
      %v2434 = vlaneseq
      %v2435 = vshrl.u32 %v2434, 7
      %v2436 = vsub.s32 0, %v2435
      %v2437 = vrot.slane %v2366, %v2436
      %v2443 = vunpack.c.l.b16 %v2357
      %v2444 = vunpack.c.l.b16 %v2358
      %v2445 = vunpack.c.l.b16 %v2359
      %v2446 = vunpack.c.l.b16 %v2360
      %v2447 = vpack.c.b16 %v2444, %v2443
      %v2448 = vpack.c.b16 %v2446, %v2445
      %2451 = vmatprep.subr.bf16.mxu0 0
      %2452 = vmatpush1.bf16.msra.mxu0 %v2447
      %2453 = vmatprep.subr.bf16.mxu0 0
      %2454 = vmatpush1.bf16.msra.mxu0 %v2448
      %2455 = vmatprep.subr.bf16.mxu0 0
      %2456 = vmatpush1.bf16.msra.mxu0 0
      %2457 = vmatprep.subr.bf16.mxu0 0
      %2458 = vmatpush1.bf16.msra.mxu0 0
      %2459 = vmatprep.subr.bf16.mxu0 0
      %2460 = vmatpush1.bf16.msra.mxu0 0
      %2461 = vmatprep.subr.bf16.mxu0 0
      %2462 = vmatpush1.bf16.msra.mxu0 0
      %2463 = vmatprep.subr.bf16.mxu0 0
      %2464 = vmatpush1.bf16.msra.mxu0 0
      %2465 = vmatprep.subr.bf16.mxu0 0
      %2466 = vmatpush1.bf16.msra.mxu0 0
      %2467 = vmatprep.subr.bf16.mxu0 0
      %2468 = vmatpush1.bf16.msra.mxu0 0
      %2469 = vmatprep.subr.bf16.mxu0 0
      %2470 = vmatpush1.bf16.msra.mxu0 0
      %2471 = vmatprep.subr.bf16.mxu0 0
      %2472 = vmatpush1.bf16.msra.mxu0 0
      %2473 = vmatprep.subr.bf16.mxu0 0
      %2474 = vmatpush1.bf16.msra.mxu0 0
      %2475 = vmatprep.subr.bf16.mxu0 0
      %2476 = vmatpush1.bf16.msra.mxu0 0
      %2477 = vmatprep.subr.bf16.mxu0 0
      %2478 = vmatpush1.bf16.msra.mxu0 0
      %2479 = vmatprep.subr.bf16.mxu0 0
      %2480 = vmatpush1.bf16.msra.mxu0 0
      %2481 = vmatprep.subr.bf16.mxu0 0
      %2482 = vmatpush1.bf16.msra.mxu0 0
      %2483 = vmatprep.mubr.bf16.mxu0 0
      %2484 = vmatmul.mubr.bf16.gmra.mrb[0].mxu0 %v2391
      %v2485 = vpop.f32.mrb[0].mxu0
      %v2486 = vadd.f32 %v2437, %v2485
      %v2487 = vpop.f32.mrb[0].mxu0
      %v2488 = vpop.f32.mrb[0].mxu0
      %v2489 = vpop.f32.mrb[0].mxu0
      %2490 = vdwg.mxu0
      %v2492 = vlaneseq
      %v2493 = vshrl.u32 %v2492, 7
      %v2494 = vsub.s32 0, %v2493
      %v2495 = vrot.slane %v2362, %v2494
      %v2501 = vunpack.c.l.b16 %v2347
      %v2502 = vunpack.c.l.b16 %v2348
      %v2503 = vunpack.c.l.b16 %v2349
      %v2504 = vunpack.c.l.b16 %v2350
      %v2505 = vpack.c.b16 %v2502, %v2501
      %v2506 = vpack.c.b16 %v2504, %v2503
      %v2510 = vsel %vm596, %v2368, 0
      %v2513 = vsel %vm596, %v2369, 0
      %v2516 = vsel %vm596, %v2370, 0
      %v2519 = vsel %vm596, %v2371, 0
      %2521 = vmatprep.subr.bf16.mxu0 0
      %2522 = vmatpush1.bf16.msra.mxu0 %v2505
      %2523 = vmatprep.subr.bf16.mxu0 0
      %2524 = vmatpush1.bf16.msra.mxu0 %v2506
      %2525 = vmatprep.subr.bf16.mxu0 0
      %2526 = vmatpush1.bf16.msra.mxu0 0
      %2527 = vmatprep.subr.bf16.mxu0 0
      %2528 = vmatpush1.bf16.msra.mxu0 0
      %2529 = vmatprep.subr.bf16.mxu0 0
      %2530 = vmatpush1.bf16.msra.mxu0 0
      %2531 = vmatprep.subr.bf16.mxu0 0
      %2532 = vmatpush1.bf16.msra.mxu0 0
      %2533 = vmatprep.subr.bf16.mxu0 0
      %2534 = vmatpush1.bf16.msra.mxu0 0
      %2535 = vmatprep.subr.bf16.mxu0 0
      %2536 = vmatpush1.bf16.msra.mxu0 0
      %2537 = vmatprep.subr.bf16.mxu0 0
      %2538 = vmatpush1.bf16.msra.mxu0 0
      %2539 = vmatprep.subr.bf16.mxu0 0
      %2540 = vmatpush1.bf16.msra.mxu0 0
      %2541 = vmatprep.subr.bf16.mxu0 0
      %2542 = vmatpush1.bf16.msra.mxu0 0
      %2543 = vmatprep.subr.bf16.mxu0 0
      %2544 = vmatpush1.bf16.msra.mxu0 0
      %2545 = vmatprep.subr.bf16.mxu0 0
      %2546 = vmatpush1.bf16.msra.mxu0 0
      %2547 = vmatprep.subr.bf16.mxu0 0
      %2548 = vmatpush1.bf16.msra.mxu0 0
      %2549 = vmatprep.subr.bf16.mxu0 0
      %2550 = vmatpush1.bf16.msra.mxu0 0
      %2551 = vmatprep.subr.bf16.mxu0 0
      %2552 = vmatpush1.bf16.msra.mxu0 0
      %2553 = vmatprep.mubr.bf16.mxu0 0
      %2554 = vmatmul.mubr.bf16.gmra.mrb[0].mxu0 %v2510
      %v2555 = vpop.f32.mrb[0].mxu0
      %v2556 = vadd.f32 %v2495, %v2555
      %v2557 = vpop.f32.mrb[0].mxu0
      %v2558 = vpop.f32.mrb[0].mxu0
      %v2559 = vadd.f32 %v2495, %v2558
      %v2560 = vpop.f32.mrb[0].mxu0
      %2561 = vmatprep.mubr.bf16.mxu0 0
      %2562 = vmatmul.mubr.bf16.gmra.mrb[0].mxu0 %v2513
      %v2563 = vpop.f32.mrb[0].mxu0
      %v2564 = vadd.f32 %v2495, %v2563
      %v2565 = vpop.f32.mrb[0].mxu0
      %v2566 = vpop.f32.mrb[0].mxu0
      %v2567 = vadd.f32 %v2495, %v2566
      %v2568 = vpop.f32.mrb[0].mxu0
      %2569 = vmatprep.mubr.bf16.mxu0 0
      %2570 = vmatmul.mubr.bf16.gmra.mrb[0].mxu0 %v2516
      %v2571 = vpop.f32.mrb[0].mxu0
      %v2572 = vadd.f32 %v2495, %v2571
      %v2573 = vpop.f32.mrb[0].mxu0
      %v2574 = vpop.f32.mrb[0].mxu0
      %v2575 = vadd.f32 %v2495, %v2574
      %v2576 = vpop.f32.mrb[0].mxu0
      %2577 = vmatprep.mubr.bf16.mxu0 0
      %2578 = vmatmul.mubr.bf16.gmra.mrb[0].mxu0 %v2519
      %v2579 = vpop.f32.mrb[0].mxu0
      %v2580 = vadd.f32 %v2495, %v2579
      %v2581 = vpop.f32.mrb[0].mxu0
      %v2582 = vpop.f32.mrb[0].mxu0
      %v2583 = vadd.f32 %v2495, %v2582
      %v2584 = vpop.f32.mrb[0].mxu0
      %2585 = vdwg.mxu0
      %v2587 = vcombine.high %v2428, %v2428
      %v2589 = vunpack.c.l.s4 1966171168
      %v2590 = vunpack.c.0.s8 %v2589
      %v2591 = vlaneseq
      %v2592 = vshrl.u32 %v2591, 7
      %v2593 = vsub.s32 %v2590, %v2592
      %v2594 = vrot.slane %v2428, %v2593
      %v2596 = vunpack.c.l.s4 1966171168
      %v2597 = vunpack.c.0.s8 %v2596
      %v2598 = vlaneseq
      %v2599 = vshrl.u32 %v2598, 7
      %v2600 = vsub.s32 %v2597, %v2599
      %v2601 = vrot.slane %v2587, %v2600
      %v2602 = vcombine.high %v2594, %v2594
      %v2603 = vcombine.high %v2601, %v2601
      %v2605 = vunpack.c.l.s4 1966171168
      %v2606 = vunpack.c.0.s8 %v2605
      %v2607 = vlaneseq
      %v2608 = vshrl.u32 %v2607, 7
      %v2609 = vsub.s32 %v2606, %v2608
      %v2610 = vrot.slane %v2594, %v2609
      %v2612 = vunpack.c.l.s4 1966171168
      %v2613 = vunpack.c.0.s8 %v2612
      %v2614 = vlaneseq
      %v2615 = vshrl.u32 %v2614, 7
      %v2616 = vsub.s32 %v2613, %v2615
      %v2617 = vrot.slane %v2601, %v2616
      %v2619 = vunpack.c.l.s4 1966171168
      %v2620 = vunpack.c.0.s8 %v2619
      %v2621 = vlaneseq
      %v2622 = vshrl.u32 %v2621, 7
      %v2623 = vsub.s32 %v2620, %v2622
      %v2624 = vrot.slane %v2602, %v2623
      %v2626 = vunpack.c.l.s4 1966171168
      %v2627 = vunpack.c.0.s8 %v2626
      %v2628 = vlaneseq
      %v2629 = vshrl.u32 %v2628, 7
      %v2630 = vsub.s32 %v2627, %v2629
      %v2631 = vrot.slane %v2603, %v2630
      %v2632 = vcombine.high %v2610, %v2610
      %v2633 = vcombine.high %v2617, %v2617
      %v2634 = vcombine.high %v2624, %v2624
      %v2635 = vcombine.high %v2631, %v2631
      %v2636 = vlaneseq
      %v2637 = vshrl.u32 %v2636, 7
      %v2638 = vsub.s32 0, %v2637
      %v2639 = vrot.slane %v2610, %v2638
      %v2640 = vlaneseq
      %v2641 = vshrl.u32 %v2640, 7
      %v2642 = vsub.s32 0, %v2641
      %v2643 = vrot.slane %v2624, %v2642
      %v2644 = vlaneseq
      %v2645 = vshrl.u32 %v2644, 7
      %v2646 = vsub.s32 0, %v2645
      %v2647 = vrot.slane %v2632, %v2646
      %v2648 = vlaneseq
      %v2649 = vshrl.u32 %v2648, 7
      %v2650 = vsub.s32 0, %v2649
      %v2651 = vrot.slane %v2634, %v2650
      %v2652 = vlaneseq
      %v2653 = vshrl.u32 %v2652, 7
      %v2654 = vsub.s32 0, %v2653
      %v2655 = vrot.slane %v2617, %v2654
      %v2656 = vlaneseq
      %v2657 = vshrl.u32 %v2656, 7
      %v2658 = vsub.s32 0, %v2657
      %v2659 = vrot.slane %v2631, %v2658
      %v2660 = vlaneseq
      %v2661 = vshrl.u32 %v2660, 7
      %v2662 = vsub.s32 0, %v2661
      %v2663 = vrot.slane %v2633, %v2662
      %v2664 = vlaneseq
      %v2665 = vshrl.u32 %v2664, 7
      %v2666 = vsub.s32 0, %v2665
      %v2667 = vrot.slane %v2635, %v2666
      %v2676 = vadd.f32 %v2639, %v2486
      %v2677 = vadd.f32 %v2643, %v2486
      %v2678 = vadd.f32 %v2647, %v2486
      %v2679 = vadd.f32 %v2651, %v2486
      %v2680 = vadd.f32 %v2655, %v2486
      %v2681 = vadd.f32 %v2659, %v2486
      %v2682 = vadd.f32 %v2663, %v2486
      %v2683 = vadd.f32 %v2667, %v2486
      %v2684 = vadd.f32 %v2556, %v2676
      %v2685 = vadd.f32 %v2559, %v2677
      %v2686 = vadd.f32 %v2564, %v2678
      %v2687 = vadd.f32 %v2567, %v2679
      %v2688 = vadd.f32 %v2572, %v2680
      %v2689 = vadd.f32 %v2575, %v2681
      %v2690 = vadd.f32 %v2580, %v2682
      %v2691 = vadd.f32 %v2583, %v2683
      %v2692 = vmax.f32 %v2684, 0.0
      %v2693 = vmax.f32 %v2685, 0.0
      %v2694 = vmax.f32 %v2686, 0.0
      %v2695 = vmax.f32 %v2687, 0.0
      %v2696 = vmax.f32 %v2688, 0.0
      %v2697 = vmax.f32 %v2689, 0.0
      %v2698 = vmax.f32 %v2690, 0.0
      %v2699 = vmax.f32 %v2691, 0.0
      %v2700 = vadd.f32 %v2338, %v2692
      %v2701 = vadd.f32 %v2339, %v2693
      %v2702 = vadd.f32 %v2340, %v2694
      %v2703 = vadd.f32 %v2341, %v2695
      %v2704 = vadd.f32 %v2342, %v2696
      %v2705 = vadd.f32 %v2343, %v2697
      %v2706 = vadd.f32 %v2344, %v2698
      %v2707 = vadd.f32 %v2345, %v2699
      %v2708 = vpack.c.bf16 %v2701, %v2700
      %v2709 = vpack.c.bf16 %v2703, %v2702
      %v2710 = vpack.c.bf16 %v2705, %v2704
      %v2711 = vpack.c.bf16 %v2707, %v2706
      %v2712 = vld [vmem:[%s7] sm:$0xf]
      %v2713 = vld [vmem:[%s7 + $0x4] sm:$0xf]
      %v2714 = vld [vmem:[%s7 + $0x8] sm:$0xf]
      %v2715 = vld [vmem:[%s7 + $0xc] sm:$0xf]
      %v2716 = vld [vmem:[%s8] sm:$0x1]
      %v2718 = vlaneseq
      %v2719 = vshrl.u32 %v2718, 7
      %v2720 = vsub.s32 0, %v2719
      %v2721 = vrot.slane %v2716, %v2720
      %v2727 = vunpack.c.l.b16 %v2712
      %v2728 = vunpack.c.l.b16 %v2713
      %v2729 = vunpack.c.l.b16 %v2714
      %v2730 = vunpack.c.l.b16 %v2715
      %v2731 = vpack.c.b16 %v2728, %v2727
      %v2732 = vpack.c.b16 %v2730, %v2729
      %v2736 = vsel %vm596, %v2708, 0
      %v2739 = vsel %vm596, %v2709, 0
      %v2742 = vsel %vm596, %v2710, 0
      %v2745 = vsel %vm596, %v2711, 0
      %2747 = vmatprep.subr.bf16.mxu0 0
      %2748 = vmatpush1.bf16.msra.mxu0 %v2731
      %2749 = vmatprep.subr.bf16.mxu0 0
      %2750 = vmatpush1.bf16.msra.mxu0 %v2732
      %2751 = vmatprep.subr.bf16.mxu0 0
      %2752 = vmatpush1.bf16.msra.mxu0 0
      %2753 = vmatprep.subr.bf16.mxu0 0
      %2754 = vmatpush1.bf16.msra.mxu0 0
      %2755 = vmatprep.subr.bf16.mxu0 0
      %2756 = vmatpush1.bf16.msra.mxu0 0
      %2757 = vmatprep.subr.bf16.mxu0 0
      %2758 = vmatpush1.bf16.msra.mxu0 0
      %2759 = vmatprep.subr.bf16.mxu0 0
      %2760 = vmatpush1.bf16.msra.mxu0 0
      %2761 = vmatprep.subr.bf16.mxu0 0
      %2762 = vmatpush1.bf16.msra.mxu0 0
      %2763 = vmatprep.subr.bf16.mxu0 0
      %2764 = vmatpush1.bf16.msra.mxu0 0
      %2765 = vmatprep.subr.bf16.mxu0 0
      %2766 = vmatpush1.bf16.msra.mxu0 0
      %2767 = vmatprep.subr.bf16.mxu0 0
      %2768 = vmatpush1.bf16.msra.mxu0 0
      %2769 = vmatprep.subr.bf16.mxu0 0
      %2770 = vmatpush1.bf16.msra.mxu0 0
      %2771 = vmatprep.subr.bf16.mxu0 0
      %2772 = vmatpush1.bf16.msra.mxu0 0
      %2773 = vmatprep.subr.bf16.mxu0 0
      %2774 = vmatpush1.bf16.msra.mxu0 0
      %2775 = vmatprep.subr.bf16.mxu0 0
      %2776 = vmatpush1.bf16.msra.mxu0 0
      %2777 = vmatprep.subr.bf16.mxu0 0
      %2778 = vmatpush1.bf16.msra.mxu0 0
      %2779 = vmatprep.mubr.bf16.mxu0 0
      %2780 = vmatmul.mubr.bf16.gmra.mrb[0].mxu0 %v2736
      %v2781 = vpop.f32.mrb[0].mxu0
      %v2782 = vadd.f32 %v2721, %v2781
      %v2783 = vpop.f32.mrb[0].mxu0
      %v2784 = vpop.f32.mrb[0].mxu0
      %v2785 = vadd.f32 %v2721, %v2784
      %v2786 = vpop.f32.mrb[0].mxu0
      %2787 = vmatprep.mubr.bf16.mxu0 0
      %2788 = vmatmul.mubr.bf16.gmra.mrb[0].mxu0 %v2739
      %v2789 = vpop.f32.mrb[0].mxu0
      %v2790 = vadd.f32 %v2721, %v2789
      %v2791 = vpop.f32.mrb[0].mxu0
      %v2792 = vpop.f32.mrb[0].mxu0
      %v2793 = vadd.f32 %v2721, %v2792
      %v2794 = vpop.f32.mrb[0].mxu0
      %2795 = vmatprep.mubr.bf16.mxu0 0
      %2796 = vmatmul.mubr.bf16.gmra.mrb[0].mxu0 %v2742
      %v2797 = vpop.f32.mrb[0].mxu0
      %v2798 = vadd.f32 %v2721, %v2797
      %v2799 = vpop.f32.mrb[0].mxu0
      %v2800 = vpop.f32.mrb[0].mxu0
      %v2801 = vadd.f32 %v2721, %v2800
      %v2802 = vpop.f32.mrb[0].mxu0
      %2803 = vmatprep.mubr.bf16.mxu0 0
      %2804 = vmatmul.mubr.bf16.gmra.mrb[0].mxu0 %v2745
      %v2805 = vpop.f32.mrb[0].mxu0
      %v2806 = vadd.f32 %v2721, %v2805
      %v2807 = vpop.f32.mrb[0].mxu0
      %v2808 = vpop.f32.mrb[0].mxu0
      %v2809 = vadd.f32 %v2721, %v2808
      %v2810 = vpop.f32.mrb[0].mxu0
      %2811 = vdwg.mxu0
      %v2812 = vmax.f32 %v2782, 0.0
      %v2813 = vmax.f32 %v2785, 0.0
      %v2814 = vmax.f32 %v2790, 0.0
      %v2815 = vmax.f32 %v2793, 0.0
      %v2816 = vmax.f32 %v2798, 0.0
      %v2817 = vmax.f32 %v2801, 0.0
      %v2818 = vmax.f32 %v2806, 0.0
      %v2819 = vmax.f32 %v2809, 0.0
      %v2820 = vpack.c.bf16 %v2813, %v2812
      %v2821 = vpack.c.bf16 %v2815, %v2814
      %v2822 = vpack.c.bf16 %v2817, %v2816
      %v2823 = vpack.c.bf16 %v2819, %v2818
      %v2824 = vld [vmem:[%s9] sm:$0xf]
      %v2825 = vld [vmem:[%s9 + $0x4] sm:$0xf]
      %v2826 = vld [vmem:[%s9 + $0x8] sm:$0xf]
      %v2827 = vld [vmem:[%s9 + $0xc] sm:$0xf]
      %v2828 = vld [vmem:[%s10] sm:$0x1]
      %v2830 = vlaneseq
      %v2831 = vshrl.u32 %v2830, 7
      %v2832 = vsub.s32 0, %v2831
      %v2833 = vrot.slane %v2828, %v2832
      %v2839 = vunpack.c.l.b16 %v2824
      %v2840 = vunpack.c.l.b16 %v2825
      %v2841 = vunpack.c.l.b16 %v2826
      %v2842 = vunpack.c.l.b16 %v2827
      %v2843 = vpack.c.b16 %v2840, %v2839
      %v2844 = vpack.c.b16 %v2842, %v2841
      %v2848 = vsel %vm596, %v2820, 0
      %v2851 = vsel %vm596, %v2821, 0
      %v2854 = vsel %vm596, %v2822, 0
      %v2857 = vsel %vm596, %v2823, 0
      %2859 = vmatprep.subr.bf16.mxu0 0
      %2860 = vmatpush1.bf16.msra.mxu0 %v2843
      %2861 = vmatprep.subr.bf16.mxu0 0
      %2862 = vmatpush1.bf16.msra.mxu0 %v2844
      %2863 = vmatprep.subr.bf16.mxu0 0
      %2864 = vmatpush1.bf16.msra.mxu0 0
      %2865 = vmatprep.subr.bf16.mxu0 0
      %2866 = vmatpush1.bf16.msra.mxu0 0
      %2867 = vmatprep.subr.bf16.mxu0 0
      %2868 = vmatpush1.bf16.msra.mxu0 0
      %2869 = vmatprep.subr.bf16.mxu0 0
      %2870 = vmatpush1.bf16.msra.mxu0 0
      %2871 = vmatprep.subr.bf16.mxu0 0
      %2872 = vmatpush1.bf16.msra.mxu0 0
      %2873 = vmatprep.subr.bf16.mxu0 0
      %2874 = vmatpush1.bf16.msra.mxu0 0
      %2875 = vmatprep.subr.bf16.mxu0 0
      %2876 = vmatpush1.bf16.msra.mxu0 0
      %2877 = vmatprep.subr.bf16.mxu0 0
      %2878 = vmatpush1.bf16.msra.mxu0 0
      %2879 = vmatprep.subr.bf16.mxu0 0
      %2880 = vmatpush1.bf16.msra.mxu0 0
      %2881 = vmatprep.subr.bf16.mxu0 0
      %2882 = vmatpush1.bf16.msra.mxu0 0
      %2883 = vmatprep.subr.bf16.mxu0 0
      %2884 = vmatpush1.bf16.msra.mxu0 0
      %2885 = vmatprep.subr.bf16.mxu0 0
      %2886 = vmatpush1.bf16.msra.mxu0 0
      %2887 = vmatprep.subr.bf16.mxu0 0
      %2888 = vmatpush1.bf16.msra.mxu0 0
      %2889 = vmatprep.subr.bf16.mxu0 0
      %2890 = vmatpush1.bf16.msra.mxu0 0
      %2891 = vmatprep.mubr.bf16.mxu0 0
      %2892 = vmatmul.mubr.bf16.gmra.mrb[0].mxu0 %v2848
      %v2893 = vpop.f32.mrb[0].mxu0
      %v2894 = vadd.f32 %v2833, %v2893
      %v2895 = vpop.f32.mrb[0].mxu0
      %v2896 = vpop.f32.mrb[0].mxu0
      %v2897 = vadd.f32 %v2833, %v2896
      %v2898 = vpop.f32.mrb[0].mxu0
      %2899 = vmatprep.mubr.bf16.mxu0 0
      %2900 = vmatmul.mubr.bf16.gmra.mrb[0].mxu0 %v2851
      %v2901 = vpop.f32.mrb[0].mxu0
      %v2902 = vadd.f32 %v2833, %v2901
      %v2903 = vpop.f32.mrb[0].mxu0
      %v2904 = vpop.f32.mrb[0].mxu0
      %v2905 = vadd.f32 %v2833, %v2904
      %v2906 = vpop.f32.mrb[0].mxu0
      %2907 = vmatprep.mubr.bf16.mxu0 0
      %2908 = vmatmul.mubr.bf16.gmra.mrb[0].mxu0 %v2854
      %v2909 = vpop.f32.mrb[0].mxu0
      %v2910 = vadd.f32 %v2833, %v2909
      %v2911 = vpop.f32.mrb[0].mxu0
      %v2912 = vpop.f32.mrb[0].mxu0
      %v2913 = vadd.f32 %v2833, %v2912
      %v2914 = vpop.f32.mrb[0].mxu0
      %2915 = vmatprep.mubr.bf16.mxu0 0
      %2916 = vmatmul.mubr.bf16.gmra.mrb[0].mxu0 %v2857
      %v2917 = vpop.f32.mrb[0].mxu0
      %v2918 = vadd.f32 %v2833, %v2917
      %v2919 = vpop.f32.mrb[0].mxu0
      %v2920 = vpop.f32.mrb[0].mxu0
      %v2921 = vadd.f32 %v2833, %v2920
      %v2922 = vpop.f32.mrb[0].mxu0
      %2923 = vdwg.mxu0
      %v2924 = vmax.f32 %v2894, 0.0
      %v2925 = vmax.f32 %v2897, 0.0
      %v2926 = vmax.f32 %v2902, 0.0
      %v2927 = vmax.f32 %v2905, 0.0
      %v2928 = vmax.f32 %v2910, 0.0
      %v2929 = vmax.f32 %v2913, 0.0
      %v2930 = vmax.f32 %v2918, 0.0
      %v2931 = vmax.f32 %v2921, 0.0
      %v2932 = vpack.c.bf16 %v2925, %v2924
      %v2933 = vpack.c.bf16 %v2927, %v2926
      %v2934 = vpack.c.bf16 %v2929, %v2928
      %v2935 = vpack.c.bf16 %v2931, %v2930
      %v2936 = vld [vmem:[%s11] sm:$0xf]
      %v2937 = vld [vmem:[%s11 + $0x4] sm:$0xf]
      %v2938 = vld [vmem:[%s11 + $0x8] sm:$0xf]
      %v2939 = vld [vmem:[%s11 + $0xc] sm:$0xf]
      %v2940 = vld [vmem:[%s12] sm:$0x1]
      %v2942 = vlaneseq
      %v2943 = vshrl.u32 %v2942, 7
      %v2944 = vsub.s32 0, %v2943
      %v2945 = vrot.slane %v2940, %v2944
      %v2951 = vunpack.c.l.b16 %v2936
      %v2952 = vunpack.c.l.b16 %v2937
      %v2953 = vunpack.c.l.b16 %v2938
      %v2954 = vunpack.c.l.b16 %v2939
      %v2955 = vpack.c.b16 %v2952, %v2951
      %v2956 = vpack.c.b16 %v2954, %v2953
      %v2960 = vsel %vm596, %v2932, 0
      %v2963 = vsel %vm596, %v2933, 0
      %v2966 = vsel %vm596, %v2934, 0
      %v2969 = vsel %vm596, %v2935, 0
      %2971 = vmatprep.subr.bf16.mxu0 0
      %2972 = vmatpush1.bf16.msra.mxu0 %v2955
      %2973 = vmatprep.subr.bf16.mxu0 0
      %2974 = vmatpush1.bf16.msra.mxu0 %v2956
      %2975 = vmatprep.subr.bf16.mxu0 0
      %2976 = vmatpush1.bf16.msra.mxu0 0
      %2977 = vmatprep.subr.bf16.mxu0 0
      %2978 = vmatpush1.bf16.msra.mxu0 0
      %2979 = vmatprep.subr.bf16.mxu0 0
      %2980 = vmatpush1.bf16.msra.mxu0 0
      %2981 = vmatprep.subr.bf16.mxu0 0
      %2982 = vmatpush1.bf16.msra.mxu0 0
      %2983 = vmatprep.subr.bf16.mxu0 0
      %2984 = vmatpush1.bf16.msra.mxu0 0
      %2985 = vmatprep.subr.bf16.mxu0 0
      %2986 = vmatpush1.bf16.msra.mxu0 0
      %2987 = vmatprep.subr.bf16.mxu0 0
      %2988 = vmatpush1.bf16.msra.mxu0 0
      %2989 = vmatprep.subr.bf16.mxu0 0
      %2990 = vmatpush1.bf16.msra.mxu0 0
      %2991 = vmatprep.subr.bf16.mxu0 0
      %2992 = vmatpush1.bf16.msra.mxu0 0
      %2993 = vmatprep.subr.bf16.mxu0 0
      %2994 = vmatpush1.bf16.msra.mxu0 0
      %2995 = vmatprep.subr.bf16.mxu0 0
      %2996 = vmatpush1.bf16.msra.mxu0 0
      %2997 = vmatprep.subr.bf16.mxu0 0
      %2998 = vmatpush1.bf16.msra.mxu0 0
      %2999 = vmatprep.subr.bf16.mxu0 0
      %3000 = vmatpush1.bf16.msra.mxu0 0
      %3001 = vmatprep.subr.bf16.mxu0 0
      %3002 = vmatpush1.bf16.msra.mxu0 0
      %3003 = vmatprep.mubr.bf16.mxu0 0
      %3004 = vmatmul.mubr.bf16.gmra.mrb[0].mxu0 %v2960
      %v3005 = vpop.f32.mrb[0].mxu0
      %v3006 = vadd.f32 %v2945, %v3005
      %v3007 = vpop.f32.mrb[0].mxu0
      %v3008 = vpop.f32.mrb[0].mxu0
      %v3009 = vadd.f32 %v2945, %v3008
      %v3010 = vpop.f32.mrb[0].mxu0
      %3011 = vmatprep.mubr.bf16.mxu0 0
      %3012 = vmatmul.mubr.bf16.gmra.mrb[0].mxu0 %v2963
      %v3013 = vpop.f32.mrb[0].mxu0
      %v3014 = vadd.f32 %v2945, %v3013
      %v3015 = vpop.f32.mrb[0].mxu0
      %v3016 = vpop.f32.mrb[0].mxu0
      %v3017 = vadd.f32 %v2945, %v3016
      %v3018 = vpop.f32.mrb[0].mxu0
      %3019 = vmatprep.mubr.bf16.mxu0 0
      %3020 = vmatmul.mubr.bf16.gmra.mrb[0].mxu0 %v2966
      %v3021 = vpop.f32.mrb[0].mxu0
      %v3022 = vadd.f32 %v2945, %v3021
      %v3023 = vpop.f32.mrb[0].mxu0
      %v3024 = vpop.f32.mrb[0].mxu0
      %v3025 = vadd.f32 %v2945, %v3024
      %v3026 = vpop.f32.mrb[0].mxu0
      %3027 = vmatprep.mubr.bf16.mxu0 0
      %3028 = vmatmul.mubr.bf16.gmra.mrb[0].mxu0 %v2969
      %v3029 = vpop.f32.mrb[0].mxu0
      %v3030 = vadd.f32 %v2945, %v3029
      %v3031 = vpop.f32.mrb[0].mxu0
      %v3032 = vpop.f32.mrb[0].mxu0
      %v3033 = vadd.f32 %v2945, %v3032
      %v3034 = vpop.f32.mrb[0].mxu0
      %3035 = vdwg.mxu0
      %v3036 = vld [vmem:[%s506] sm:$0xff]
      %v3037 = vld [vmem:[%s506 + $0x8] sm:$0xff]
      %v3038 = vld [vmem:[%s506 + $0x10] sm:$0xff]
      %v3039 = vld [vmem:[%s506 + $0x18] sm:$0xff]
      %v3040 = vld [vmem:[%s506 + $0x20] sm:$0xff]
      %v3041 = vld [vmem:[%s506 + $0x28] sm:$0xff]
      %v3042 = vld [vmem:[%s506 + $0x30] sm:$0xff]
      %v3043 = vld [vmem:[%s506 + $0x38] sm:$0xff]
      %3052 = vrot.lane.b32.xlu0 %v3006, 127
      %v3053 = vpop.permute.xlu0 %3052
      %3054 = vrot.lane.b32.xlu0 %v3009, 127
      %v3055 = vpop.permute.xlu0 %3054
      %3056 = vrot.lane.b32.xlu0 %v3014, 127
      %v3057 = vpop.permute.xlu0 %3056
      %3058 = vrot.lane.b32.xlu0 %v3017, 127
      %v3059 = vpop.permute.xlu0 %3058
      %3060 = vrot.lane.b32.xlu0 %v3022, 127
      %v3061 = vpop.permute.xlu0 %3060
      %3062 = vrot.lane.b32.xlu0 %v3025, 127
      %v3063 = vpop.permute.xlu0 %3062
      %3064 = vrot.lane.b32.xlu0 %v3030, 127
      %v3065 = vpop.permute.xlu0 %3064
      %3066 = vrot.lane.b32.xlu0 %v3033, 127
      %v3067 = vpop.permute.xlu0 %3066
      %v3076 = vmax.f32 %v3006, %v3053
      %v3077 = vmax.f32 %v3009, %v3055
      %v3078 = vmax.f32 %v3014, %v3057
      %v3079 = vmax.f32 %v3017, %v3059
      %v3080 = vmax.f32 %v3022, %v3061
      %v3081 = vmax.f32 %v3025, %v3063
      %v3082 = vmax.f32 %v3030, %v3065
      %v3083 = vmax.f32 %v3033, %v3067
      %v3084 = vsub.f32 %v3006, %v3076
      %v3085 = vsub.f32 %v3009, %v3077
      %v3086 = vsub.f32 %v3014, %v3078
      %v3087 = vsub.f32 %v3017, %v3079
      %v3088 = vsub.f32 %v3022, %v3080
      %v3089 = vsub.f32 %v3025, %v3081
      %v3090 = vsub.f32 %v3030, %v3082
      %v3091 = vsub.f32 %v3033, %v3083
      %v3092 = vmul.f32 %v3084, 1.442695
      %v3093 = vpow.pop %v3092
      %v3094 = vmul.f32 %v3085, 1.442695
      %v3095 = vpow.pop %v3094
      %v3096 = vmul.f32 %v3086, 1.442695
      %v3097 = vpow.pop %v3096
      %v3098 = vmul.f32 %v3087, 1.442695
      %v3099 = vpow.pop %v3098
      %v3100 = vmul.f32 %v3088, 1.442695
      %v3101 = vpow.pop %v3100
      %v3102 = vmul.f32 %v3089, 1.442695
      %v3103 = vpow.pop %v3102
      %v3104 = vmul.f32 %v3090, 1.442695
      %v3105 = vpow.pop %v3104
      %v3106 = vmul.f32 %v3091, 1.442695
      %v3107 = vpow.pop %v3106
      %3116 = vrot.lane.b32.xlu0 %v3076, 1
      %v3117 = vpop.permute.xlu0 %3116
      %3118 = vrot.lane.b32.xlu0 %v3077, 1
      %v3119 = vpop.permute.xlu0 %3118
      %3120 = vrot.lane.b32.xlu0 %v3078, 1
      %v3121 = vpop.permute.xlu0 %3120
      %3122 = vrot.lane.b32.xlu0 %v3079, 1
      %v3123 = vpop.permute.xlu0 %3122
      %3124 = vrot.lane.b32.xlu0 %v3080, 1
      %v3125 = vpop.permute.xlu0 %3124
      %3126 = vrot.lane.b32.xlu0 %v3081, 1
      %v3127 = vpop.permute.xlu0 %3126
      %3128 = vrot.lane.b32.xlu0 %v3082, 1
      %v3129 = vpop.permute.xlu0 %3128
      %3130 = vrot.lane.b32.xlu0 %v3083, 1
      %v3131 = vpop.permute.xlu0 %3130
      %v3140 = vsub.f32 %v3006, %v3117
      %v3141 = vsub.f32 %v3009, %v3119
      %v3142 = vsub.f32 %v3014, %v3121
      %v3143 = vsub.f32 %v3017, %v3123
      %v3144 = vsub.f32 %v3022, %v3125
      %v3145 = vsub.f32 %v3025, %v3127
      %v3146 = vsub.f32 %v3030, %v3129
      %v3147 = vsub.f32 %v3033, %v3131
      %v3148 = vmul.f32 %v3140, 1.442695
      %v3149 = vpow.pop %v3148
      %v3150 = vmul.f32 %v3141, 1.442695
      %v3151 = vpow.pop %v3150
      %v3152 = vmul.f32 %v3142, 1.442695
      %v3153 = vpow.pop %v3152
      %v3154 = vmul.f32 %v3143, 1.442695
      %v3155 = vpow.pop %v3154
      %v3156 = vmul.f32 %v3144, 1.442695
      %v3157 = vpow.pop %v3156
      %v3158 = vmul.f32 %v3145, 1.442695
      %v3159 = vpow.pop %v3158
      %v3160 = vmul.f32 %v3146, 1.442695
      %v3161 = vpow.pop %v3160
      %v3162 = vmul.f32 %v3147, 1.442695
      %v3163 = vpow.pop %v3162
      %3172 = vrot.lane.b32.xlu0 %v3149, 127
      %v3173 = vpop.permute.xlu0 %3172
      %3174 = vrot.lane.b32.xlu0 %v3151, 127
      %v3175 = vpop.permute.xlu0 %3174
      %3176 = vrot.lane.b32.xlu0 %v3153, 127
      %v3177 = vpop.permute.xlu0 %3176
      %3178 = vrot.lane.b32.xlu0 %v3155, 127
      %v3179 = vpop.permute.xlu0 %3178
      %3180 = vrot.lane.b32.xlu0 %v3157, 127
      %v3181 = vpop.permute.xlu0 %3180
      %3182 = vrot.lane.b32.xlu0 %v3159, 127
      %v3183 = vpop.permute.xlu0 %3182
      %3184 = vrot.lane.b32.xlu0 %v3161, 127
      %v3185 = vpop.permute.xlu0 %3184
      %3186 = vrot.lane.b32.xlu0 %v3163, 127
      %v3187 = vpop.permute.xlu0 %3186
      %v3196 = vadd.f32 %v3093, %v3173
      %v3197 = vadd.f32 %v3095, %v3175
      %v3198 = vadd.f32 %v3097, %v3177
      %v3199 = vadd.f32 %v3099, %v3179
      %v3200 = vadd.f32 %v3101, %v3181
      %v3201 = vadd.f32 %v3103, %v3183
      %v3202 = vadd.f32 %v3105, %v3185
      %v3203 = vadd.f32 %v3107, %v3187
      %v3204 = vlog2.pop %v3196
      %v3205 = vmul.f32 %v3204, 0.6931472
      %v3206 = vlog2.pop %v3197
      %v3207 = vmul.f32 %v3206, 0.6931472
      %v3208 = vlog2.pop %v3198
      %v3209 = vmul.f32 %v3208, 0.6931472
      %v3210 = vlog2.pop %v3199
      %v3211 = vmul.f32 %v3210, 0.6931472
      %v3212 = vlog2.pop %v3200
      %v3213 = vmul.f32 %v3212, 0.6931472
      %v3214 = vlog2.pop %v3201
      %v3215 = vmul.f32 %v3214, 0.6931472
      %v3216 = vlog2.pop %v3202
      %v3217 = vmul.f32 %v3216, 0.6931472
      %v3218 = vlog2.pop %v3203
      %v3219 = vmul.f32 %v3218, 0.6931472
      %v3220 = vadd.f32 %v3076, %v3205
      %v3221 = vadd.f32 %v3077, %v3207
      %v3222 = vadd.f32 %v3078, %v3209
      %v3223 = vadd.f32 %v3079, %v3211
      %v3224 = vadd.f32 %v3080, %v3213
      %v3225 = vadd.f32 %v3081, %v3215
      %v3226 = vadd.f32 %v3082, %v3217
      %v3227 = vadd.f32 %v3083, %v3219
      %vm3228 = vcmp.gt.f32.partialorder %v3036, 0.5
      %vm3229 = vcmp.gt.f32.partialorder %v3037, 0.5
      %vm3230 = vcmp.gt.f32.partialorder %v3038, 0.5
      %vm3231 = vcmp.gt.f32.partialorder %v3039, 0.5
      %vm3232 = vcmp.gt.f32.partialorder %v3040, 0.5
      %vm3233 = vcmp.gt.f32.partialorder %v3041, 0.5
      %vm3234 = vcmp.gt.f32.partialorder %v3042, 0.5
      %vm3235 = vcmp.gt.f32.partialorder %v3043, 0.5
      %v3236 = vsel %vm3228, %v3053, %v3006
      %v3237 = vsel %vm3229, %v3055, %v3009
      %v3238 = vsel %vm3230, %v3057, %v3014
      %v3239 = vsel %vm3231, %v3059, %v3017
      %v3240 = vsel %vm3232, %v3061, %v3022
      %v3241 = vsel %vm3233, %v3063, %v3025
      %v3242 = vsel %vm3234, %v3065, %v3030
      %v3243 = vsel %vm3235, %v3067, %v3033
      %v3244 = vsub.f32 %v3220, %v3236
      %v3245 = vsub.f32 %v3221, %v3237
      %v3246 = vsub.f32 %v3222, %v3238
      %v3247 = vsub.f32 %v3223, %v3239
      %v3248 = vsub.f32 %v3224, %v3240
      %v3249 = vsub.f32 %v3225, %v3241
      %v3250 = vsub.f32 %v3226, %v3242
      %v3251 = vsub.f32 %v3227, %v3243
      %vm3252 = vcmask 7168
      %v3253 = vsel %vm3252, %v3244, 0.0
      %v3254 = vsel %vm3252, %v3245, 0.0
      %v3255 = vadd.f32 %v3253, %v3254
      %v3256 = vsel %vm3252, %v3246, 0.0
      %v3257 = vadd.f32 %v3255, %v3256
      %v3258 = vsel %vm3252, %v3247, 0.0
      %v3259 = vadd.f32 %v3257, %v3258
      %v3260 = vsel %vm3252, %v3248, 0.0
      %v3261 = vadd.f32 %v3259, %v3260
      %v3262 = vsel %vm3252, %v3249, 0.0
      %v3263 = vadd.f32 %v3261, %v3262
      %v3264 = vsel %vm3252, %v3250, 0.0
      %v3265 = vadd.f32 %v3263, %v3264
      %v3266 = vsel %vm3252, %v3251, 0.0
      %v3267 = vadd.f32 %v3265, %v3266
      %3268 = vadd.xlane.f32.xlu0 %v3267
      %v3269 = vpop.xlane.xlu0 %3268
      %v3270 = vrot.slane %v3269, 4
      %v3271 = vadd.f32 %v3269, %v3270
      %v3272 = vrot.slane %v3271, 2
      %v3273 = vadd.f32 %v3271, %v3272
      %v3274 = vrot.slane %v3273, 1
      %v3275 = vadd.f32 %v3273, %v3274
      %s3276 = vtos %v3275
      %3277 = vrot.lane.b32.xlu0 %v3006, 1
      %v3278 = vpop.permute.xlu0 %3277
      %3279 = vrot.lane.b32.xlu0 %v3009, 1
      %v3280 = vpop.permute.xlu0 %3279
      %3281 = vrot.lane.b32.xlu0 %v3014, 1
      %v3282 = vpop.permute.xlu0 %3281
      %3283 = vrot.lane.b32.xlu0 %v3017, 1
      %v3284 = vpop.permute.xlu0 %3283
      %3285 = vrot.lane.b32.xlu0 %v3022, 1
      %v3286 = vpop.permute.xlu0 %3285
      %3287 = vrot.lane.b32.xlu0 %v3025, 1
      %v3288 = vpop.permute.xlu0 %3287
      %3289 = vrot.lane.b32.xlu0 %v3030, 1
      %v3290 = vpop.permute.xlu0 %3289
      %3291 = vrot.lane.b32.xlu0 %v3033, 1
      %v3292 = vpop.permute.xlu0 %3291
      %vm3301 = vcmp.gt.f32.partialorder %v3006, %v3278
      %vm3302 = vcmp.gt.f32.partialorder %v3009, %v3280
      %vm3303 = vcmp.gt.f32.partialorder %v3014, %v3282
      %vm3304 = vcmp.gt.f32.partialorder %v3017, %v3284
      %vm3305 = vcmp.gt.f32.partialorder %v3022, %v3286
      %vm3306 = vcmp.gt.f32.partialorder %v3025, %v3288
      %vm3307 = vcmp.gt.f32.partialorder %v3030, %v3290
      %vm3308 = vcmp.gt.f32.partialorder %v3033, %v3292
      %v3309 = vsel %vm3301, 1, 0
      %v3310 = vsel %vm3302, 1, 0
      %v3311 = vsel %vm3303, 1, 0
      %v3312 = vsel %vm3304, 1, 0
      %v3313 = vsel %vm3305, 1, 0
      %v3314 = vsel %vm3306, 1, 0
      %v3315 = vsel %vm3307, 1, 0
      %v3316 = vsel %vm3308, 1, 0
      %v3317 = vcvt.s32.f32 %v3309
      %v3318 = vcvt.s32.f32 %v3310
      %v3319 = vcvt.s32.f32 %v3311
      %v3320 = vcvt.s32.f32 %v3312
      %v3321 = vcvt.s32.f32 %v3313
      %v3322 = vcvt.s32.f32 %v3314
      %v3323 = vcvt.s32.f32 %v3315
      %v3324 = vcvt.s32.f32 %v3316
      %3333 = vrot.lane.b32.xlu0 %v3317, 127
      %v3334 = vpop.permute.xlu0 %3333
      %3335 = vrot.lane.b32.xlu0 %v3318, 127
      %v3336 = vpop.permute.xlu0 %3335
      %3337 = vrot.lane.b32.xlu0 %v3319, 127
      %v3338 = vpop.permute.xlu0 %3337
      %3339 = vrot.lane.b32.xlu0 %v3320, 127
      %v3340 = vpop.permute.xlu0 %3339
      %3341 = vrot.lane.b32.xlu0 %v3321, 127
      %v3342 = vpop.permute.xlu0 %3341
      %3343 = vrot.lane.b32.xlu0 %v3322, 127
      %v3344 = vpop.permute.xlu0 %3343
      %3345 = vrot.lane.b32.xlu0 %v3323, 127
      %v3346 = vpop.permute.xlu0 %3345
      %3347 = vrot.lane.b32.xlu0 %v3324, 127
      %v3348 = vpop.permute.xlu0 %3347
      %v3357 = vsel %vm3252, %v3334, 0.0
      %v3358 = vsel %vm3252, %v3336, 0.0
      %v3359 = vadd.f32 %v3357, %v3358
      %v3360 = vsel %vm3252, %v3338, 0.0
      %v3361 = vadd.f32 %v3359, %v3360
      %v3362 = vsel %vm3252, %v3340, 0.0
      %v3363 = vadd.f32 %v3361, %v3362
      %v3364 = vsel %vm3252, %v3342, 0.0
      %v3365 = vadd.f32 %v3363, %v3364
      %v3366 = vsel %vm3252, %v3344, 0.0
      %v3367 = vadd.f32 %v3365, %v3366
      %v3368 = vsel %vm3252, %v3346, 0.0
      %v3369 = vadd.f32 %v3367, %v3368
      %v3370 = vsel %vm3252, %v3348, 0.0
      %v3371 = vadd.f32 %v3369, %v3370
      %3372 = vadd.xlane.f32.xlu0 %v3371
      %v3373 = vpop.xlane.xlu0 %3372
      %v3374 = vrot.slane %v3373, 4
      %v3375 = vadd.f32 %v3373, %v3374
      %v3376 = vrot.slane %v3375, 2
      %v3377 = vadd.f32 %v3375, %v3376
      %v3378 = vrot.slane %v3377, 1
      %v3379 = vadd.f32 %v3377, %v3378
      %s3380 = vtos %v3379
      %v3381 = vstv %s3276
      %v3382 = vadd.f32 %v3381, 0.0
      %3383 = vst [vmem:[%s511] sm:$0xff] %v3382
      %v3384 = vstv %s3380
      %v3385 = vadd.f32 %v3384, 0.0
      %3386 = vst [vmem:[%s515] sm:$0xff] %v3385
      %p3387 = scmp.lt.s32.totalorder %s26, 1
      %s3388 = scalar_select %p3387, %s26, 1
      %s3389 = smul.addr %s3388, 8
      %s3390 = scalar_lea.vmem %s13, %s3389
      %p3391 = scmp.lt.s32.totalorder %s26, 1
      %s3392 = scalar_select %p3391, %s26, 1
      %s3393 = smul.addr %s3392, 8
      %s3394 = scalar_lea.vmem %s14, %s3393
      // Predicated region
      $region73: #{_forward_impl.1} parent=71 // pred_check
        %p3395 = pneg %p332
      $region74: #{_forward_impl.1} parent=71 // pred_check_branch
        %3397 = sbr.rel (%p3395) target = $region76
      $region75: #{_forward_impl.1} parent=71 // pred_region
        _
      $region76: #{_forward_impl.1} parent=71 // pred_fallthru
        _
      // Predicated region
      $region77: #{_forward_impl.1} parent=71 // pred_check
        %p3398 = pneg %p358
      $region78: #{_forward_impl.1} parent=71 // pred_check_branch
        %3400 = sbr.rel (%p3398) target = $region80
      $region79: #{_forward_impl.1} parent=71 // pred_region
        _
      $region80: #{_forward_impl.1} parent=71 // pred_fallthru
        _
    $region72: #{_forward_impl.1} parent=5 // pred_fallthru
      _
    %p3401 = scmp.le.s32.totalorder 2, %s21
    // Predicated region
    $region81: #{_forward_impl.1} parent=5 // pred_check
      %p3402 = pneg %p3401
    $region82: #{_forward_impl.1} parent=5 // pred_check_branch
      %3404 = sbr.rel (%p3402) target = $region84
    $region83: #{_forward_impl.1} parent=5 // pred_region
      %s3405 = ssub.s32 %s21, 2
      // Predicated region
      $region85: #{_forward_impl.1} parent=83 // pred_check
        %p3406 = pneg %p338
      $region86: #{_forward_impl.1} parent=83 // pred_check_branch
        %3408 = sbr.rel (%p3406) target = $region88
      $region87: #{_forward_impl.1} parent=83 // pred_region
        %p3409 = scmp.lt.s32.totalorder %s27, 1
        %s3410 = scalar_select %p3409, %s27, 1
        %s3411 = smul.addr %s3410, 8
        %s3412 = scalar_lea.vmem %s13, %s3411
      $region88: #{_forward_impl.1} parent=83 // pred_fallthru
        _
      // Predicated region
      $region89: #{_forward_impl.1} parent=83 // pred_check
        %p3413 = pneg %p364
      $region90: #{_forward_impl.1} parent=83 // pred_check_branch
        %3415 = sbr.rel (%p3413) target = $region92
      $region91: #{_forward_impl.1} parent=83 // pred_region
        %p3416 = scmp.lt.s32.totalorder %s27, 1
        %s3417 = scalar_select %p3416, %s27, 1
        %s3418 = smul.addr %s3417, 8
        %s3419 = scalar_lea.vmem %s14, %s3418
      $region92: #{_forward_impl.1} parent=83 // pred_fallthru
        _
    $region84: #{_forward_impl.1} parent=5 // pred_fallthru
      _
  $region6: #{_forward_impl.1} parent=0 // loop_footer
    %s25 = sadd.s32 1, %s21
  $region7: #{_forward_impl.1} parent=0 // loop_footer_branch
    %20 = sbr.rel target = $region3
  $region8: #{_forward_impl.1} parent=0 // loop_exit
    _

</llo_original>
